<compile_context>
chip_gen: v6e
topology: v6e:2x2x1
jax: 0.10.0
libtpu: 0.0.40
codegen_flags: <defaults>
</compile_context>

<pallas_src>
import jax
import jax.numpy as jnp
from jax.experimental import pallas as pl
from jax.experimental.pallas import tpu as pltpu

_EPS = 1e-5
_P1, _P2, _P3, _P4 = 256, 128, 128, 128   # lane-padded widths of h1..h4
_MAX_FUSED_ROWS = 4096                    # VMEM-resident batch cap (all gens)


def _make_fused_kernel(batch, mxu_dtype, approx_recip):
    """Whole forward pass on a VMEM-resident (padded) batch block."""
    inv_b = 1.0 / batch

    def silu(z):
        # sigmoid via EUP exp + EUP reciprocal (approx on the bf16 fast path)
        return z * pl.reciprocal(1.0 + jnp.exp(-z), approx=approx_recip)

    def kernel(x_ref, w1_ref, w2_ref, w3_ref, w4_ref, w5t_ref, vec_ref,
               out_ref):
        bp = x_ref.shape[0]
        # Padded batch rows (>= batch) are excluded from BN statistics.
        row = jax.lax.broadcasted_iota(jnp.int32, (bp, 1), 0)
        mask = (row < batch).astype(jnp.float32)

        def bn(a, gamma, beta):
            # Exact full-batch training-mode stats, two-pass biased variance.
            mean = jnp.sum(a * mask, axis=0, keepdims=True) * inv_b
            d = (a - mean) * mask
            var = jnp.sum(d * d, axis=0, keepdims=True) * inv_b
            return (a - mean) * (jax.lax.rsqrt(var + _EPS) * gamma) + beta

        def layer(h, w_ref, bias):
            z = jnp.dot(h, w_ref[...],
                        preferred_element_type=jnp.float32) + bias
            return silu(z)

        a1 = layer(x_ref[...], w1_ref, vec_ref[0:1, :])          # (bp, 256)
        h1 = bn(a1, vec_ref[1:2, :], vec_ref[2:3, :])
        a2 = layer(h1.astype(mxu_dtype), w2_ref, vec_ref[3:4, :_P2])
        h2 = bn(a2, vec_ref[4:5, :_P2], vec_ref[5:6, :_P2])
        a3 = layer(h2.astype(mxu_dtype), w3_ref, vec_ref[6:7, :_P3])
        h3 = bn(a3, vec_ref[7:8, :_P3], vec_ref[8:9, :_P3])
        a4 = layer(h3.astype(mxu_dtype), w4_ref, vec_ref[9:10, :_P4])

        # Layer 5, lane-dense along the batch:
        # out[r, b] = sum_j w5t[r, j] * a4[b, j]; only row 0 is meaningful.
        out = jax.lax.dot_general(
            w5t_ref[...], a4.astype(mxu_dtype),
            dimension_numbers=(((1,), (1,)), ((), ())),
            preferred_element_type=jnp.float32)
        out_ref[...] = out + vec_ref[10:11, 0:1]                  # + b5

    return kernel


def _pad2d(a, rows, cols):
    return jnp.pad(a, ((0, rows - a.shape[0]), (0, cols - a.shape[1])))


def prepare_params(params, mxu_dtype=jnp.bfloat16):
    """Pad/pack raw params once (lane-aligned; bf16 weights for the MXU)."""
    (w1, b1), (w2, b2), (w3, b3), (w4, b4), (w5, b5) = params["linear"]
    (g1, be1), (g2, be2), (g3, be3) = params["bn"]
    weights = (
        _pad2d(w1, 402, _P1).astype(mxu_dtype),     # (402, 256): x unpadded K
        _pad2d(w2, _P1, _P2).astype(mxu_dtype),
        _pad2d(w3, _P2, _P3).astype(mxu_dtype),
        _pad2d(w4, _P3, _P4).astype(mxu_dtype),
        _pad2d(w5.T, 8, _P4).astype(mxu_dtype),     # (8, 128): w5^T, row 0 live
    )
    vec = jnp.zeros((16, _P1), jnp.float32)
    rows = [b1, g1, be1, b2, g2, be2, b3, g3, be3, b4, b5]
    for r, v in enumerate(rows):
        vec = vec.at[r, : v.shape[0]].set(v.astype(jnp.float32))
    return {"w": weights, "vec": vec}


def distance_model(x, params, *, mxu_dtype=jnp.bfloat16, packed=None):
    """Training-mode forward pass of DistanceModel; returns (batch, 1) f32."""
    batch, f_in = x.shape
    if packed is None:
        packed = prepare_params(params, mxu_dtype)   # production: prepare once
    w1, w2, w3, w4, w5t = packed["w"]
    vec = packed["vec"]

    padded_batch = max(128, pl.cdiv(batch, 128) * 128)
    if padded_batch > _MAX_FUSED_ROWS:
        # TODO(synk): stream x / activation tiles for very large batches.
        raise ValueError(
            f"fused VMEM-resident path supports <= {_MAX_FUSED_ROWS} rows")

    # Batch-only zero pad fused with the MXU-dtype cast; feature dim untouched.
    x_p = jnp.pad(x.astype(mxu_dtype), ((0, padded_batch - batch), (0, 0)))

    kernel = _make_fused_kernel(batch, mxu_dtype,
                                approx_recip=(mxu_dtype != jnp.float32))

    flops = 2 * batch * (402 * 200 + 200 * 100 + 100 * 50 + 50 * 10 + 10)
    transcendentals = batch * (200 + 100 + 50 + 10)
    bytes_accessed = (
        int(x_p.size) * x_p.dtype.itemsize
        + sum(int(a.size) * a.dtype.itemsize
              for a in (w1, w2, w3, w4, w5t, vec))
        + 8 * padded_batch * 4)

    out = pl.pallas_call(
        kernel,
        out_shape=jax.ShapeDtypeStruct((8, padded_batch), jnp.float32),
        grid=(1,),
        in_specs=[
            pl.BlockSpec((padded_batch, f_in), lambda i: (0, 0)),
            pl.BlockSpec(w1.shape, lambda i: (0, 0)),
            pl.BlockSpec(w2.shape, lambda i: (0, 0)),
            pl.BlockSpec(w3.shape, lambda i: (0, 0)),
            pl.BlockSpec(w4.shape, lambda i: (0, 0)),
            pl.BlockSpec(w5t.shape, lambda i: (0, 0)),
            pl.BlockSpec(vec.shape, lambda i: (0, 0)),
        ],
        out_specs=pl.BlockSpec((8, padded_batch), lambda i: (0, 0)),
        compiler_params=pltpu.CompilerParams(
            dimension_semantics=("arbitrary",),
            vmem_limit_bytes=48 * 1024 * 1024),
        cost_estimate=pl.CostEstimate(flops=flops,
                                      transcendentals=transcendentals,
                                      bytes_accessed=bytes_accessed),
    )(x_p, w1, w2, w3, w4, w5t, vec)

    # Lane-dense (8, B) output: row 0 holds the scalar predictions.
    return out[0, :batch].reshape(batch, 1)


def init_params(key):
    """PyTorch-style init: W,b ~ U(-k,k), k=1/sqrt(fan_in); BN gamma=1, beta=0.
    Linear weights stored transposed as (fan_in, fan_out)."""
    dims = [(402, 200), (200, 100), (100, 50), (50, 10), (10, 1)]
    keys = jax.random.split(key, 2 * len(dims))
    linear = []
    for idx, (fi, fo) in enumerate(dims):
        k = 1.0 / (fi ** 0.5)
        w = jax.random.uniform(keys[2 * idx], (fi, fo), minval=-k, maxval=k,
                               dtype=jnp.float32)
        b = jax.random.uniform(keys[2 * idx + 1], (fo,), minval=-k, maxval=k,
                               dtype=jnp.float32)
        linear.append((w, b))
    bn = [(jnp.ones((n,), jnp.float32), jnp.zeros((n,), jnp.float32))
          for n in (200, 100, 50)]
    return {"linear": linear, "bn": bn}


def reference_forward(x, params):
    """Pure-JAX reference matching the PyTorch training-mode forward."""
    def silu(z):
        return z * (1.0 / (1.0 + jnp.exp(-z)))

    def bn(h, g, b):
        mu = jnp.mean(h, axis=0, keepdims=True)
        var = jnp.mean((h - mu) ** 2, axis=0, keepdims=True)
        return (h - mu) * jax.lax.rsqrt(var + _EPS) * g + b

    lin, bns = params["linear"], params["bn"]
    h = silu(x @ lin[0][0] + lin[0][1]); h = bn(h, *bns[0])
    h = silu(h @ lin[1][0] + lin[1][1]); h = bn(h, *bns[1])
    h = silu(h @ lin[2][0] + lin[2][1]); h = bn(h, *bns[2])
    h = silu(h @ lin[3][0] + lin[3][1])
    return h @ lin[4][0] + lin[4][1]


if __name__ == "__main__":
    key = jax.random.PRNGKey(0)
    k_x, k_p = jax.random.split(key)
    batch = 200                    # not a multiple of 128: exercises row masking
    x = jax.random.normal(k_x, (batch, 402), dtype=jnp.float32)
    params = init_params(k_p)

    # Exact-semantics path (f32 MXU, exact reciprocal) vs the JAX reference.
    out_f32 = distance_model(x, params, mxu_dtype=jnp.float32)
    jax.block_until_ready(out_f32)
    ref = reference_forward(x, params)
    assert out_f32.shape == (batch, 1) and out_f32.dtype == jnp.float32
    assert jnp.allclose(out_f32, ref, atol=1e-2, rtol=1e-2), (
        float(jnp.max(jnp.abs(out_f32 - ref))))

    # Default fast path: bf16 MXU inputs, f32 accumulation / f32 BN statistics.
    out = distance_model(x, params)
    jax.block_until_ready(out)
    assert out.shape == (batch, 1) and out.dtype == jnp.float32
    assert bool(jnp.all(jnp.isfinite(out)))
    print("KERNEL_OK")
</pallas_src>

<mosaic_0001>
module attributes {stable_mosaic.version = 11 : i64} {
  func.func @kernel(%arg0: i32, %arg1: memref<256x402xf32, #tpu.memory_space<vmem>>, %arg2: memref<402x256xf32, #tpu.memory_space<vmem>>, %arg3: memref<256x128xf32, #tpu.memory_space<vmem>>, %arg4: memref<128x128xf32, #tpu.memory_space<vmem>>, %arg5: memref<128x128xf32, #tpu.memory_space<vmem>>, %arg6: memref<8x128xf32, #tpu.memory_space<vmem>>, %arg7: memref<16x256xf32, #tpu.memory_space<vmem>>, %arg8: memref<8x256xf32, #tpu.memory_space<vmem>>) attributes {dimension_semantics = [#tpu.dimension_semantics<arbitrary>], iteration_bounds = array<i64: 1>, scalar_prefetch = 0 : i64, scratch_operands = 0 : i64, tpu.core_type = #tpu.core_type<tc>, window_params = [{pipeline_mode = #tpu.pipeline_mode<synchronous>, transform_indices = @transform_0, window_bounds = array<i64: 256, 402>}, {pipeline_mode = #tpu.pipeline_mode<synchronous>, transform_indices = @transform_1, window_bounds = array<i64: 402, 256>}, {pipeline_mode = #tpu.pipeline_mode<synchronous>, transform_indices = @transform_2, window_bounds = array<i64: 256, 128>}, {pipeline_mode = #tpu.pipeline_mode<synchronous>, transform_indices = @transform_3, window_bounds = array<i64: 128, 128>}, {pipeline_mode = #tpu.pipeline_mode<synchronous>, transform_indices = @transform_4, window_bounds = array<i64: 128, 128>}, {pipeline_mode = #tpu.pipeline_mode<synchronous>, transform_indices = @transform_5, window_bounds = array<i64: 8, 128>}, {pipeline_mode = #tpu.pipeline_mode<synchronous>, transform_indices = @transform_6, window_bounds = array<i64: 16, 256>}, {pipeline_mode = #tpu.pipeline_mode<synchronous>, transform_indices = @transform_7, window_bounds = array<i64: 8, 256>}]} {
    %0 = tpu.iota {dimensions = array<i32: 0>} : vector<256x1xi32>
    %c200_i32 = arith.constant 200 : i32
    %1 = vector.broadcast %c200_i32 : i32 to vector<256x1xi32>
    %2 = arith.cmpi slt, %0, %1 : vector<256x1xi32>
    %3 = arith.extui %2 : vector<256x1xi1> to vector<256x1xi32>
    %4 = arith.sitofp %3 : vector<256x1xi32> to vector<256x1xf32>
    %c0 = arith.constant 0 : index
    %c0_0 = arith.constant 0 : index
    %5 = vector.load %arg1[%c0, %c0_0] : memref<256x402xf32, #tpu.memory_space<vmem>>, vector<256x402xf32>
    %c0_1 = arith.constant 0 : index
    %c0_2 = arith.constant 0 : index
    %6 = vector.load %arg7[%c0_1, %c0_2] : memref<16x256xf32, #tpu.memory_space<vmem>>, vector<1x256xf32>
    %c0_3 = arith.constant 0 : index
    %c0_4 = arith.constant 0 : index
    %7 = vector.load %arg2[%c0_3, %c0_4] : memref<402x256xf32, #tpu.memory_space<vmem>>, vector<402x256xf32>
    %cst = arith.constant dense<0.000000e+00> : vector<256x256xf32>
    %8 = tpu.matmul %5, %7, %cst {dimension_numbers = #tpu.dot_dimension_numbers<[1], [0], [0], [1], [0, 0, 1, 1], [], []>} : vector<256x402xf32>, vector<402x256xf32>, vector<256x256xf32> -> vector<256x256xf32>
    %9 = vector.broadcast %6 : vector<1x256xf32> to vector<256x256xf32>
    %10 = arith.addf %8, %9 : vector<256x256xf32>
    %cst_5 = arith.constant 0.000000e+00 : f32
    %11 = vector.broadcast %cst_5 : f32 to vector<256x256xf32>
    %12 = arith.subf %11, %10 : vector<256x256xf32>
    %13 = math.exp %12 : vector<256x256xf32>
    %cst_6 = arith.constant 1.000000e+00 : f32
    %14 = vector.broadcast %cst_6 : f32 to vector<256x256xf32>
    %15 = arith.addf %14, %13 : vector<256x256xf32>
    %16 = tpu.reciprocal %15 : vector<256x256xf32> -> vector<256x256xf32>
    %17 = arith.mulf %10, %16 : vector<256x256xf32>
    %c1 = arith.constant 1 : index
    %c0_7 = arith.constant 0 : index
    %18 = vector.load %arg7[%c1, %c0_7] : memref<16x256xf32, #tpu.memory_space<vmem>>, vector<1x256xf32>
    %c2 = arith.constant 2 : index
    %c0_8 = arith.constant 0 : index
    %19 = vector.load %arg7[%c2, %c0_8] : memref<16x256xf32, #tpu.memory_space<vmem>>, vector<1x256xf32>
    %20 = vector.broadcast %4 : vector<256x1xf32> to vector<256x256xf32>
    %21 = arith.mulf %17, %20 : vector<256x256xf32>
    %cst_9 = arith.constant dense<0.000000e+00> : vector<256xf32>
    %22 = vector.multi_reduction <add>, %21, %cst_9 [0] : vector<256x256xf32> to vector<256xf32>
    %23 = vector.shape_cast %22 : vector<256xf32> to vector<1x256xf32>
    %cst_10 = arith.constant 5.000000e-03 : f32
    %24 = vector.broadcast %cst_10 : f32 to vector<1x256xf32>
    %25 = arith.mulf %23, %24 : vector<1x256xf32>
    %26 = vector.broadcast %25 : vector<1x256xf32> to vector<256x256xf32>
    %27 = arith.subf %17, %26 : vector<256x256xf32>
    %28 = vector.broadcast %4 : vector<256x1xf32> to vector<256x256xf32>
    %29 = arith.mulf %27, %28 : vector<256x256xf32>
    %30 = arith.mulf %29, %29 : vector<256x256xf32>
    %cst_11 = arith.constant dense<0.000000e+00> : vector<256xf32>
    %31 = vector.multi_reduction <add>, %30, %cst_11 [0] : vector<256x256xf32> to vector<256xf32>
    %32 = vector.shape_cast %31 : vector<256xf32> to vector<1x256xf32>
    %cst_12 = arith.constant 5.000000e-03 : f32
    %33 = vector.broadcast %cst_12 : f32 to vector<1x256xf32>
    %34 = arith.mulf %32, %33 : vector<1x256xf32>
    %35 = vector.broadcast %25 : vector<1x256xf32> to vector<256x256xf32>
    %36 = arith.subf %17, %35 : vector<256x256xf32>
    %cst_13 = arith.constant 9.99999974E-6 : f32
    %37 = vector.broadcast %cst_13 : f32 to vector<1x256xf32>
    %38 = arith.addf %34, %37 : vector<1x256xf32>
    %39 = math.rsqrt %38 : vector<1x256xf32>
    %40 = arith.mulf %39, %18 : vector<1x256xf32>
    %41 = vector.broadcast %40 : vector<1x256xf32> to vector<256x256xf32>
    %42 = arith.mulf %36, %41 : vector<256x256xf32>
    %43 = vector.broadcast %19 : vector<1x256xf32> to vector<256x256xf32>
    %44 = arith.addf %42, %43 : vector<256x256xf32>
    %c3 = arith.constant 3 : index
    %c0_14 = arith.constant 0 : index
    %45 = vector.load %arg7[%c3, %c0_14] : memref<16x256xf32, #tpu.memory_space<vmem>>, vector<1x128xf32>
    %c0_15 = arith.constant 0 : index
    %c0_16 = arith.constant 0 : index
    %46 = vector.load %arg3[%c0_15, %c0_16] : memref<256x128xf32, #tpu.memory_space<vmem>>, vector<256x128xf32>
    %cst_17 = arith.constant dense<0.000000e+00> : vector<256x128xf32>
    %47 = tpu.matmul %44, %46, %cst_17 {dimension_numbers = #tpu.dot_dimension_numbers<[1], [0], [0], [1], [0, 0, 1, 1], [], []>} : vector<256x256xf32>, vector<256x128xf32>, vector<256x128xf32> -> vector<256x128xf32>
    %48 = vector.broadcast %45 : vector<1x128xf32> to vector<256x128xf32>
    %49 = arith.addf %47, %48 : vector<256x128xf32>
    %cst_18 = arith.constant 0.000000e+00 : f32
    %50 = vector.broadcast %cst_18 : f32 to vector<256x128xf32>
    %51 = arith.subf %50, %49 : vector<256x128xf32>
    %52 = math.exp %51 : vector<256x128xf32>
    %cst_19 = arith.constant 1.000000e+00 : f32
    %53 = vector.broadcast %cst_19 : f32 to vector<256x128xf32>
    %54 = arith.addf %53, %52 : vector<256x128xf32>
    %55 = tpu.reciprocal %54 : vector<256x128xf32> -> vector<256x128xf32>
    %56 = arith.mulf %49, %55 : vector<256x128xf32>
    %c4 = arith.constant 4 : index
    %c0_20 = arith.constant 0 : index
    %57 = vector.load %arg7[%c4, %c0_20] : memref<16x256xf32, #tpu.memory_space<vmem>>, vector<1x128xf32>
    %c5 = arith.constant 5 : index
    %c0_21 = arith.constant 0 : index
    %58 = vector.load %arg7[%c5, %c0_21] : memref<16x256xf32, #tpu.memory_space<vmem>>, vector<1x128xf32>
    %59 = vector.broadcast %4 : vector<256x1xf32> to vector<256x128xf32>
    %60 = arith.mulf %56, %59 : vector<256x128xf32>
    %cst_22 = arith.constant dense<0.000000e+00> : vector<128xf32>
    %61 = vector.multi_reduction <add>, %60, %cst_22 [0] : vector<256x128xf32> to vector<128xf32>
    %62 = vector.shape_cast %61 : vector<128xf32> to vector<1x128xf32>
    %cst_23 = arith.constant 5.000000e-03 : f32
    %63 = vector.broadcast %cst_23 : f32 to vector<1x128xf32>
    %64 = arith.mulf %62, %63 : vector<1x128xf32>
    %65 = vector.broadcast %64 : vector<1x128xf32> to vector<256x128xf32>
    %66 = arith.subf %56, %65 : vector<256x128xf32>
    %67 = vector.broadcast %4 : vector<256x1xf32> to vector<256x128xf32>
    %68 = arith.mulf %66, %67 : vector<256x128xf32>
    %69 = arith.mulf %68, %68 : vector<256x128xf32>
    %cst_24 = arith.constant dense<0.000000e+00> : vector<128xf32>
    %70 = vector.multi_reduction <add>, %69, %cst_24 [0] : vector<256x128xf32> to vector<128xf32>
    %71 = vector.shape_cast %70 : vector<128xf32> to vector<1x128xf32>
    %cst_25 = arith.constant 5.000000e-03 : f32
    %72 = vector.broadcast %cst_25 : f32 to vector<1x128xf32>
    %73 = arith.mulf %71, %72 : vector<1x128xf32>
    %74 = vector.broadcast %64 : vector<1x128xf32> to vector<256x128xf32>
    %75 = arith.subf %56, %74 : vector<256x128xf32>
    %cst_26 = arith.constant 9.99999974E-6 : f32
    %76 = vector.broadcast %cst_26 : f32 to vector<1x128xf32>
    %77 = arith.addf %73, %76 : vector<1x128xf32>
    %78 = math.rsqrt %77 : vector<1x128xf32>
    %79 = arith.mulf %78, %57 : vector<1x128xf32>
    %80 = vector.broadcast %79 : vector<1x128xf32> to vector<256x128xf32>
    %81 = arith.mulf %75, %80 : vector<256x128xf32>
    %82 = vector.broadcast %58 : vector<1x128xf32> to vector<256x128xf32>
    %83 = arith.addf %81, %82 : vector<256x128xf32>
    %c6 = arith.constant 6 : index
    %c0_27 = arith.constant 0 : index
    %84 = vector.load %arg7[%c6, %c0_27] : memref<16x256xf32, #tpu.memory_space<vmem>>, vector<1x128xf32>
    %c0_28 = arith.constant 0 : index
    %c0_29 = arith.constant 0 : index
    %85 = vector.load %arg4[%c0_28, %c0_29] : memref<128x128xf32, #tpu.memory_space<vmem>>, vector<128x128xf32>
    %cst_30 = arith.constant dense<0.000000e+00> : vector<256x128xf32>
    %86 = tpu.matmul %83, %85, %cst_30 {dimension_numbers = #tpu.dot_dimension_numbers<[1], [0], [0], [1], [0, 0, 1, 1], [], []>} : vector<256x128xf32>, vector<128x128xf32>, vector<256x128xf32> -> vector<256x128xf32>
    %87 = vector.broadcast %84 : vector<1x128xf32> to vector<256x128xf32>
    %88 = arith.addf %86, %87 : vector<256x128xf32>
    %cst_31 = arith.constant 0.000000e+00 : f32
    %89 = vector.broadcast %cst_31 : f32 to vector<256x128xf32>
    %90 = arith.subf %89, %88 : vector<256x128xf32>
    %91 = math.exp %90 : vector<256x128xf32>
    %cst_32 = arith.constant 1.000000e+00 : f32
    %92 = vector.broadcast %cst_32 : f32 to vector<256x128xf32>
    %93 = arith.addf %92, %91 : vector<256x128xf32>
    %94 = tpu.reciprocal %93 : vector<256x128xf32> -> vector<256x128xf32>
    %95 = arith.mulf %88, %94 : vector<256x128xf32>
    %c7 = arith.constant 7 : index
    %c0_33 = arith.constant 0 : index
    %96 = vector.load %arg7[%c7, %c0_33] : memref<16x256xf32, #tpu.memory_space<vmem>>, vector<1x128xf32>
    %c8 = arith.constant 8 : index
    %c0_34 = arith.constant 0 : index
    %97 = vector.load %arg7[%c8, %c0_34] : memref<16x256xf32, #tpu.memory_space<vmem>>, vector<1x128xf32>
    %98 = vector.broadcast %4 : vector<256x1xf32> to vector<256x128xf32>
    %99 = arith.mulf %95, %98 : vector<256x128xf32>
    %cst_35 = arith.constant dense<0.000000e+00> : vector<128xf32>
    %100 = vector.multi_reduction <add>, %99, %cst_35 [0] : vector<256x128xf32> to vector<128xf32>
    %101 = vector.shape_cast %100 : vector<128xf32> to vector<1x128xf32>
    %cst_36 = arith.constant 5.000000e-03 : f32
    %102 = vector.broadcast %cst_36 : f32 to vector<1x128xf32>
    %103 = arith.mulf %101, %102 : vector<1x128xf32>
    %104 = vector.broadcast %103 : vector<1x128xf32> to vector<256x128xf32>
    %105 = arith.subf %95, %104 : vector<256x128xf32>
    %106 = vector.broadcast %4 : vector<256x1xf32> to vector<256x128xf32>
    %107 = arith.mulf %105, %106 : vector<256x128xf32>
    %108 = arith.mulf %107, %107 : vector<256x128xf32>
    %cst_37 = arith.constant dense<0.000000e+00> : vector<128xf32>
    %109 = vector.multi_reduction <add>, %108, %cst_37 [0] : vector<256x128xf32> to vector<128xf32>
    %110 = vector.shape_cast %109 : vector<128xf32> to vector<1x128xf32>
    %cst_38 = arith.constant 5.000000e-03 : f32
    %111 = vector.broadcast %cst_38 : f32 to vector<1x128xf32>
    %112 = arith.mulf %110, %111 : vector<1x128xf32>
    %113 = vector.broadcast %103 : vector<1x128xf32> to vector<256x128xf32>
    %114 = arith.subf %95, %113 : vector<256x128xf32>
    %cst_39 = arith.constant 9.99999974E-6 : f32
    %115 = vector.broadcast %cst_39 : f32 to vector<1x128xf32>
    %116 = arith.addf %112, %115 : vector<1x128xf32>
    %117 = math.rsqrt %116 : vector<1x128xf32>
    %118 = arith.mulf %117, %96 : vector<1x128xf32>
    %119 = vector.broadcast %118 : vector<1x128xf32> to vector<256x128xf32>
    %120 = arith.mulf %114, %119 : vector<256x128xf32>
    %121 = vector.broadcast %97 : vector<1x128xf32> to vector<256x128xf32>
    %122 = arith.addf %120, %121 : vector<256x128xf32>
    %c9 = arith.constant 9 : index
    %c0_40 = arith.constant 0 : index
    %123 = vector.load %arg7[%c9, %c0_40] : memref<16x256xf32, #tpu.memory_space<vmem>>, vector<1x128xf32>
    %c0_41 = arith.constant 0 : index
    %c0_42 = arith.constant 0 : index
    %124 = vector.load %arg5[%c0_41, %c0_42] : memref<128x128xf32, #tpu.memory_space<vmem>>, vector<128x128xf32>
    %cst_43 = arith.constant dense<0.000000e+00> : vector<256x128xf32>
    %125 = tpu.matmul %122, %124, %cst_43 {dimension_numbers = #tpu.dot_dimension_numbers<[1], [0], [0], [1], [0, 0, 1, 1], [], []>} : vector<256x128xf32>, vector<128x128xf32>, vector<256x128xf32> -> vector<256x128xf32>
    %126 = vector.broadcast %123 : vector<1x128xf32> to vector<256x128xf32>
    %127 = arith.addf %125, %126 : vector<256x128xf32>
    %cst_44 = arith.constant 0.000000e+00 : f32
    %128 = vector.broadcast %cst_44 : f32 to vector<256x128xf32>
    %129 = arith.subf %128, %127 : vector<256x128xf32>
    %130 = math.exp %129 : vector<256x128xf32>
    %cst_45 = arith.constant 1.000000e+00 : f32
    %131 = vector.broadcast %cst_45 : f32 to vector<256x128xf32>
    %132 = arith.addf %131, %130 : vector<256x128xf32>
    %133 = tpu.reciprocal %132 : vector<256x128xf32> -> vector<256x128xf32>
    %134 = arith.mulf %127, %133 : vector<256x128xf32>
    %c0_46 = arith.constant 0 : index
    %c0_47 = arith.constant 0 : index
    %135 = vector.load %arg6[%c0_46, %c0_47] : memref<8x128xf32, #tpu.memory_space<vmem>>, vector<8x128xf32>
    %cst_48 = arith.constant dense<0.000000e+00> : vector<8x256xf32>
    %136 = tpu.matmul %135, %134, %cst_48 {dimension_numbers = #tpu.dot_dimension_numbers<[1], [1], [0], [0], [0, 0, 1, 0], [], []>} : vector<8x128xf32>, vector<256x128xf32>, vector<8x256xf32> -> vector<8x256xf32>
    %c10 = arith.constant 10 : index
    %c0_49 = arith.constant 0 : index
    %137 = vector.load %arg7[%c10, %c0_49] : memref<16x256xf32, #tpu.memory_space<vmem>>, vector<1x1xf32>
    %138 = vector.broadcast %137 : vector<1x1xf32> to vector<8x256xf32>
    %139 = arith.addf %136, %138 : vector<8x256xf32>
    %c0_50 = arith.constant 0 : index
    %c0_51 = arith.constant 0 : index
    %140 = vector.load %arg8[%c0_50, %c0_51] : memref<8x256xf32, #tpu.memory_space<vmem>>, vector<8x256xf32>
    tpu.vector_store %arg8[%c0_50, %c0_51], %139 {strides = array<i32>} : memref<8x256xf32, #tpu.memory_space<vmem>>, vector<8x256xf32>,
    return
  }
  func.func @transform_0(%arg0: i32) -> (i32, i32) {
    %c0_i32 = arith.constant 0 : i32
    %c0_i32_0 = arith.constant 0 : i32
    %c0_i32_1 = arith.constant 0 : i32
    return %c0_i32, %c0_i32_0 : i32, i32
  }
  func.func @transform_1(%arg0: i32) -> (i32, i32) {
    %c0_i32 = arith.constant 0 : i32
    %c0_i32_0 = arith.constant 0 : i32
    %c0_i32_1 = arith.constant 0 : i32
    return %c0_i32, %c0_i32_0 : i32, i32
  }
  func.func @transform_2(%arg0: i32) -> (i32, i32) {
    %c0_i32 = arith.constant 0 : i32
    %c0_i32_0 = arith.constant 0 : i32
    %c0_i32_1 = arith.constant 0 : i32
    return %c0_i32, %c0_i32_0 : i32, i32
  }
  func.func @transform_3(%arg0: i32) -> (i32, i32) {
    %c0_i32 = arith.constant 0 : i32
    %c0_i32_0 = arith.constant 0 : i32
    %c0_i32_1 = arith.constant 0 : i32
    return %c0_i32, %c0_i32_0 : i32, i32
  }
  func.func @transform_4(%arg0: i32) -> (i32, i32) {
    %c0_i32 = arith.constant 0 : i32
    %c0_i32_0 = arith.constant 0 : i32
    %c0_i32_1 = arith.constant 0 : i32
    return %c0_i32, %c0_i32_0 : i32, i32
  }
  func.func @transform_5(%arg0: i32) -> (i32, i32) {
    %c0_i32 = arith.constant 0 : i32
    %c0_i32_0 = arith.constant 0 : i32
    %c0_i32_1 = arith.constant 0 : i32
    return %c0_i32, %c0_i32_0 : i32, i32
  }
  func.func @transform_6(%arg0: i32) -> (i32, i32) {
    %c0_i32 = arith.constant 0 : i32
    %c0_i32_0 = arith.constant 0 : i32
    %c0_i32_1 = arith.constant 0 : i32
    return %c0_i32, %c0_i32_0 : i32, i32
  }
  func.func @transform_7(%arg0: i32) -> (i32, i32) {
    %c0_i32 = arith.constant 0 : i32
    %c0_i32_0 = arith.constant 0 : i32
    %c0_i32_1 = arith.constant 0 : i32
    return %c0_i32, %c0_i32_0 : i32, i32
  }
}

</mosaic_0001>

<llo_original>
// kernel: tpu_custom_call.1
$region0: #{tpu_custom_call.1}
  #allocation0 [shape = 'u32[]', space=smem, size = 0x4, offset = 0x4, fixed_abs, tag = 'smem constant byte address 0x4 - core index']
  #allocation1 [shape = 'u32[144,128]{1,0:T(1,128)}', space=vmem, size = 0x12000, scoped, tag = 'internal scratch']
  %s0 = inlined_call_operand.vmem [shape: f32[256,402], index: 0, kind: input, shape index: {}]
  %s1 = inlined_call_operand.vmem [shape: f32[402,256], index: 1, kind: input, shape index: {}]
  %s2 = inlined_call_operand.vmem [shape: f32[256,128], index: 2, kind: input, shape index: {}]
  %s3 = inlined_call_operand.vmem [shape: f32[128,128], index: 3, kind: input, shape index: {}]
  %s4 = inlined_call_operand.vmem [shape: f32[128,128], index: 4, kind: input, shape index: {}]
  %s5 = inlined_call_operand.vmem [shape: f32[8,128], index: 5, kind: input, shape index: {}]
  %s6 = inlined_call_operand.vmem [shape: f32[16,256], index: 6, kind: input, shape index: {}]
  %s7 = inlined_call_operand.hbm [shape: f32[8,256], index: 7, kind: output, shape index: {}]
  %s8 = sld [smem:[#allocation0]]
  $region38: #{tpu_custom_call.1} parent=0
    _
  %s10 = ssub.s32 1, %s8
  %s11 = scalar_select 0, %s10, %s8
  $region1: #{tpu_custom_call.1} parent=0
    #allocation2 [shape = 'u8[8192]{0}', space=vmem, size = 0x2000, scoped, tag = 'output window, operand 0, single buffered']
    #allocation3 [shape = 's32[1]{0}', space=sflag, size = 0x4, scoped, tag = 'scoped memory for tpu_custom_call.1']
    %12 = vsyncpa [#allocation3], 0
    // Predicated region
    $region2: #{tpu_custom_call.1} parent=1 // pred_check
      _
    $region3: #{tpu_custom_call.1} parent=1 // pred_check_branch
      %14 = sbr.rel (0) target = $region5
    $region4: #{tpu_custom_call.1} parent=1 // pred_region
      _
    $region5: #{tpu_custom_call.1} parent=1 // pred_fallthru
      _
    // Predicated region
    $region6: #{tpu_custom_call.1} parent=1 // pred_check
      _
    $region7: #{tpu_custom_call.1} parent=1 // pred_check_branch
      %16 = sbr.rel (0) target = $region9
    $region8: #{tpu_custom_call.1} parent=1 // pred_region
      _
    $region9: #{tpu_custom_call.1} parent=1 // pred_fallthru
      _
    // Predicated region
    $region10: #{tpu_custom_call.1} parent=1 // pred_check
      _
    $region11: #{tpu_custom_call.1} parent=1 // pred_check_branch
      %18 = sbr.rel (0) target = $region13
    $region12: #{tpu_custom_call.1} parent=1 // pred_region
      _
    $region13: #{tpu_custom_call.1} parent=1 // pred_fallthru
      _
    // Predicated region
    $region14: #{tpu_custom_call.1} parent=1 // pred_check
      _
    $region15: #{tpu_custom_call.1} parent=1 // pred_check_branch
      %20 = sbr.rel (0) target = $region17
    $region16: #{tpu_custom_call.1} parent=1 // pred_region
      _
    $region17: #{tpu_custom_call.1} parent=1 // pred_fallthru
      _
    // Predicated region
    $region18: #{tpu_custom_call.1} parent=1 // pred_check
      _
    $region19: #{tpu_custom_call.1} parent=1 // pred_check_branch
      %22 = sbr.rel (0) target = $region21
    $region20: #{tpu_custom_call.1} parent=1 // pred_region
      _
    $region21: #{tpu_custom_call.1} parent=1 // pred_fallthru
      _
    // Predicated region
    $region22: #{tpu_custom_call.1} parent=1 // pred_check
      _
    $region23: #{tpu_custom_call.1} parent=1 // pred_check_branch
      %24 = sbr.rel (0) target = $region25
    $region24: #{tpu_custom_call.1} parent=1 // pred_region
      _
    $region25: #{tpu_custom_call.1} parent=1 // pred_fallthru
      _
    // Predicated region
    $region26: #{tpu_custom_call.1} parent=1 // pred_check
      _
    $region27: #{tpu_custom_call.1} parent=1 // pred_check_branch
      %26 = sbr.rel (0) target = $region29
    $region28: #{tpu_custom_call.1} parent=1 // pred_region
      _
    $region29: #{tpu_custom_call.1} parent=1 // pred_fallthru
      _
    %v27 = vlaneseq
    %v28 = vshrl.u32 %v27, 7
    %v29 = vadd.s32 %v28, 8
    %v30 = vadd.s32 %v28, 16
    %v31 = vadd.s32 %v28, 24
    %v32 = vadd.s32 %v28, 32
    %v33 = vadd.s32 %v28, 40
    %v34 = vadd.s32 %v28, 48
    %v35 = vadd.s32 %v28, 56
    %v36 = vadd.s32 %v28, 64
    %v37 = vadd.s32 %v28, 72
    %v38 = vadd.s32 %v28, 80
    %v39 = vadd.s32 %v28, 88
    %v40 = vadd.s32 %v28, 96
    %v41 = vadd.s32 %v28, 104
    %v42 = vadd.s32 %v28, 112
    %v43 = vadd.s32 %v28, 120
    %v44 = vadd.s32 %v28, 128
    %v45 = vadd.s32 %v28, 136
    %v46 = vadd.s32 %v28, 144
    %v47 = vadd.s32 %v28, 152
    %v48 = vadd.s32 %v28, 160
    %v49 = vadd.s32 %v28, 168
    %v50 = vadd.s32 %v28, 176
    %v51 = vadd.s32 %v28, 184
    %v52 = vadd.s32 %v28, 192
    %v53 = vadd.s32 %v28, 200
    %v54 = vadd.s32 %v28, 208
    %v55 = vadd.s32 %v28, 216
    %v56 = vadd.s32 %v28, 224
    %v57 = vadd.s32 %v28, 232
    %v58 = vadd.s32 %v28, 240
    %v59 = vadd.s32 %v28, 248
    %vm60 = vcmp.lt.s32.totalorder %v28, 200
    %vm61 = vcmp.lt.s32.totalorder %v29, 200
    %vm62 = vcmp.lt.s32.totalorder %v30, 200
    %vm63 = vcmp.lt.s32.totalorder %v31, 200
    %vm64 = vcmp.lt.s32.totalorder %v32, 200
    %vm65 = vcmp.lt.s32.totalorder %v33, 200
    %vm66 = vcmp.lt.s32.totalorder %v34, 200
    %vm67 = vcmp.lt.s32.totalorder %v35, 200
    %vm68 = vcmp.lt.s32.totalorder %v36, 200
    %vm69 = vcmp.lt.s32.totalorder %v37, 200
    %vm70 = vcmp.lt.s32.totalorder %v38, 200
    %vm71 = vcmp.lt.s32.totalorder %v39, 200
    %vm72 = vcmp.lt.s32.totalorder %v40, 200
    %vm73 = vcmp.lt.s32.totalorder %v41, 200
    %vm74 = vcmp.lt.s32.totalorder %v42, 200
    %vm75 = vcmp.lt.s32.totalorder %v43, 200
    %vm76 = vcmp.lt.s32.totalorder %v44, 200
    %vm77 = vcmp.lt.s32.totalorder %v45, 200
    %vm78 = vcmp.lt.s32.totalorder %v46, 200
    %vm79 = vcmp.lt.s32.totalorder %v47, 200
    %vm80 = vcmp.lt.s32.totalorder %v48, 200
    %vm81 = vcmp.lt.s32.totalorder %v49, 200
    %vm82 = vcmp.lt.s32.totalorder %v50, 200
    %vm83 = vcmp.lt.s32.totalorder %v51, 200
    %vm84 = vcmp.lt.s32.totalorder %v52, 200
    %vm85 = vcmp.lt.s32.totalorder %v53, 200
    %vm86 = vcmp.lt.s32.totalorder %v54, 200
    %vm87 = vcmp.lt.s32.totalorder %v55, 200
    %vm88 = vcmp.lt.s32.totalorder %v56, 200
    %vm89 = vcmp.lt.s32.totalorder %v57, 200
    %vm90 = vcmp.lt.s32.totalorder %v58, 200
    %vm91 = vcmp.lt.s32.totalorder %v59, 200
    %v92 = vsel %vm60, 1, 0
    %v93 = vsel %vm61, 1, 0
    %v94 = vsel %vm62, 1, 0
    %v95 = vsel %vm63, 1, 0
    %v96 = vsel %vm64, 1, 0
    %v97 = vsel %vm65, 1, 0
    %v98 = vsel %vm66, 1, 0
    %v99 = vsel %vm67, 1, 0
    %v100 = vsel %vm68, 1, 0
    %v101 = vsel %vm69, 1, 0
    %v102 = vsel %vm70, 1, 0
    %v103 = vsel %vm71, 1, 0
    %v104 = vsel %vm72, 1, 0
    %v105 = vsel %vm73, 1, 0
    %v106 = vsel %vm74, 1, 0
    %v107 = vsel %vm75, 1, 0
    %v108 = vsel %vm76, 1, 0
    %v109 = vsel %vm77, 1, 0
    %v110 = vsel %vm78, 1, 0
    %v111 = vsel %vm79, 1, 0
    %v112 = vsel %vm80, 1, 0
    %v113 = vsel %vm81, 1, 0
    %v114 = vsel %vm82, 1, 0
    %v115 = vsel %vm83, 1, 0
    %v116 = vsel %vm84, 1, 0
    %v117 = vsel %vm85, 1, 0
    %v118 = vsel %vm86, 1, 0
    %v119 = vsel %vm87, 1, 0
    %v120 = vsel %vm88, 1, 0
    %v121 = vsel %vm89, 1, 0
    %v122 = vsel %vm90, 1, 0
    %v123 = vsel %vm91, 1, 0
    %v124 = vcvt.s32.f32 %v92
    %v125 = vcvt.s32.f32 %v93
    %v126 = vcvt.s32.f32 %v94
    %v127 = vcvt.s32.f32 %v95
    %v128 = vcvt.s32.f32 %v96
    %v129 = vcvt.s32.f32 %v97
    %v130 = vcvt.s32.f32 %v98
    %v131 = vcvt.s32.f32 %v99
    %v132 = vcvt.s32.f32 %v100
    %v133 = vcvt.s32.f32 %v101
    %v134 = vcvt.s32.f32 %v102
    %v135 = vcvt.s32.f32 %v103
    %v136 = vcvt.s32.f32 %v104
    %v137 = vcvt.s32.f32 %v105
    %v138 = vcvt.s32.f32 %v106
    %v139 = vcvt.s32.f32 %v107
    %v140 = vcvt.s32.f32 %v108
    %v141 = vcvt.s32.f32 %v109
    %v142 = vcvt.s32.f32 %v110
    %v143 = vcvt.s32.f32 %v111
    %v144 = vcvt.s32.f32 %v112
    %v145 = vcvt.s32.f32 %v113
    %v146 = vcvt.s32.f32 %v114
    %v147 = vcvt.s32.f32 %v115
    %v148 = vcvt.s32.f32 %v116
    %v149 = vcvt.s32.f32 %v117
    %v150 = vcvt.s32.f32 %v118
    %v151 = vcvt.s32.f32 %v119
    %v152 = vcvt.s32.f32 %v120
    %v153 = vcvt.s32.f32 %v121
    %v154 = vcvt.s32.f32 %v122
    %v155 = vcvt.s32.f32 %v123
    %v156 = vld [vmem:[%s0] sm:$0xff]
    %v157 = vld [vmem:[%s0 + $0x8] sm:$0xff]
    %v158 = vld [vmem:[%s0 + $0x10] sm:$0xff]
    %v159 = vld [vmem:[%s0 + $0x18] sm:$0xff]
    %v160 = vld [vmem:[%s0 + $0x20] sm:$0xff]
    %v161 = vld [vmem:[%s0 + $0x28] sm:$0xff]
    %v162 = vld [vmem:[%s0 + $0x30] sm:$0xff]
    %v163 = vld [vmem:[%s0 + $0x38] sm:$0xff]
    %v164 = vld [vmem:[%s0 + $0x40] sm:$0xff]
    %v165 = vld [vmem:[%s0 + $0x48] sm:$0xff]
    %v166 = vld [vmem:[%s0 + $0x50] sm:$0xff]
    %v167 = vld [vmem:[%s0 + $0x58] sm:$0xff]
    %v168 = vld [vmem:[%s0 + $0x60] sm:$0xff]
    %v169 = vld [vmem:[%s0 + $0x68] sm:$0xff]
    %v170 = vld [vmem:[%s0 + $0x70] sm:$0xff]
    %v171 = vld [vmem:[%s0 + $0x78] sm:$0xff]
    %v172 = vld [vmem:[%s0 + $0x80] sm:$0xff]
    %v173 = vld [vmem:[%s0 + $0x88] sm:$0xff]
    %v174 = vld [vmem:[%s0 + $0x90] sm:$0xff]
    %v175 = vld [vmem:[%s0 + $0x98] sm:$0xff]
    %v176 = vld [vmem:[%s0 + $0xa0] sm:$0xff]
    %v177 = vld [vmem:[%s0 + $0xa8] sm:$0xff]
    %v178 = vld [vmem:[%s0 + $0xb0] sm:$0xff]
    %v179 = vld [vmem:[%s0 + $0xb8] sm:$0xff]
    %v180 = vld [vmem:[%s0 + $0xc0] sm:$0xff]
    %v181 = vld [vmem:[%s0 + $0xc8] sm:$0xff]
    %v182 = vld [vmem:[%s0 + $0xd0] sm:$0xff]
    %v183 = vld [vmem:[%s0 + $0xd8] sm:$0xff]
    %v184 = vld [vmem:[%s0 + $0xe0] sm:$0xff]
    %v185 = vld [vmem:[%s0 + $0xe8] sm:$0xff]
    %v186 = vld [vmem:[%s0 + $0xf0] sm:$0xff]
    %v187 = vld [vmem:[%s0 + $0xf8] sm:$0xff]
    %v188 = vld [vmem:[%s0 + $0x100] sm:$0xff]
    %v189 = vld [vmem:[%s0 + $0x108] sm:$0xff]
    %v190 = vld [vmem:[%s0 + $0x110] sm:$0xff]
    %v191 = vld [vmem:[%s0 + $0x118] sm:$0xff]
    %v192 = vld [vmem:[%s0 + $0x120] sm:$0xff]
    %v193 = vld [vmem:[%s0 + $0x128] sm:$0xff]
    %v194 = vld [vmem:[%s0 + $0x130] sm:$0xff]
    %v195 = vld [vmem:[%s0 + $0x138] sm:$0xff]
    %v196 = vld [vmem:[%s0 + $0x140] sm:$0xff]
    %v197 = vld [vmem:[%s0 + $0x148] sm:$0xff]
    %v198 = vld [vmem:[%s0 + $0x150] sm:$0xff]
    %v199 = vld [vmem:[%s0 + $0x158] sm:$0xff]
    %v200 = vld [vmem:[%s0 + $0x160] sm:$0xff]
    %v201 = vld [vmem:[%s0 + $0x168] sm:$0xff]
    %v202 = vld [vmem:[%s0 + $0x170] sm:$0xff]
    %v203 = vld [vmem:[%s0 + $0x178] sm:$0xff]
    %v204 = vld [vmem:[%s0 + $0x180] sm:$0xff]
    %v205 = vld [vmem:[%s0 + $0x188] sm:$0xff]
    %v206 = vld [vmem:[%s0 + $0x190] sm:$0xff]
    %v207 = vld [vmem:[%s0 + $0x198] sm:$0xff]
    %v208 = vld [vmem:[%s0 + $0x1a0] sm:$0xff]
    %v209 = vld [vmem:[%s0 + $0x1a8] sm:$0xff]
    %v210 = vld [vmem:[%s0 + $0x1b0] sm:$0xff]
    %v211 = vld [vmem:[%s0 + $0x1b8] sm:$0xff]
    %v212 = vld [vmem:[%s0 + $0x1c0] sm:$0xff]
    %v213 = vld [vmem:[%s0 + $0x1c8] sm:$0xff]
    %v214 = vld [vmem:[%s0 + $0x1d0] sm:$0xff]
    %v215 = vld [vmem:[%s0 + $0x1d8] sm:$0xff]
    %v216 = vld [vmem:[%s0 + $0x1e0] sm:$0xff]
    %v217 = vld [vmem:[%s0 + $0x1e8] sm:$0xff]
    %v218 = vld [vmem:[%s0 + $0x1f0] sm:$0xff]
    %v219 = vld [vmem:[%s0 + $0x1f8] sm:$0xff]
    %v220 = vld [vmem:[%s0 + $0x200] sm:$0xff]
    %v221 = vld [vmem:[%s0 + $0x208] sm:$0xff]
    %v222 = vld [vmem:[%s0 + $0x210] sm:$0xff]
    %v223 = vld [vmem:[%s0 + $0x218] sm:$0xff]
    %v224 = vld [vmem:[%s0 + $0x220] sm:$0xff]
    %v225 = vld [vmem:[%s0 + $0x228] sm:$0xff]
    %v226 = vld [vmem:[%s0 + $0x230] sm:$0xff]
    %v227 = vld [vmem:[%s0 + $0x238] sm:$0xff]
    %v228 = vld [vmem:[%s0 + $0x240] sm:$0xff]
    %v229 = vld [vmem:[%s0 + $0x248] sm:$0xff]
    %v230 = vld [vmem:[%s0 + $0x250] sm:$0xff]
    %v231 = vld [vmem:[%s0 + $0x258] sm:$0xff]
    %v232 = vld [vmem:[%s0 + $0x260] sm:$0xff]
    %v233 = vld [vmem:[%s0 + $0x268] sm:$0xff]
    %v234 = vld [vmem:[%s0 + $0x270] sm:$0xff]
    %v235 = vld [vmem:[%s0 + $0x278] sm:$0xff]
    %v236 = vld [vmem:[%s0 + $0x280] sm:$0xff]
    %v237 = vld [vmem:[%s0 + $0x288] sm:$0xff]
    %v238 = vld [vmem:[%s0 + $0x290] sm:$0xff]
    %v239 = vld [vmem:[%s0 + $0x298] sm:$0xff]
    %v240 = vld [vmem:[%s0 + $0x2a0] sm:$0xff]
    %v241 = vld [vmem:[%s0 + $0x2a8] sm:$0xff]
    %v242 = vld [vmem:[%s0 + $0x2b0] sm:$0xff]
    %v243 = vld [vmem:[%s0 + $0x2b8] sm:$0xff]
    %v244 = vld [vmem:[%s0 + $0x2c0] sm:$0xff]
    %v245 = vld [vmem:[%s0 + $0x2c8] sm:$0xff]
    %v246 = vld [vmem:[%s0 + $0x2d0] sm:$0xff]
    %v247 = vld [vmem:[%s0 + $0x2d8] sm:$0xff]
    %v248 = vld [vmem:[%s0 + $0x2e0] sm:$0xff]
    %v249 = vld [vmem:[%s0 + $0x2e8] sm:$0xff]
    %v250 = vld [vmem:[%s0 + $0x2f0] sm:$0xff]
    %v251 = vld [vmem:[%s0 + $0x2f8] sm:$0xff]
    %v252 = vld [vmem:[%s0 + $0x300] sm:$0xff]
    %v253 = vld [vmem:[%s0 + $0x308] sm:$0xff]
    %v254 = vld [vmem:[%s0 + $0x310] sm:$0xff]
    %v255 = vld [vmem:[%s0 + $0x318] sm:$0xff]
    %v256 = vld [vmem:[%s0 + $0x320] sm:$0xff]
    %v257 = vld [vmem:[%s0 + $0x328] sm:$0xff]
    %v258 = vld [vmem:[%s0 + $0x330] sm:$0xff]
    %v259 = vld [vmem:[%s0 + $0x338] sm:$0xff]
    %v260 = vld [vmem:[%s0 + $0x340] sm:$0xff]
    %v261 = vld [vmem:[%s0 + $0x348] sm:$0xff]
    %v262 = vld [vmem:[%s0 + $0x350] sm:$0xff]
    %v263 = vld [vmem:[%s0 + $0x358] sm:$0xff]
    %v264 = vld [vmem:[%s0 + $0x360] sm:$0xff]
    %v265 = vld [vmem:[%s0 + $0x368] sm:$0xff]
    %v266 = vld [vmem:[%s0 + $0x370] sm:$0xff]
    %v267 = vld [vmem:[%s0 + $0x378] sm:$0xff]
    %v268 = vld [vmem:[%s0 + $0x380] sm:$0xff]
    %v269 = vld [vmem:[%s0 + $0x388] sm:$0xff]
    %v270 = vld [vmem:[%s0 + $0x390] sm:$0xff]
    %v271 = vld [vmem:[%s0 + $0x398] sm:$0xff]
    %v272 = vld [vmem:[%s0 + $0x3a0] sm:$0xff]
    %v273 = vld [vmem:[%s0 + $0x3a8] sm:$0xff]
    %v274 = vld [vmem:[%s0 + $0x3b0] sm:$0xff]
    %v275 = vld [vmem:[%s0 + $0x3b8] sm:$0xff]
    %v276 = vld [vmem:[%s0 + $0x3c0] sm:$0xff]
    %v277 = vld [vmem:[%s0 + $0x3c8] sm:$0xff]
    %v278 = vld [vmem:[%s0 + $0x3d0] sm:$0xff]
    %v279 = vld [vmem:[%s0 + $0x3d8] sm:$0xff]
    %v280 = vld [vmem:[%s0 + $0x3e0] sm:$0xff]
    %v281 = vld [vmem:[%s0 + $0x3e8] sm:$0xff]
    %v282 = vld [vmem:[%s0 + $0x3f0] sm:$0xff]
    %v283 = vld [vmem:[%s0 + $0x3f8] sm:$0xff]
    %v284 = vld [vmem:[%s6] ss:$8 sm:$0x3]
    %v285 = vld [vmem:[%s1] sm:$0xff]
    %v286 = vld [vmem:[%s1 + $0x8] sm:$0xff]
    %v287 = vld [vmem:[%s1 + $0x10] sm:$0xff]
    %v288 = vld [vmem:[%s1 + $0x18] sm:$0xff]
    %v289 = vld [vmem:[%s1 + $0x20] sm:$0xff]
    %v290 = vld [vmem:[%s1 + $0x28] sm:$0xff]
    %v291 = vld [vmem:[%s1 + $0x30] sm:$0xff]
    %v292 = vld [vmem:[%s1 + $0x38] sm:$0xff]
    %v293 = vld [vmem:[%s1 + $0x40] sm:$0xff]
    %v294 = vld [vmem:[%s1 + $0x48] sm:$0xff]
    %v295 = vld [vmem:[%s1 + $0x50] sm:$0xff]
    %v296 = vld [vmem:[%s1 + $0x58] sm:$0xff]
    %v297 = vld [vmem:[%s1 + $0x60] sm:$0xff]
    %v298 = vld [vmem:[%s1 + $0x68] sm:$0xff]
    %v299 = vld [vmem:[%s1 + $0x70] sm:$0xff]
    %v300 = vld [vmem:[%s1 + $0x78] sm:$0xff]
    %v301 = vld [vmem:[%s1 + $0x80] sm:$0xff]
    %v302 = vld [vmem:[%s1 + $0x88] sm:$0xff]
    %v303 = vld [vmem:[%s1 + $0x90] sm:$0xff]
    %v304 = vld [vmem:[%s1 + $0x98] sm:$0xff]
    %v305 = vld [vmem:[%s1 + $0xa0] sm:$0xff]
    %v306 = vld [vmem:[%s1 + $0xa8] sm:$0xff]
    %v307 = vld [vmem:[%s1 + $0xb0] sm:$0xff]
    %v308 = vld [vmem:[%s1 + $0xb8] sm:$0xff]
    %v309 = vld [vmem:[%s1 + $0xc0] sm:$0xff]
    %v310 = vld [vmem:[%s1 + $0xc8] sm:$0xff]
    %v311 = vld [vmem:[%s1 + $0xd0] sm:$0xff]
    %v312 = vld [vmem:[%s1 + $0xd8] sm:$0xff]
    %v313 = vld [vmem:[%s1 + $0xe0] sm:$0xff]
    %v314 = vld [vmem:[%s1 + $0xe8] sm:$0xff]
    %v315 = vld [vmem:[%s1 + $0xf0] sm:$0xff]
    %v316 = vld [vmem:[%s1 + $0xf8] sm:$0xff]
    %v317 = vld [vmem:[%s1 + $0x100] sm:$0xff]
    %v318 = vld [vmem:[%s1 + $0x108] sm:$0xff]
    %v319 = vld [vmem:[%s1 + $0x110] sm:$0xff]
    %v320 = vld [vmem:[%s1 + $0x118] sm:$0xff]
    %v321 = vld [vmem:[%s1 + $0x120] sm:$0xff]
    %v322 = vld [vmem:[%s1 + $0x128] sm:$0xff]
    %v323 = vld [vmem:[%s1 + $0x130] sm:$0xff]
    %v324 = vld [vmem:[%s1 + $0x138] sm:$0xff]
    %v325 = vld [vmem:[%s1 + $0x140] sm:$0xff]
    %v326 = vld [vmem:[%s1 + $0x148] sm:$0xff]
    %v327 = vld [vmem:[%s1 + $0x150] sm:$0xff]
    %v328 = vld [vmem:[%s1 + $0x158] sm:$0xff]
    %v329 = vld [vmem:[%s1 + $0x160] sm:$0xff]
    %v330 = vld [vmem:[%s1 + $0x168] sm:$0xff]
    %v331 = vld [vmem:[%s1 + $0x170] sm:$0xff]
    %v332 = vld [vmem:[%s1 + $0x178] sm:$0xff]
    %v333 = vld [vmem:[%s1 + $0x180] sm:$0xff]
    %v334 = vld [vmem:[%s1 + $0x188] sm:$0xff]
    %v335 = vld [vmem:[%s1 + $0x190] sm:$0xff]
    %v336 = vld [vmem:[%s1 + $0x198] sm:$0xff]
    %v337 = vld [vmem:[%s1 + $0x1a0] sm:$0xff]
    %v338 = vld [vmem:[%s1 + $0x1a8] sm:$0xff]
    %v339 = vld [vmem:[%s1 + $0x1b0] sm:$0xff]
    %v340 = vld [vmem:[%s1 + $0x1b8] sm:$0xff]
    %v341 = vld [vmem:[%s1 + $0x1c0] sm:$0xff]
    %v342 = vld [vmem:[%s1 + $0x1c8] sm:$0xff]
    %v343 = vld [vmem:[%s1 + $0x1d0] sm:$0xff]
    %v344 = vld [vmem:[%s1 + $0x1d8] sm:$0xff]
    %v345 = vld [vmem:[%s1 + $0x1e0] sm:$0xff]
    %v346 = vld [vmem:[%s1 + $0x1e8] sm:$0xff]
    %v347 = vld [vmem:[%s1 + $0x1f0] sm:$0xff]
    %v348 = vld [vmem:[%s1 + $0x1f8] sm:$0xff]
    %v349 = vld [vmem:[%s1 + $0x200] sm:$0xff]
    %v350 = vld [vmem:[%s1 + $0x208] sm:$0xff]
    %v351 = vld [vmem:[%s1 + $0x210] sm:$0xff]
    %v352 = vld [vmem:[%s1 + $0x218] sm:$0xff]
    %v353 = vld [vmem:[%s1 + $0x220] sm:$0xff]
    %v354 = vld [vmem:[%s1 + $0x228] sm:$0xff]
    %v355 = vld [vmem:[%s1 + $0x230] sm:$0xff]
    %v356 = vld [vmem:[%s1 + $0x238] sm:$0xff]
    %v357 = vld [vmem:[%s1 + $0x240] sm:$0xff]
    %v358 = vld [vmem:[%s1 + $0x248] sm:$0xff]
    %v359 = vld [vmem:[%s1 + $0x250] sm:$0xff]
    %v360 = vld [vmem:[%s1 + $0x258] sm:$0xff]
    %v361 = vld [vmem:[%s1 + $0x260] sm:$0xff]
    %v362 = vld [vmem:[%s1 + $0x268] sm:$0xff]
    %v363 = vld [vmem:[%s1 + $0x270] sm:$0xff]
    %v364 = vld [vmem:[%s1 + $0x278] sm:$0xff]
    %v365 = vld [vmem:[%s1 + $0x280] sm:$0xff]
    %v366 = vld [vmem:[%s1 + $0x288] sm:$0xff]
    %v367 = vld [vmem:[%s1 + $0x290] sm:$0xff]
    %v368 = vld [vmem:[%s1 + $0x298] sm:$0xff]
    %v369 = vld [vmem:[%s1 + $0x2a0] sm:$0xff]
    %v370 = vld [vmem:[%s1 + $0x2a8] sm:$0xff]
    %v371 = vld [vmem:[%s1 + $0x2b0] sm:$0xff]
    %v372 = vld [vmem:[%s1 + $0x2b8] sm:$0xff]
    %v373 = vld [vmem:[%s1 + $0x2c0] sm:$0xff]
    %v374 = vld [vmem:[%s1 + $0x2c8] sm:$0xff]
    %v375 = vld [vmem:[%s1 + $0x2d0] sm:$0xff]
    %v376 = vld [vmem:[%s1 + $0x2d8] sm:$0xff]
    %v377 = vld [vmem:[%s1 + $0x2e0] sm:$0xff]
    %v378 = vld [vmem:[%s1 + $0x2e8] sm:$0xff]
    %v379 = vld [vmem:[%s1 + $0x2f0] sm:$0xff]
    %v380 = vld [vmem:[%s1 + $0x2f8] sm:$0xff]
    %v381 = vld [vmem:[%s1 + $0x300] sm:$0xff]
    %v382 = vld [vmem:[%s1 + $0x308] sm:$0xff]
    %v383 = vld [vmem:[%s1 + $0x310] sm:$0xff]
    %v384 = vld [vmem:[%s1 + $0x318] sm:$0xff]
    %v385 = vld [vmem:[%s1 + $0x320] sm:$0x3]
    %v386 = vld [vmem:[%s1 + $0x328] sm:$0x3]
    %v388 = vlaneseq
    %v389 = vshrl.u32 %v388, 7
    %v390 = vsub.s32 0, %v389
    %v391 = vrot.slane %v284, %v390
    %v392 = vlaneseq
    %v393 = vshrl.u32 %v392, 7
    %v394 = vsub.s32 1, %v393
    %v395 = vrot.slane %v284, %v394
    %vm398 = vcmask 146432
    %v400 = vsel %vm398, %v159, 0
    %v403 = vsel %vm398, %v163, 0
    %v406 = vsel %vm398, %v167, 0
    %v409 = vsel %vm398, %v171, 0
    %v412 = vsel %vm398, %v175, 0
    %v415 = vsel %vm398, %v179, 0
    %v418 = vsel %vm398, %v183, 0
    %v421 = vsel %vm398, %v187, 0
    %v424 = vsel %vm398, %v191, 0
    %v427 = vsel %vm398, %v195, 0
    %v430 = vsel %vm398, %v199, 0
    %v433 = vsel %vm398, %v203, 0
    %v436 = vsel %vm398, %v207, 0
    %v439 = vsel %vm398, %v211, 0
    %v442 = vsel %vm398, %v215, 0
    %v445 = vsel %vm398, %v219, 0
    %v448 = vsel %vm398, %v223, 0
    %v451 = vsel %vm398, %v227, 0
    %v454 = vsel %vm398, %v231, 0
    %v457 = vsel %vm398, %v235, 0
    %v460 = vsel %vm398, %v239, 0
    %v463 = vsel %vm398, %v243, 0
    %v466 = vsel %vm398, %v247, 0
    %v469 = vsel %vm398, %v251, 0
    %v472 = vsel %vm398, %v255, 0
    %v475 = vsel %vm398, %v259, 0
    %v478 = vsel %vm398, %v263, 0
    %v481 = vsel %vm398, %v267, 0
    %v484 = vsel %vm398, %v271, 0
    %v487 = vsel %vm398, %v275, 0
    %v490 = vsel %vm398, %v279, 0
    %v493 = vsel %vm398, %v283, 0
    %vm495 = vcmask 1041408
    %v497 = vsel %vm495, %v385, 0
    %v500 = vsel %vm495, %v386, 0
    %502 = vmatprep.subr.mxu0 %v316
    %503 = vmatpush1.msra.mxu0 %v315
    %504 = vmatprep.subr.mxu0 %v314
    %505 = vmatpush1.msra.mxu0 %v313
    %506 = vmatprep.subr.mxu0 %v312
    %507 = vmatpush1.msra.mxu0 %v311
    %508 = vmatprep.subr.mxu0 %v310
    %509 = vmatpush1.msra.mxu0 %v309
    %510 = vmatprep.subr.mxu0 %v308
    %511 = vmatpush1.msra.mxu0 %v307
    %512 = vmatprep.subr.mxu0 %v306
    %513 = vmatpush1.msra.mxu0 %v305
    %514 = vmatprep.subr.mxu0 %v304
    %515 = vmatpush1.msra.mxu0 %v303
    %516 = vmatprep.subr.mxu0 %v302
    %517 = vmatpush1.msra.mxu0 %v301
    %518 = vmatprep.subr.mxu0 %v300
    %519 = vmatpush1.msra.mxu0 %v299
    %520 = vmatprep.subr.mxu0 %v298
    %521 = vmatpush1.msra.mxu0 %v297
    %522 = vmatprep.subr.mxu0 %v296
    %523 = vmatpush1.msra.mxu0 %v295
    %524 = vmatprep.subr.mxu0 %v294
    %525 = vmatpush1.msra.mxu0 %v293
    %526 = vmatprep.subr.mxu0 %v292
    %527 = vmatpush1.msra.mxu0 %v291
    %528 = vmatprep.subr.mxu0 %v290
    %529 = vmatpush1.msra.mxu0 %v289
    %530 = vmatprep.subr.mxu0 %v288
    %531 = vmatpush1.msra.mxu0 %v287
    %532 = vmatprep.subr.mxu0 %v286
    %533 = vmatpush1.msra.mxu0 %v285
    %534 = vmatprep.subr.mxu0 %v348
    %535 = vmatpush2.msra.mxu0 %v347
    %536 = vmatprep.subr.mxu0 %v346
    %537 = vmatpush2.msra.mxu0 %v345
    %538 = vmatprep.subr.mxu0 %v344
    %539 = vmatpush2.msra.mxu0 %v343
    %540 = vmatprep.subr.mxu0 %v342
    %541 = vmatpush2.msra.mxu0 %v341
    %542 = vmatprep.subr.mxu0 %v340
    %543 = vmatpush2.msra.mxu0 %v339
    %544 = vmatprep.subr.mxu0 %v338
    %545 = vmatpush2.msra.mxu0 %v337
    %546 = vmatprep.subr.mxu0 %v336
    %547 = vmatpush2.msra.mxu0 %v335
    %548 = vmatprep.subr.mxu0 %v334
    %549 = vmatpush2.msra.mxu0 %v333
    %550 = vmatprep.subr.mxu0 %v332
    %551 = vmatpush2.msra.mxu0 %v331
    %552 = vmatprep.subr.mxu0 %v330
    %553 = vmatpush2.msra.mxu0 %v329
    %554 = vmatprep.subr.mxu0 %v328
    %555 = vmatpush2.msra.mxu0 %v327
    %556 = vmatprep.subr.mxu0 %v326
    %557 = vmatpush2.msra.mxu0 %v325
    %558 = vmatprep.subr.mxu0 %v324
    %559 = vmatpush2.msra.mxu0 %v323
    %560 = vmatprep.subr.mxu0 %v322
    %561 = vmatpush2.msra.mxu0 %v321
    %562 = vmatprep.subr.mxu0 %v320
    %563 = vmatpush2.msra.mxu0 %v319
    %564 = vmatprep.subr.mxu0 %v318
    %565 = vmatpush2.msra.mxu0 %v317
    %566 = vmatprep.mubr.f32.mxu0 %v157
    %567 = vmatmul.mubr.f32.gmra.mxu0 %v156
    %v568 = vpop.f32.mrf.mxu0
    %v569 = vadd.f32 %v391, %v568
    %v570 = vpop.f32.mrf.mxu0
    %v571 = vadd.f32 %v395, %v570
    %572 = vmatprep.mubr.f32.mxu0 %v161
    %573 = vmatmul.mubr.f32.gmra.mxu0 %v160
    %v574 = vpop.f32.mrf.mxu0
    %v575 = vadd.f32 %v391, %v574
    %v576 = vpop.f32.mrf.mxu0
    %v577 = vadd.f32 %v395, %v576
    %578 = vmatprep.mubr.f32.mxu0 %v165
    %579 = vmatmul.mubr.f32.gmra.mxu0 %v164
    %v580 = vpop.f32.mrf.mxu0
    %v581 = vadd.f32 %v391, %v580
    %v582 = vpop.f32.mrf.mxu0
    %v583 = vadd.f32 %v395, %v582
    %584 = vmatprep.mubr.f32.mxu0 %v169
    %585 = vmatmul.mubr.f32.gmra.mxu0 %v168
    %v586 = vpop.f32.mrf.mxu0
    %v587 = vadd.f32 %v391, %v586
    %v588 = vpop.f32.mrf.mxu0
    %v589 = vadd.f32 %v395, %v588
    %590 = vmatprep.mubr.f32.mxu0 %v173
    %591 = vmatmul.mubr.f32.gmra.mxu0 %v172
    %v592 = vpop.f32.mrf.mxu0
    %v593 = vadd.f32 %v391, %v592
    %v594 = vpop.f32.mrf.mxu0
    %v595 = vadd.f32 %v395, %v594
    %596 = vmatprep.mubr.f32.mxu0 %v177
    %597 = vmatmul.mubr.f32.gmra.mxu0 %v176
    %v598 = vpop.f32.mrf.mxu0
    %v599 = vadd.f32 %v391, %v598
    %v600 = vpop.f32.mrf.mxu0
    %v601 = vadd.f32 %v395, %v600
    %602 = vmatprep.mubr.f32.mxu0 %v181
    %603 = vmatmul.mubr.f32.gmra.mxu0 %v180
    %v604 = vpop.f32.mrf.mxu0
    %v605 = vadd.f32 %v391, %v604
    %v606 = vpop.f32.mrf.mxu0
    %v607 = vadd.f32 %v395, %v606
    %608 = vmatprep.mubr.f32.mxu0 %v185
    %609 = vmatmul.mubr.f32.gmra.mxu0 %v184
    %v610 = vpop.f32.mrf.mxu0
    %v611 = vadd.f32 %v391, %v610
    %v612 = vpop.f32.mrf.mxu0
    %v613 = vadd.f32 %v395, %v612
    %614 = vmatprep.mubr.f32.mxu0 %v189
    %615 = vmatmul.mubr.f32.gmra.mxu0 %v188
    %v616 = vpop.f32.mrf.mxu0
    %v617 = vadd.f32 %v391, %v616
    %v618 = vpop.f32.mrf.mxu0
    %v619 = vadd.f32 %v395, %v618
    %620 = vmatprep.mubr.f32.mxu0 %v193
    %621 = vmatmul.mubr.f32.gmra.mxu0 %v192
    %v622 = vpop.f32.mrf.mxu0
    %v623 = vadd.f32 %v391, %v622
    %v624 = vpop.f32.mrf.mxu0
    %v625 = vadd.f32 %v395, %v624
    %626 = vmatprep.mubr.f32.mxu0 %v197
    %627 = vmatmul.mubr.f32.gmra.mxu0 %v196
    %v628 = vpop.f32.mrf.mxu0
    %v629 = vadd.f32 %v391, %v628
    %v630 = vpop.f32.mrf.mxu0
    %v631 = vadd.f32 %v395, %v630
    %632 = vmatprep.mubr.f32.mxu0 %v201
    %633 = vmatmul.mubr.f32.gmra.mxu0 %v200
    %v634 = vpop.f32.mrf.mxu0
    %v635 = vadd.f32 %v391, %v634
    %v636 = vpop.f32.mrf.mxu0
    %v637 = vadd.f32 %v395, %v636
    %638 = vmatprep.mubr.f32.mxu0 %v205
    %639 = vmatmul.mubr.f32.gmra.mxu0 %v204
    %v640 = vpop.f32.mrf.mxu0
    %v641 = vadd.f32 %v391, %v640
    %v642 = vpop.f32.mrf.mxu0
    %v643 = vadd.f32 %v395, %v642
    %644 = vmatprep.mubr.f32.mxu0 %v209
    %645 = vmatmul.mubr.f32.gmra.mxu0 %v208
    %v646 = vpop.f32.mrf.mxu0
    %v647 = vadd.f32 %v391, %v646
    %v648 = vpop.f32.mrf.mxu0
    %v649 = vadd.f32 %v395, %v648
    %650 = vmatprep.mubr.f32.mxu0 %v213
    %651 = vmatmul.mubr.f32.gmra.mxu0 %v212
    %v652 = vpop.f32.mrf.mxu0
    %v653 = vadd.f32 %v391, %v652
    %v654 = vpop.f32.mrf.mxu0
    %v655 = vadd.f32 %v395, %v654
    %656 = vmatprep.mubr.f32.mxu0 %v217
    %657 = vmatmul.mubr.f32.gmra.mxu0 %v216
    %v658 = vpop.f32.mrf.mxu0
    %v659 = vadd.f32 %v391, %v658
    %v660 = vpop.f32.mrf.mxu0
    %v661 = vadd.f32 %v395, %v660
    %662 = vmatprep.mubr.f32.mxu0 %v221
    %663 = vmatmul.mubr.f32.gmra.mxu0 %v220
    %v664 = vpop.f32.mrf.mxu0
    %v665 = vadd.f32 %v391, %v664
    %v666 = vpop.f32.mrf.mxu0
    %v667 = vadd.f32 %v395, %v666
    %668 = vmatprep.mubr.f32.mxu0 %v225
    %669 = vmatmul.mubr.f32.gmra.mxu0 %v224
    %v670 = vpop.f32.mrf.mxu0
    %v671 = vadd.f32 %v391, %v670
    %v672 = vpop.f32.mrf.mxu0
    %v673 = vadd.f32 %v395, %v672
    %674 = vmatprep.mubr.f32.mxu0 %v229
    %675 = vmatmul.mubr.f32.gmra.mxu0 %v228
    %v676 = vpop.f32.mrf.mxu0
    %v677 = vadd.f32 %v391, %v676
    %v678 = vpop.f32.mrf.mxu0
    %v679 = vadd.f32 %v395, %v678
    %680 = vmatprep.mubr.f32.mxu0 %v233
    %681 = vmatmul.mubr.f32.gmra.mxu0 %v232
    %v682 = vpop.f32.mrf.mxu0
    %v683 = vadd.f32 %v391, %v682
    %v684 = vpop.f32.mrf.mxu0
    %v685 = vadd.f32 %v395, %v684
    %686 = vmatprep.mubr.f32.mxu0 %v237
    %687 = vmatmul.mubr.f32.gmra.mxu0 %v236
    %v688 = vpop.f32.mrf.mxu0
    %v689 = vadd.f32 %v391, %v688
    %v690 = vpop.f32.mrf.mxu0
    %v691 = vadd.f32 %v395, %v690
    %692 = vmatprep.mubr.f32.mxu0 %v241
    %693 = vmatmul.mubr.f32.gmra.mxu0 %v240
    %v694 = vpop.f32.mrf.mxu0
    %v695 = vadd.f32 %v391, %v694
    %v696 = vpop.f32.mrf.mxu0
    %v697 = vadd.f32 %v395, %v696
    %698 = vmatprep.mubr.f32.mxu0 %v245
    %699 = vmatmul.mubr.f32.gmra.mxu0 %v244
    %v700 = vpop.f32.mrf.mxu0
    %v701 = vadd.f32 %v391, %v700
    %v702 = vpop.f32.mrf.mxu0
    %v703 = vadd.f32 %v395, %v702
    %704 = vmatprep.mubr.f32.mxu0 %v249
    %705 = vmatmul.mubr.f32.gmra.mxu0 %v248
    %v706 = vpop.f32.mrf.mxu0
    %v707 = vadd.f32 %v391, %v706
    %v708 = vpop.f32.mrf.mxu0
    %v709 = vadd.f32 %v395, %v708
    %710 = vmatprep.mubr.f32.mxu0 %v253
    %711 = vmatmul.mubr.f32.gmra.mxu0 %v252
    %v712 = vpop.f32.mrf.mxu0
    %v713 = vadd.f32 %v391, %v712
    %v714 = vpop.f32.mrf.mxu0
    %v715 = vadd.f32 %v395, %v714
    %716 = vmatprep.mubr.f32.mxu0 %v257
    %717 = vmatmul.mubr.f32.gmra.mxu0 %v256
    %v718 = vpop.f32.mrf.mxu0
    %v719 = vadd.f32 %v391, %v718
    %v720 = vpop.f32.mrf.mxu0
    %v721 = vadd.f32 %v395, %v720
    %722 = vmatprep.mubr.f32.mxu0 %v261
    %723 = vmatmul.mubr.f32.gmra.mxu0 %v260
    %v724 = vpop.f32.mrf.mxu0
    %v725 = vadd.f32 %v391, %v724
    %v726 = vpop.f32.mrf.mxu0
    %v727 = vadd.f32 %v395, %v726
    %728 = vmatprep.mubr.f32.mxu0 %v265
    %729 = vmatmul.mubr.f32.gmra.mxu0 %v264
    %v730 = vpop.f32.mrf.mxu0
    %v731 = vadd.f32 %v391, %v730
    %v732 = vpop.f32.mrf.mxu0
    %v733 = vadd.f32 %v395, %v732
    %734 = vmatprep.mubr.f32.mxu0 %v269
    %735 = vmatmul.mubr.f32.gmra.mxu0 %v268
    %v736 = vpop.f32.mrf.mxu0
    %v737 = vadd.f32 %v391, %v736
    %v738 = vpop.f32.mrf.mxu0
    %v739 = vadd.f32 %v395, %v738
    %740 = vmatprep.mubr.f32.mxu0 %v273
    %741 = vmatmul.mubr.f32.gmra.mxu0 %v272
    %v742 = vpop.f32.mrf.mxu0
    %v743 = vadd.f32 %v391, %v742
    %v744 = vpop.f32.mrf.mxu0
    %v745 = vadd.f32 %v395, %v744
    %746 = vmatprep.mubr.f32.mxu0 %v277
    %747 = vmatmul.mubr.f32.gmra.mxu0 %v276
    %v748 = vpop.f32.mrf.mxu0
    %v749 = vadd.f32 %v391, %v748
    %v750 = vpop.f32.mrf.mxu0
    %v751 = vadd.f32 %v395, %v750
    %752 = vmatprep.mubr.f32.mxu0 %v281
    %753 = vmatmul.mubr.f32.gmra.mxu0 %v280
    %v754 = vpop.f32.mrf.mxu0
    %v755 = vadd.f32 %v391, %v754
    %v756 = vpop.f32.mrf.mxu0
    %v757 = vadd.f32 %v395, %v756
    %758 = vdwg.mxu0
    %759 = vmatprep.subr.mxu0 %v380
    %760 = vmatpush1.msra.mxu0 %v379
    %761 = vmatprep.subr.mxu0 %v378
    %762 = vmatpush1.msra.mxu0 %v377
    %763 = vmatprep.subr.mxu0 %v376
    %764 = vmatpush1.msra.mxu0 %v375
    %765 = vmatprep.subr.mxu0 %v374
    %766 = vmatpush1.msra.mxu0 %v373
    %767 = vmatprep.subr.mxu0 %v372
    %768 = vmatpush1.msra.mxu0 %v371
    %769 = vmatprep.subr.mxu0 %v370
    %770 = vmatpush1.msra.mxu0 %v369
    %771 = vmatprep.subr.mxu0 %v368
    %772 = vmatpush1.msra.mxu0 %v367
    %773 = vmatprep.subr.mxu0 %v366
    %774 = vmatpush1.msra.mxu0 %v365
    %775 = vmatprep.subr.mxu0 %v364
    %776 = vmatpush1.msra.mxu0 %v363
    %777 = vmatprep.subr.mxu0 %v362
    %778 = vmatpush1.msra.mxu0 %v361
    %779 = vmatprep.subr.mxu0 %v360
    %780 = vmatpush1.msra.mxu0 %v359
    %781 = vmatprep.subr.mxu0 %v358
    %782 = vmatpush1.msra.mxu0 %v357
    %783 = vmatprep.subr.mxu0 %v356
    %784 = vmatpush1.msra.mxu0 %v355
    %785 = vmatprep.subr.mxu0 %v354
    %786 = vmatpush1.msra.mxu0 %v353
    %787 = vmatprep.subr.mxu0 %v352
    %788 = vmatpush1.msra.mxu0 %v351
    %789 = vmatprep.subr.mxu0 %v350
    %790 = vmatpush1.msra.mxu0 %v349
    %791 = vmatprep.subr.mxu0 0.0
    %792 = vmatpush2.msra.mxu0 0.0
    %793 = vmatprep.subr.mxu0 0.0
    %794 = vmatpush2.msra.mxu0 0.0
    %795 = vmatprep.subr.mxu0 0.0
    %796 = vmatpush2.msra.mxu0 0.0
    %797 = vmatprep.subr.mxu0 0.0
    %798 = vmatpush2.msra.mxu0 0.0
    %799 = vmatprep.subr.mxu0 0.0
    %800 = vmatpush2.msra.mxu0 0.0
    %801 = vmatprep.subr.mxu0 0.0
    %802 = vmatpush2.msra.mxu0 0.0
    %803 = vmatprep.subr.mxu0 0.0
    %804 = vmatpush2.msra.mxu0 0.0
    %805 = vmatprep.subr.mxu0 0.0
    %806 = vmatpush2.msra.mxu0 0.0
    %807 = vmatprep.subr.mxu0 0.0
    %808 = vmatpush2.msra.mxu0 0.0
    %809 = vmatprep.subr.mxu0 0.0
    %810 = vmatpush2.msra.mxu0 0.0
    %811 = vmatprep.subr.mxu0 0.0
    %812 = vmatpush2.msra.mxu0 0.0
    %813 = vmatprep.subr.mxu0 0.0
    %814 = vmatpush2.msra.mxu0 0.0
    %815 = vmatprep.subr.mxu0 0.0
    %816 = vmatpush2.msra.mxu0 0.0
    %817 = vmatprep.subr.mxu0 %v500
    %818 = vmatpush2.msra.mxu0 %v497
    %819 = vmatprep.subr.mxu0 %v384
    %820 = vmatpush2.msra.mxu0 %v383
    %821 = vmatprep.subr.mxu0 %v382
    %822 = vmatpush2.msra.mxu0 %v381
    %823 = vmatprep.mubr.f32.mxu0 %v400
    %824 = vmatmul.mubr.f32.gmra.mxu0 %v158
    %v825 = vpop.f32.mrf.mxu0
    %v826 = vadd.f32 %v569, %v825
    %v827 = vpop.f32.mrf.mxu0
    %v828 = vadd.f32 %v571, %v827
    %829 = vmatprep.mubr.f32.mxu0 %v403
    %830 = vmatmul.mubr.f32.gmra.mxu0 %v162
    %v831 = vpop.f32.mrf.mxu0
    %v832 = vadd.f32 %v575, %v831
    %v833 = vpop.f32.mrf.mxu0
    %v834 = vadd.f32 %v577, %v833
    %835 = vmatprep.mubr.f32.mxu0 %v406
    %836 = vmatmul.mubr.f32.gmra.mxu0 %v166
    %v837 = vpop.f32.mrf.mxu0
    %v838 = vadd.f32 %v581, %v837
    %v839 = vpop.f32.mrf.mxu0
    %v840 = vadd.f32 %v583, %v839
    %841 = vmatprep.mubr.f32.mxu0 %v409
    %842 = vmatmul.mubr.f32.gmra.mxu0 %v170
    %v843 = vpop.f32.mrf.mxu0
    %v844 = vadd.f32 %v587, %v843
    %v845 = vpop.f32.mrf.mxu0
    %v846 = vadd.f32 %v589, %v845
    %847 = vmatprep.mubr.f32.mxu0 %v412
    %848 = vmatmul.mubr.f32.gmra.mxu0 %v174
    %v849 = vpop.f32.mrf.mxu0
    %v850 = vadd.f32 %v593, %v849
    %v851 = vpop.f32.mrf.mxu0
    %v852 = vadd.f32 %v595, %v851
    %853 = vmatprep.mubr.f32.mxu0 %v415
    %854 = vmatmul.mubr.f32.gmra.mxu0 %v178
    %v855 = vpop.f32.mrf.mxu0
    %v856 = vadd.f32 %v599, %v855
    %v857 = vpop.f32.mrf.mxu0
    %v858 = vadd.f32 %v601, %v857
    %859 = vmatprep.mubr.f32.mxu0 %v418
    %860 = vmatmul.mubr.f32.gmra.mxu0 %v182
    %v861 = vpop.f32.mrf.mxu0
    %v862 = vadd.f32 %v605, %v861
    %v863 = vpop.f32.mrf.mxu0
    %v864 = vadd.f32 %v607, %v863
    %865 = vmatprep.mubr.f32.mxu0 %v421
    %866 = vmatmul.mubr.f32.gmra.mxu0 %v186
    %v867 = vpop.f32.mrf.mxu0
    %v868 = vadd.f32 %v611, %v867
    %v869 = vpop.f32.mrf.mxu0
    %v870 = vadd.f32 %v613, %v869
    %871 = vmatprep.mubr.f32.mxu0 %v424
    %872 = vmatmul.mubr.f32.gmra.mxu0 %v190
    %v873 = vpop.f32.mrf.mxu0
    %v874 = vadd.f32 %v617, %v873
    %v875 = vpop.f32.mrf.mxu0
    %v876 = vadd.f32 %v619, %v875
    %877 = vmatprep.mubr.f32.mxu0 %v427
    %878 = vmatmul.mubr.f32.gmra.mxu0 %v194
    %v879 = vpop.f32.mrf.mxu0
    %v880 = vadd.f32 %v623, %v879
    %v881 = vpop.f32.mrf.mxu0
    %v882 = vadd.f32 %v625, %v881
    %883 = vmatprep.mubr.f32.mxu0 %v430
    %884 = vmatmul.mubr.f32.gmra.mxu0 %v198
    %v885 = vpop.f32.mrf.mxu0
    %v886 = vadd.f32 %v629, %v885
    %v887 = vpop.f32.mrf.mxu0
    %v888 = vadd.f32 %v631, %v887
    %889 = vmatprep.mubr.f32.mxu0 %v433
    %890 = vmatmul.mubr.f32.gmra.mxu0 %v202
    %v891 = vpop.f32.mrf.mxu0
    %v892 = vadd.f32 %v635, %v891
    %v893 = vpop.f32.mrf.mxu0
    %v894 = vadd.f32 %v637, %v893
    %895 = vmatprep.mubr.f32.mxu0 %v436
    %896 = vmatmul.mubr.f32.gmra.mxu0 %v206
    %v897 = vpop.f32.mrf.mxu0
    %v898 = vadd.f32 %v641, %v897
    %v899 = vpop.f32.mrf.mxu0
    %v900 = vadd.f32 %v643, %v899
    %901 = vmatprep.mubr.f32.mxu0 %v439
    %902 = vmatmul.mubr.f32.gmra.mxu0 %v210
    %v903 = vpop.f32.mrf.mxu0
    %v904 = vadd.f32 %v647, %v903
    %v905 = vpop.f32.mrf.mxu0
    %v906 = vadd.f32 %v649, %v905
    %907 = vmatprep.mubr.f32.mxu0 %v442
    %908 = vmatmul.mubr.f32.gmra.mxu0 %v214
    %v909 = vpop.f32.mrf.mxu0
    %v910 = vadd.f32 %v653, %v909
    %v911 = vpop.f32.mrf.mxu0
    %v912 = vadd.f32 %v655, %v911
    %913 = vmatprep.mubr.f32.mxu0 %v445
    %914 = vmatmul.mubr.f32.gmra.mxu0 %v218
    %v915 = vpop.f32.mrf.mxu0
    %v916 = vadd.f32 %v659, %v915
    %v917 = vpop.f32.mrf.mxu0
    %v918 = vadd.f32 %v661, %v917
    %919 = vmatprep.mubr.f32.mxu0 %v448
    %920 = vmatmul.mubr.f32.gmra.mxu0 %v222
    %v921 = vpop.f32.mrf.mxu0
    %v922 = vadd.f32 %v665, %v921
    %v923 = vpop.f32.mrf.mxu0
    %v924 = vadd.f32 %v667, %v923
    %925 = vmatprep.mubr.f32.mxu0 %v451
    %926 = vmatmul.mubr.f32.gmra.mxu0 %v226
    %v927 = vpop.f32.mrf.mxu0
    %v928 = vadd.f32 %v671, %v927
    %v929 = vpop.f32.mrf.mxu0
    %v930 = vadd.f32 %v673, %v929
    %931 = vmatprep.mubr.f32.mxu0 %v454
    %932 = vmatmul.mubr.f32.gmra.mxu0 %v230
    %v933 = vpop.f32.mrf.mxu0
    %v934 = vadd.f32 %v677, %v933
    %v935 = vpop.f32.mrf.mxu0
    %v936 = vadd.f32 %v679, %v935
    %937 = vmatprep.mubr.f32.mxu0 %v457
    %938 = vmatmul.mubr.f32.gmra.mxu0 %v234
    %v939 = vpop.f32.mrf.mxu0
    %v940 = vadd.f32 %v683, %v939
    %v941 = vpop.f32.mrf.mxu0
    %v942 = vadd.f32 %v685, %v941
    %943 = vmatprep.mubr.f32.mxu0 %v460
    %944 = vmatmul.mubr.f32.gmra.mxu0 %v238
    %v945 = vpop.f32.mrf.mxu0
    %v946 = vadd.f32 %v689, %v945
    %v947 = vpop.f32.mrf.mxu0
    %v948 = vadd.f32 %v691, %v947
    %949 = vmatprep.mubr.f32.mxu0 %v463
    %950 = vmatmul.mubr.f32.gmra.mxu0 %v242
    %v951 = vpop.f32.mrf.mxu0
    %v952 = vadd.f32 %v695, %v951
    %v953 = vpop.f32.mrf.mxu0
    %v954 = vadd.f32 %v697, %v953
    %955 = vmatprep.mubr.f32.mxu0 %v466
    %956 = vmatmul.mubr.f32.gmra.mxu0 %v246
    %v957 = vpop.f32.mrf.mxu0
    %v958 = vadd.f32 %v701, %v957
    %v959 = vpop.f32.mrf.mxu0
    %v960 = vadd.f32 %v703, %v959
    %961 = vmatprep.mubr.f32.mxu0 %v469
    %962 = vmatmul.mubr.f32.gmra.mxu0 %v250
    %v963 = vpop.f32.mrf.mxu0
    %v964 = vadd.f32 %v707, %v963
    %v965 = vpop.f32.mrf.mxu0
    %v966 = vadd.f32 %v709, %v965
    %967 = vmatprep.mubr.f32.mxu0 %v472
    %968 = vmatmul.mubr.f32.gmra.mxu0 %v254
    %v969 = vpop.f32.mrf.mxu0
    %v970 = vadd.f32 %v713, %v969
    %v971 = vpop.f32.mrf.mxu0
    %v972 = vadd.f32 %v715, %v971
    %973 = vmatprep.mubr.f32.mxu0 %v475
    %974 = vmatmul.mubr.f32.gmra.mxu0 %v258
    %v975 = vpop.f32.mrf.mxu0
    %v976 = vadd.f32 %v719, %v975
    %v977 = vpop.f32.mrf.mxu0
    %v978 = vadd.f32 %v721, %v977
    %979 = vmatprep.mubr.f32.mxu0 %v478
    %980 = vmatmul.mubr.f32.gmra.mxu0 %v262
    %v981 = vpop.f32.mrf.mxu0
    %v982 = vadd.f32 %v725, %v981
    %v983 = vpop.f32.mrf.mxu0
    %v984 = vadd.f32 %v727, %v983
    %985 = vmatprep.mubr.f32.mxu0 %v481
    %986 = vmatmul.mubr.f32.gmra.mxu0 %v266
    %v987 = vpop.f32.mrf.mxu0
    %v988 = vadd.f32 %v731, %v987
    %v989 = vpop.f32.mrf.mxu0
    %v990 = vadd.f32 %v733, %v989
    %991 = vmatprep.mubr.f32.mxu0 %v484
    %992 = vmatmul.mubr.f32.gmra.mxu0 %v270
    %v993 = vpop.f32.mrf.mxu0
    %v994 = vadd.f32 %v737, %v993
    %v995 = vpop.f32.mrf.mxu0
    %v996 = vadd.f32 %v739, %v995
    %997 = vmatprep.mubr.f32.mxu0 %v487
    %998 = vmatmul.mubr.f32.gmra.mxu0 %v274
    %v999 = vpop.f32.mrf.mxu0
    %v1000 = vadd.f32 %v743, %v999
    %v1001 = vpop.f32.mrf.mxu0
    %v1002 = vadd.f32 %v745, %v1001
    %1003 = vmatprep.mubr.f32.mxu0 %v490
    %1004 = vmatmul.mubr.f32.gmra.mxu0 %v278
    %v1005 = vpop.f32.mrf.mxu0
    %v1006 = vadd.f32 %v749, %v1005
    %v1007 = vpop.f32.mrf.mxu0
    %v1008 = vadd.f32 %v751, %v1007
    %1009 = vmatprep.mubr.f32.mxu0 %v493
    %1010 = vmatmul.mubr.f32.gmra.mxu0 %v282
    %v1011 = vpop.f32.mrf.mxu0
    %v1012 = vadd.f32 %v755, %v1011
    %v1013 = vpop.f32.mrf.mxu0
    %v1014 = vadd.f32 %v757, %v1013
    %1015 = vdwg.mxu0
    %v1016 = vsub.f32 0.0, %v826
    %v1017 = vsub.f32 0.0, %v828
    %v1018 = vsub.f32 0.0, %v832
    %v1019 = vsub.f32 0.0, %v834
    %v1020 = vsub.f32 0.0, %v838
    %v1021 = vsub.f32 0.0, %v840
    %v1022 = vsub.f32 0.0, %v844
    %v1023 = vsub.f32 0.0, %v846
    %v1024 = vsub.f32 0.0, %v850
    %v1025 = vsub.f32 0.0, %v852
    %v1026 = vsub.f32 0.0, %v856
    %v1027 = vsub.f32 0.0, %v858
    %v1028 = vsub.f32 0.0, %v862
    %v1029 = vsub.f32 0.0, %v864
    %v1030 = vsub.f32 0.0, %v868
    %v1031 = vsub.f32 0.0, %v870
    %v1032 = vsub.f32 0.0, %v874
    %v1033 = vsub.f32 0.0, %v876
    %v1034 = vsub.f32 0.0, %v880
    %v1035 = vsub.f32 0.0, %v882
    %v1036 = vsub.f32 0.0, %v886
    %v1037 = vsub.f32 0.0, %v888
    %v1038 = vsub.f32 0.0, %v892
    %v1039 = vsub.f32 0.0, %v894
    %v1040 = vsub.f32 0.0, %v898
    %v1041 = vsub.f32 0.0, %v900
    %v1042 = vsub.f32 0.0, %v904
    %v1043 = vsub.f32 0.0, %v906
    %v1044 = vsub.f32 0.0, %v910
    %v1045 = vsub.f32 0.0, %v912
    %v1046 = vsub.f32 0.0, %v916
    %v1047 = vsub.f32 0.0, %v918
    %v1048 = vsub.f32 0.0, %v922
    %v1049 = vsub.f32 0.0, %v924
    %v1050 = vsub.f32 0.0, %v928
    %v1051 = vsub.f32 0.0, %v930
    %v1052 = vsub.f32 0.0, %v934
    %v1053 = vsub.f32 0.0, %v936
    %v1054 = vsub.f32 0.0, %v940
    %v1055 = vsub.f32 0.0, %v942
    %v1056 = vsub.f32 0.0, %v946
    %v1057 = vsub.f32 0.0, %v948
    %v1058 = vsub.f32 0.0, %v952
    %v1059 = vsub.f32 0.0, %v954
    %v1060 = vsub.f32 0.0, %v958
    %v1061 = vsub.f32 0.0, %v960
    %v1062 = vsub.f32 0.0, %v964
    %v1063 = vsub.f32 0.0, %v966
    %v1064 = vsub.f32 0.0, %v970
    %v1065 = vsub.f32 0.0, %v972
    %v1066 = vsub.f32 0.0, %v976
    %v1067 = vsub.f32 0.0, %v978
    %v1068 = vsub.f32 0.0, %v982
    %v1069 = vsub.f32 0.0, %v984
    %v1070 = vsub.f32 0.0, %v988
    %v1071 = vsub.f32 0.0, %v990
    %v1072 = vsub.f32 0.0, %v994
    %v1073 = vsub.f32 0.0, %v996
    %v1074 = vsub.f32 0.0, %v1000
    %v1075 = vsub.f32 0.0, %v1002
    %v1076 = vsub.f32 0.0, %v1006
    %v1077 = vsub.f32 0.0, %v1008
    %v1078 = vsub.f32 0.0, %v1012
    %v1079 = vsub.f32 0.0, %v1014
    %v1080 = vmul.f32 %v1016, 1.442695
    %v1081 = vpow.pop %v1080
    %v1082 = vmul.f32 %v1017, 1.442695
    %v1083 = vpow.pop %v1082
    %v1084 = vmul.f32 %v1018, 1.442695
    %v1085 = vpow.pop %v1084
    %v1086 = vmul.f32 %v1019, 1.442695
    %v1087 = vpow.pop %v1086
    %v1088 = vmul.f32 %v1020, 1.442695
    %v1089 = vpow.pop %v1088
    %v1090 = vmul.f32 %v1021, 1.442695
    %v1091 = vpow.pop %v1090
    %v1092 = vmul.f32 %v1022, 1.442695
    %v1093 = vpow.pop %v1092
    %v1094 = vmul.f32 %v1023, 1.442695
    %v1095 = vpow.pop %v1094
    %v1096 = vmul.f32 %v1024, 1.442695
    %v1097 = vpow.pop %v1096
    %v1098 = vmul.f32 %v1025, 1.442695
    %v1099 = vpow.pop %v1098
    %v1100 = vmul.f32 %v1026, 1.442695
    %v1101 = vpow.pop %v1100
    %v1102 = vmul.f32 %v1027, 1.442695
    %v1103 = vpow.pop %v1102
    %v1104 = vmul.f32 %v1028, 1.442695
    %v1105 = vpow.pop %v1104
    %v1106 = vmul.f32 %v1029, 1.442695
    %v1107 = vpow.pop %v1106
    %v1108 = vmul.f32 %v1030, 1.442695
    %v1109 = vpow.pop %v1108
    %v1110 = vmul.f32 %v1031, 1.442695
    %v1111 = vpow.pop %v1110
    %v1112 = vmul.f32 %v1032, 1.442695
    %v1113 = vpow.pop %v1112
    %v1114 = vmul.f32 %v1033, 1.442695
    %v1115 = vpow.pop %v1114
    %v1116 = vmul.f32 %v1034, 1.442695
    %v1117 = vpow.pop %v1116
    %v1118 = vmul.f32 %v1035, 1.442695
    %v1119 = vpow.pop %v1118
    %v1120 = vmul.f32 %v1036, 1.442695
    %v1121 = vpow.pop %v1120
    %v1122 = vmul.f32 %v1037, 1.442695
    %v1123 = vpow.pop %v1122
    %v1124 = vmul.f32 %v1038, 1.442695
    %v1125 = vpow.pop %v1124
    %v1126 = vmul.f32 %v1039, 1.442695
    %v1127 = vpow.pop %v1126
    %v1128 = vmul.f32 %v1040, 1.442695
    %v1129 = vpow.pop %v1128
    %v1130 = vmul.f32 %v1041, 1.442695
    %v1131 = vpow.pop %v1130
    %v1132 = vmul.f32 %v1042, 1.442695
    %v1133 = vpow.pop %v1132
    %v1134 = vmul.f32 %v1043, 1.442695
    %v1135 = vpow.pop %v1134
    %v1136 = vmul.f32 %v1044, 1.442695
    %v1137 = vpow.pop %v1136
    %v1138 = vmul.f32 %v1045, 1.442695
    %v1139 = vpow.pop %v1138
    %v1140 = vmul.f32 %v1046, 1.442695
    %v1141 = vpow.pop %v1140
    %v1142 = vmul.f32 %v1047, 1.442695
    %v1143 = vpow.pop %v1142
    %v1144 = vmul.f32 %v1048, 1.442695
    %v1145 = vpow.pop %v1144
    %v1146 = vmul.f32 %v1049, 1.442695
    %v1147 = vpow.pop %v1146
    %v1148 = vmul.f32 %v1050, 1.442695
    %v1149 = vpow.pop %v1148
    %v1150 = vmul.f32 %v1051, 1.442695
    %v1151 = vpow.pop %v1150
    %v1152 = vmul.f32 %v1052, 1.442695
    %v1153 = vpow.pop %v1152
    %v1154 = vmul.f32 %v1053, 1.442695
    %v1155 = vpow.pop %v1154
    %v1156 = vmul.f32 %v1054, 1.442695
    %v1157 = vpow.pop %v1156
    %v1158 = vmul.f32 %v1055, 1.442695
    %v1159 = vpow.pop %v1158
    %v1160 = vmul.f32 %v1056, 1.442695
    %v1161 = vpow.pop %v1160
    %v1162 = vmul.f32 %v1057, 1.442695
    %v1163 = vpow.pop %v1162
    %v1164 = vmul.f32 %v1058, 1.442695
    %v1165 = vpow.pop %v1164
    %v1166 = vmul.f32 %v1059, 1.442695
    %v1167 = vpow.pop %v1166
    %v1168 = vmul.f32 %v1060, 1.442695
    %v1169 = vpow.pop %v1168
    %v1170 = vmul.f32 %v1061, 1.442695
    %v1171 = vpow.pop %v1170
    %v1172 = vmul.f32 %v1062, 1.442695
    %v1173 = vpow.pop %v1172
    %v1174 = vmul.f32 %v1063, 1.442695
    %v1175 = vpow.pop %v1174
    %v1176 = vmul.f32 %v1064, 1.442695
    %v1177 = vpow.pop %v1176
    %v1178 = vmul.f32 %v1065, 1.442695
    %v1179 = vpow.pop %v1178
    %v1180 = vmul.f32 %v1066, 1.442695
    %v1181 = vpow.pop %v1180
    %v1182 = vmul.f32 %v1067, 1.442695
    %v1183 = vpow.pop %v1182
    %v1184 = vmul.f32 %v1068, 1.442695
    %v1185 = vpow.pop %v1184
    %v1186 = vmul.f32 %v1069, 1.442695
    %v1187 = vpow.pop %v1186
    %v1188 = vmul.f32 %v1070, 1.442695
    %v1189 = vpow.pop %v1188
    %v1190 = vmul.f32 %v1071, 1.442695
    %v1191 = vpow.pop %v1190
    %v1192 = vmul.f32 %v1072, 1.442695
    %v1193 = vpow.pop %v1192
    %v1194 = vmul.f32 %v1073, 1.442695
    %v1195 = vpow.pop %v1194
    %v1196 = vmul.f32 %v1074, 1.442695
    %v1197 = vpow.pop %v1196
    %v1198 = vmul.f32 %v1075, 1.442695
    %v1199 = vpow.pop %v1198
    %v1200 = vmul.f32 %v1076, 1.442695
    %v1201 = vpow.pop %v1200
    %v1202 = vmul.f32 %v1077, 1.442695
    %v1203 = vpow.pop %v1202
    %v1204 = vmul.f32 %v1078, 1.442695
    %v1205 = vpow.pop %v1204
    %v1206 = vmul.f32 %v1079, 1.442695
    %v1207 = vpow.pop %v1206
    %v1208 = vadd.f32 %v1081, 1.0
    %v1209 = vadd.f32 %v1083, 1.0
    %v1210 = vadd.f32 %v1085, 1.0
    %v1211 = vadd.f32 %v1087, 1.0
    %v1212 = vadd.f32 %v1089, 1.0
    %v1213 = vadd.f32 %v1091, 1.0
    %v1214 = vadd.f32 %v1093, 1.0
    %v1215 = vadd.f32 %v1095, 1.0
    %v1216 = vadd.f32 %v1097, 1.0
    %v1217 = vadd.f32 %v1099, 1.0
    %v1218 = vadd.f32 %v1101, 1.0
    %v1219 = vadd.f32 %v1103, 1.0
    %v1220 = vadd.f32 %v1105, 1.0
    %v1221 = vadd.f32 %v1107, 1.0
    %v1222 = vadd.f32 %v1109, 1.0
    %v1223 = vadd.f32 %v1111, 1.0
    %v1224 = vadd.f32 %v1113, 1.0
    %v1225 = vadd.f32 %v1115, 1.0
    %v1226 = vadd.f32 %v1117, 1.0
    %v1227 = vadd.f32 %v1119, 1.0
    %v1228 = vadd.f32 %v1121, 1.0
    %v1229 = vadd.f32 %v1123, 1.0
    %v1230 = vadd.f32 %v1125, 1.0
    %v1231 = vadd.f32 %v1127, 1.0
    %v1232 = vadd.f32 %v1129, 1.0
    %v1233 = vadd.f32 %v1131, 1.0
    %v1234 = vadd.f32 %v1133, 1.0
    %v1235 = vadd.f32 %v1135, 1.0
    %v1236 = vadd.f32 %v1137, 1.0
    %v1237 = vadd.f32 %v1139, 1.0
    %v1238 = vadd.f32 %v1141, 1.0
    %v1239 = vadd.f32 %v1143, 1.0
    %v1240 = vadd.f32 %v1145, 1.0
    %v1241 = vadd.f32 %v1147, 1.0
    %v1242 = vadd.f32 %v1149, 1.0
    %v1243 = vadd.f32 %v1151, 1.0
    %v1244 = vadd.f32 %v1153, 1.0
    %v1245 = vadd.f32 %v1155, 1.0
    %v1246 = vadd.f32 %v1157, 1.0
    %v1247 = vadd.f32 %v1159, 1.0
    %v1248 = vadd.f32 %v1161, 1.0
    %v1249 = vadd.f32 %v1163, 1.0
    %v1250 = vadd.f32 %v1165, 1.0
    %v1251 = vadd.f32 %v1167, 1.0
    %v1252 = vadd.f32 %v1169, 1.0
    %v1253 = vadd.f32 %v1171, 1.0
    %v1254 = vadd.f32 %v1173, 1.0
    %v1255 = vadd.f32 %v1175, 1.0
    %v1256 = vadd.f32 %v1177, 1.0
    %v1257 = vadd.f32 %v1179, 1.0
    %v1258 = vadd.f32 %v1181, 1.0
    %v1259 = vadd.f32 %v1183, 1.0
    %v1260 = vadd.f32 %v1185, 1.0
    %v1261 = vadd.f32 %v1187, 1.0
    %v1262 = vadd.f32 %v1189, 1.0
    %v1263 = vadd.f32 %v1191, 1.0
    %v1264 = vadd.f32 %v1193, 1.0
    %v1265 = vadd.f32 %v1195, 1.0
    %v1266 = vadd.f32 %v1197, 1.0
    %v1267 = vadd.f32 %v1199, 1.0
    %v1268 = vadd.f32 %v1201, 1.0
    %v1269 = vadd.f32 %v1203, 1.0
    %v1270 = vadd.f32 %v1205, 1.0
    %v1271 = vadd.f32 %v1207, 1.0
    %v1272 = vrcp.pop %v1208
    %v1273 = vrcp.pop %v1209
    %v1274 = vrcp.pop %v1210
    %v1275 = vrcp.pop %v1211
    %v1276 = vrcp.pop %v1212
    %v1277 = vrcp.pop %v1213
    %v1278 = vrcp.pop %v1214
    %v1279 = vrcp.pop %v1215
    %v1280 = vrcp.pop %v1216
    %v1281 = vrcp.pop %v1217
    %v1282 = vrcp.pop %v1218
    %v1283 = vrcp.pop %v1219
    %v1284 = vrcp.pop %v1220
    %v1285 = vrcp.pop %v1221
    %v1286 = vrcp.pop %v1222
    %v1287 = vrcp.pop %v1223
    %v1288 = vrcp.pop %v1224
    %v1289 = vrcp.pop %v1225
    %v1290 = vrcp.pop %v1226
    %v1291 = vrcp.pop %v1227
    %v1292 = vrcp.pop %v1228
    %v1293 = vrcp.pop %v1229
    %v1294 = vrcp.pop %v1230
    %v1295 = vrcp.pop %v1231
    %v1296 = vrcp.pop %v1232
    %v1297 = vrcp.pop %v1233
    %v1298 = vrcp.pop %v1234
    %v1299 = vrcp.pop %v1235
    %v1300 = vrcp.pop %v1236
    %v1301 = vrcp.pop %v1237
    %v1302 = vrcp.pop %v1238
    %v1303 = vrcp.pop %v1239
    %v1304 = vrcp.pop %v1240
    %v1305 = vrcp.pop %v1241
    %v1306 = vrcp.pop %v1242
    %v1307 = vrcp.pop %v1243
    %v1308 = vrcp.pop %v1244
    %v1309 = vrcp.pop %v1245
    %v1310 = vrcp.pop %v1246
    %v1311 = vrcp.pop %v1247
    %v1312 = vrcp.pop %v1248
    %v1313 = vrcp.pop %v1249
    %v1314 = vrcp.pop %v1250
    %v1315 = vrcp.pop %v1251
    %v1316 = vrcp.pop %v1252
    %v1317 = vrcp.pop %v1253
    %v1318 = vrcp.pop %v1254
    %v1319 = vrcp.pop %v1255
    %v1320 = vrcp.pop %v1256
    %v1321 = vrcp.pop %v1257
    %v1322 = vrcp.pop %v1258
    %v1323 = vrcp.pop %v1259
    %v1324 = vrcp.pop %v1260
    %v1325 = vrcp.pop %v1261
    %v1326 = vrcp.pop %v1262
    %v1327 = vrcp.pop %v1263
    %v1328 = vrcp.pop %v1264
    %v1329 = vrcp.pop %v1265
    %v1330 = vrcp.pop %v1266
    %v1331 = vrcp.pop %v1267
    %v1332 = vrcp.pop %v1268
    %v1333 = vrcp.pop %v1269
    %v1334 = vrcp.pop %v1270
    %v1335 = vrcp.pop %v1271
    %v1336 = vmul.f32 %v826, %v1272
    %v1337 = vmul.f32 %v828, %v1273
    %v1338 = vmul.f32 %v832, %v1274
    %v1339 = vmul.f32 %v834, %v1275
    %v1340 = vmul.f32 %v838, %v1276
    %v1341 = vmul.f32 %v840, %v1277
    %v1342 = vmul.f32 %v844, %v1278
    %v1343 = vmul.f32 %v846, %v1279
    %v1344 = vmul.f32 %v850, %v1280
    %v1345 = vmul.f32 %v852, %v1281
    %v1346 = vmul.f32 %v856, %v1282
    %v1347 = vmul.f32 %v858, %v1283
    %v1348 = vmul.f32 %v862, %v1284
    %v1349 = vmul.f32 %v864, %v1285
    %v1350 = vmul.f32 %v868, %v1286
    %v1351 = vmul.f32 %v870, %v1287
    %v1352 = vmul.f32 %v874, %v1288
    %v1353 = vmul.f32 %v876, %v1289
    %v1354 = vmul.f32 %v880, %v1290
    %v1355 = vmul.f32 %v882, %v1291
    %v1356 = vmul.f32 %v886, %v1292
    %v1357 = vmul.f32 %v888, %v1293
    %v1358 = vmul.f32 %v892, %v1294
    %v1359 = vmul.f32 %v894, %v1295
    %v1360 = vmul.f32 %v898, %v1296
    %v1361 = vmul.f32 %v900, %v1297
    %v1362 = vmul.f32 %v904, %v1298
    %v1363 = vmul.f32 %v906, %v1299
    %v1364 = vmul.f32 %v910, %v1300
    %v1365 = vmul.f32 %v912, %v1301
    %v1366 = vmul.f32 %v916, %v1302
    %v1367 = vmul.f32 %v918, %v1303
    %v1368 = vmul.f32 %v922, %v1304
    %v1369 = vmul.f32 %v924, %v1305
    %v1370 = vmul.f32 %v928, %v1306
    %v1371 = vmul.f32 %v930, %v1307
    %v1372 = vmul.f32 %v934, %v1308
    %v1373 = vmul.f32 %v936, %v1309
    %v1374 = vmul.f32 %v940, %v1310
    %v1375 = vmul.f32 %v942, %v1311
    %v1376 = vmul.f32 %v946, %v1312
    %v1377 = vmul.f32 %v948, %v1313
    %v1378 = vmul.f32 %v952, %v1314
    %v1379 = vmul.f32 %v954, %v1315
    %v1380 = vmul.f32 %v958, %v1316
    %v1381 = vmul.f32 %v960, %v1317
    %v1382 = vmul.f32 %v964, %v1318
    %v1383 = vmul.f32 %v966, %v1319
    %v1384 = vmul.f32 %v970, %v1320
    %v1385 = vmul.f32 %v972, %v1321
    %v1386 = vmul.f32 %v976, %v1322
    %v1387 = vmul.f32 %v978, %v1323
    %v1388 = vmul.f32 %v982, %v1324
    %v1389 = vmul.f32 %v984, %v1325
    %v1390 = vmul.f32 %v988, %v1326
    %v1391 = vmul.f32 %v990, %v1327
    %v1392 = vmul.f32 %v994, %v1328
    %v1393 = vmul.f32 %v996, %v1329
    %v1394 = vmul.f32 %v1000, %v1330
    %v1395 = vmul.f32 %v1002, %v1331
    %v1396 = vmul.f32 %v1006, %v1332
    %v1397 = vmul.f32 %v1008, %v1333
    %v1398 = vmul.f32 %v1012, %v1334
    %v1399 = vmul.f32 %v1014, %v1335
    %s1400 = scalar_lea.vmem %s6, 1
    %v1401 = vld [vmem:[%s1400] ss:$8 sm:$0x3]
    %s1402 = scalar_lea.vmem %s6, 2
    %v1403 = vld [vmem:[%s1402] ss:$8 sm:$0x3]
    %v1404 = vmul.f32 %v1336, %v124
    %v1405 = vmul.f32 %v1337, %v124
    %v1406 = vmul.f32 %v1338, %v125
    %v1407 = vmul.f32 %v1339, %v125
    %v1408 = vmul.f32 %v1340, %v126
    %v1409 = vmul.f32 %v1341, %v126
    %v1410 = vmul.f32 %v1342, %v127
    %v1411 = vmul.f32 %v1343, %v127
    %v1412 = vmul.f32 %v1344, %v128
    %v1413 = vmul.f32 %v1345, %v128
    %v1414 = vmul.f32 %v1346, %v129
    %v1415 = vmul.f32 %v1347, %v129
    %v1416 = vmul.f32 %v1348, %v130
    %v1417 = vmul.f32 %v1349, %v130
    %v1418 = vmul.f32 %v1350, %v131
    %v1419 = vmul.f32 %v1351, %v131
    %v1420 = vmul.f32 %v1352, %v132
    %v1421 = vmul.f32 %v1353, %v132
    %v1422 = vmul.f32 %v1354, %v133
    %v1423 = vmul.f32 %v1355, %v133
    %v1424 = vmul.f32 %v1356, %v134
    %v1425 = vmul.f32 %v1357, %v134
    %v1426 = vmul.f32 %v1358, %v135
    %v1427 = vmul.f32 %v1359, %v135
    %v1428 = vmul.f32 %v1360, %v136
    %v1429 = vmul.f32 %v1361, %v136
    %v1430 = vmul.f32 %v1362, %v137
    %v1431 = vmul.f32 %v1363, %v137
    %v1432 = vmul.f32 %v1364, %v138
    %v1433 = vmul.f32 %v1365, %v138
    %v1434 = vmul.f32 %v1366, %v139
    %v1435 = vmul.f32 %v1367, %v139
    %v1436 = vmul.f32 %v1368, %v140
    %v1437 = vmul.f32 %v1369, %v140
    %v1438 = vmul.f32 %v1370, %v141
    %v1439 = vmul.f32 %v1371, %v141
    %v1440 = vmul.f32 %v1372, %v142
    %v1441 = vmul.f32 %v1373, %v142
    %v1442 = vmul.f32 %v1374, %v143
    %v1443 = vmul.f32 %v1375, %v143
    %v1444 = vmul.f32 %v1376, %v144
    %v1445 = vmul.f32 %v1377, %v144
    %v1446 = vmul.f32 %v1378, %v145
    %v1447 = vmul.f32 %v1379, %v145
    %v1448 = vmul.f32 %v1380, %v146
    %v1449 = vmul.f32 %v1381, %v146
    %v1450 = vmul.f32 %v1382, %v147
    %v1451 = vmul.f32 %v1383, %v147
    %v1452 = vmul.f32 %v1384, %v148
    %v1453 = vmul.f32 %v1385, %v148
    %v1454 = vmul.f32 %v1386, %v149
    %v1455 = vmul.f32 %v1387, %v149
    %v1456 = vmul.f32 %v1388, %v150
    %v1457 = vmul.f32 %v1389, %v150
    %v1458 = vmul.f32 %v1390, %v151
    %v1459 = vmul.f32 %v1391, %v151
    %v1460 = vmul.f32 %v1392, %v152
    %v1461 = vmul.f32 %v1393, %v152
    %v1462 = vmul.f32 %v1394, %v153
    %v1463 = vmul.f32 %v1395, %v153
    %v1464 = vmul.f32 %v1396, %v154
    %v1465 = vmul.f32 %v1397, %v154
    %v1466 = vmul.f32 %v1398, %v155
    %v1467 = vmul.f32 %v1399, %v155
    %v1468 = vadd.f32 %v1404, %v1406
    %v1469 = vadd.f32 %v1468, %v1408
    %v1470 = vadd.f32 %v1469, %v1410
    %v1471 = vadd.f32 %v1470, %v1412
    %v1472 = vadd.f32 %v1471, %v1414
    %v1473 = vadd.f32 %v1472, %v1416
    %v1474 = vadd.f32 %v1473, %v1418
    %v1475 = vadd.f32 %v1474, %v1420
    %v1476 = vadd.f32 %v1475, %v1422
    %v1477 = vadd.f32 %v1476, %v1424
    %v1478 = vadd.f32 %v1477, %v1426
    %v1479 = vadd.f32 %v1478, %v1428
    %v1480 = vadd.f32 %v1479, %v1430
    %v1481 = vadd.f32 %v1480, %v1432
    %v1482 = vadd.f32 %v1481, %v1434
    %v1483 = vadd.f32 %v1482, %v1436
    %v1484 = vadd.f32 %v1483, %v1438
    %v1485 = vadd.f32 %v1484, %v1440
    %v1486 = vadd.f32 %v1485, %v1442
    %v1487 = vadd.f32 %v1486, %v1444
    %v1488 = vadd.f32 %v1487, %v1446
    %v1489 = vadd.f32 %v1488, %v1448
    %v1490 = vadd.f32 %v1489, %v1450
    %v1491 = vadd.f32 %v1490, %v1452
    %v1492 = vadd.f32 %v1491, %v1454
    %v1493 = vadd.f32 %v1492, %v1456
    %v1494 = vadd.f32 %v1493, %v1458
    %v1495 = vadd.f32 %v1494, %v1460
    %v1496 = vadd.f32 %v1495, %v1462
    %v1497 = vadd.f32 %v1496, %v1464
    %v1498 = vadd.f32 %v1497, %v1466
    %v1499 = vrot.slane %v1498, 4
    %v1500 = vadd.f32 %v1498, %v1499
    %v1501 = vrot.slane %v1500, 2
    %v1502 = vadd.f32 %v1500, %v1501
    %v1503 = vrot.slane %v1502, 1
    %v1504 = vadd.f32 %v1502, %v1503
    %v1505 = vadd.f32 %v1405, %v1407
    %v1506 = vadd.f32 %v1505, %v1409
    %v1507 = vadd.f32 %v1506, %v1411
    %v1508 = vadd.f32 %v1507, %v1413
    %v1509 = vadd.f32 %v1508, %v1415
    %v1510 = vadd.f32 %v1509, %v1417
    %v1511 = vadd.f32 %v1510, %v1419
    %v1512 = vadd.f32 %v1511, %v1421
    %v1513 = vadd.f32 %v1512, %v1423
    %v1514 = vadd.f32 %v1513, %v1425
    %v1515 = vadd.f32 %v1514, %v1427
    %v1516 = vadd.f32 %v1515, %v1429
    %v1517 = vadd.f32 %v1516, %v1431
    %v1518 = vadd.f32 %v1517, %v1433
    %v1519 = vadd.f32 %v1518, %v1435
    %v1520 = vadd.f32 %v1519, %v1437
    %v1521 = vadd.f32 %v1520, %v1439
    %v1522 = vadd.f32 %v1521, %v1441
    %v1523 = vadd.f32 %v1522, %v1443
    %v1524 = vadd.f32 %v1523, %v1445
    %v1525 = vadd.f32 %v1524, %v1447
    %v1526 = vadd.f32 %v1525, %v1449
    %v1527 = vadd.f32 %v1526, %v1451
    %v1528 = vadd.f32 %v1527, %v1453
    %v1529 = vadd.f32 %v1528, %v1455
    %v1530 = vadd.f32 %v1529, %v1457
    %v1531 = vadd.f32 %v1530, %v1459
    %v1532 = vadd.f32 %v1531, %v1461
    %v1533 = vadd.f32 %v1532, %v1463
    %v1534 = vadd.f32 %v1533, %v1465
    %v1535 = vadd.f32 %v1534, %v1467
    %v1536 = vrot.slane %v1535, 4
    %v1537 = vadd.f32 %v1535, %v1536
    %v1538 = vrot.slane %v1537, 2
    %v1539 = vadd.f32 %v1537, %v1538
    %v1540 = vrot.slane %v1539, 1
    %v1541 = vadd.f32 %v1539, %v1540
    %v1542 = vmul.f32 %v1504, 0.005
    %v1543 = vmul.f32 %v1541, 0.005
    %v1544 = vsub.f32 %v1336, %v1542
    %v1545 = vsub.f32 %v1337, %v1543
    %v1546 = vsub.f32 %v1338, %v1542
    %v1547 = vsub.f32 %v1339, %v1543
    %v1548 = vsub.f32 %v1340, %v1542
    %v1549 = vsub.f32 %v1341, %v1543
    %v1550 = vsub.f32 %v1342, %v1542
    %v1551 = vsub.f32 %v1343, %v1543
    %v1552 = vsub.f32 %v1344, %v1542
    %v1553 = vsub.f32 %v1345, %v1543
    %v1554 = vsub.f32 %v1346, %v1542
    %v1555 = vsub.f32 %v1347, %v1543
    %v1556 = vsub.f32 %v1348, %v1542
    %v1557 = vsub.f32 %v1349, %v1543
    %v1558 = vsub.f32 %v1350, %v1542
    %v1559 = vsub.f32 %v1351, %v1543
    %v1560 = vsub.f32 %v1352, %v1542
    %v1561 = vsub.f32 %v1353, %v1543
    %v1562 = vsub.f32 %v1354, %v1542
    %v1563 = vsub.f32 %v1355, %v1543
    %v1564 = vsub.f32 %v1356, %v1542
    %v1565 = vsub.f32 %v1357, %v1543
    %v1566 = vsub.f32 %v1358, %v1542
    %v1567 = vsub.f32 %v1359, %v1543
    %v1568 = vsub.f32 %v1360, %v1542
    %v1569 = vsub.f32 %v1361, %v1543
    %v1570 = vsub.f32 %v1362, %v1542
    %v1571 = vsub.f32 %v1363, %v1543
    %v1572 = vsub.f32 %v1364, %v1542
    %v1573 = vsub.f32 %v1365, %v1543
    %v1574 = vsub.f32 %v1366, %v1542
    %v1575 = vsub.f32 %v1367, %v1543
    %v1576 = vsub.f32 %v1368, %v1542
    %v1577 = vsub.f32 %v1369, %v1543
    %v1578 = vsub.f32 %v1370, %v1542
    %v1579 = vsub.f32 %v1371, %v1543
    %v1580 = vsub.f32 %v1372, %v1542
    %v1581 = vsub.f32 %v1373, %v1543
    %v1582 = vsub.f32 %v1374, %v1542
    %v1583 = vsub.f32 %v1375, %v1543
    %v1584 = vsub.f32 %v1376, %v1542
    %v1585 = vsub.f32 %v1377, %v1543
    %v1586 = vsub.f32 %v1378, %v1542
    %v1587 = vsub.f32 %v1379, %v1543
    %v1588 = vsub.f32 %v1380, %v1542
    %v1589 = vsub.f32 %v1381, %v1543
    %v1590 = vsub.f32 %v1382, %v1542
    %v1591 = vsub.f32 %v1383, %v1543
    %v1592 = vsub.f32 %v1384, %v1542
    %v1593 = vsub.f32 %v1385, %v1543
    %v1594 = vsub.f32 %v1386, %v1542
    %v1595 = vsub.f32 %v1387, %v1543
    %v1596 = vsub.f32 %v1388, %v1542
    %v1597 = vsub.f32 %v1389, %v1543
    %v1598 = vsub.f32 %v1390, %v1542
    %v1599 = vsub.f32 %v1391, %v1543
    %v1600 = vsub.f32 %v1392, %v1542
    %v1601 = vsub.f32 %v1393, %v1543
    %v1602 = vsub.f32 %v1394, %v1542
    %v1603 = vsub.f32 %v1395, %v1543
    %v1604 = vsub.f32 %v1396, %v1542
    %v1605 = vsub.f32 %v1397, %v1543
    %v1606 = vsub.f32 %v1398, %v1542
    %v1607 = vsub.f32 %v1399, %v1543
    %v1608 = vmul.f32 %v1544, %v124
    %v1609 = vmul.f32 %v1545, %v124
    %v1610 = vmul.f32 %v1546, %v125
    %v1611 = vmul.f32 %v1547, %v125
    %v1612 = vmul.f32 %v1548, %v126
    %v1613 = vmul.f32 %v1549, %v126
    %v1614 = vmul.f32 %v1550, %v127
    %v1615 = vmul.f32 %v1551, %v127
    %v1616 = vmul.f32 %v1552, %v128
    %v1617 = vmul.f32 %v1553, %v128
    %v1618 = vmul.f32 %v1554, %v129
    %v1619 = vmul.f32 %v1555, %v129
    %v1620 = vmul.f32 %v1556, %v130
    %v1621 = vmul.f32 %v1557, %v130
    %v1622 = vmul.f32 %v1558, %v131
    %v1623 = vmul.f32 %v1559, %v131
    %v1624 = vmul.f32 %v1560, %v132
    %v1625 = vmul.f32 %v1561, %v132
    %v1626 = vmul.f32 %v1562, %v133
    %v1627 = vmul.f32 %v1563, %v133
    %v1628 = vmul.f32 %v1564, %v134
    %v1629 = vmul.f32 %v1565, %v134
    %v1630 = vmul.f32 %v1566, %v135
    %v1631 = vmul.f32 %v1567, %v135
    %v1632 = vmul.f32 %v1568, %v136
    %v1633 = vmul.f32 %v1569, %v136
    %v1634 = vmul.f32 %v1570, %v137
    %v1635 = vmul.f32 %v1571, %v137
    %v1636 = vmul.f32 %v1572, %v138
    %v1637 = vmul.f32 %v1573, %v138
    %v1638 = vmul.f32 %v1574, %v139
    %v1639 = vmul.f32 %v1575, %v139
    %v1640 = vmul.f32 %v1576, %v140
    %v1641 = vmul.f32 %v1577, %v140
    %v1642 = vmul.f32 %v1578, %v141
    %v1643 = vmul.f32 %v1579, %v141
    %v1644 = vmul.f32 %v1580, %v142
    %v1645 = vmul.f32 %v1581, %v142
    %v1646 = vmul.f32 %v1582, %v143
    %v1647 = vmul.f32 %v1583, %v143
    %v1648 = vmul.f32 %v1584, %v144
    %v1649 = vmul.f32 %v1585, %v144
    %v1650 = vmul.f32 %v1586, %v145
    %v1651 = vmul.f32 %v1587, %v145
    %v1652 = vmul.f32 %v1588, %v146
    %v1653 = vmul.f32 %v1589, %v146
    %v1654 = vmul.f32 %v1590, %v147
    %v1655 = vmul.f32 %v1591, %v147
    %v1656 = vmul.f32 %v1592, %v148
    %v1657 = vmul.f32 %v1593, %v148
    %v1658 = vmul.f32 %v1594, %v149
    %v1659 = vmul.f32 %v1595, %v149
    %v1660 = vmul.f32 %v1596, %v150
    %v1661 = vmul.f32 %v1597, %v150
    %v1662 = vmul.f32 %v1598, %v151
    %v1663 = vmul.f32 %v1599, %v151
    %v1664 = vmul.f32 %v1600, %v152
    %v1665 = vmul.f32 %v1601, %v152
    %v1666 = vmul.f32 %v1602, %v153
    %v1667 = vmul.f32 %v1603, %v153
    %v1668 = vmul.f32 %v1604, %v154
    %v1669 = vmul.f32 %v1605, %v154
    %v1670 = vmul.f32 %v1606, %v155
    %v1671 = vmul.f32 %v1607, %v155
    %v1672 = vmul.f32 %v1608, %v1608
    %v1673 = vmul.f32 %v1609, %v1609
    %v1674 = vmul.f32 %v1610, %v1610
    %v1675 = vmul.f32 %v1611, %v1611
    %v1676 = vmul.f32 %v1612, %v1612
    %v1677 = vmul.f32 %v1613, %v1613
    %v1678 = vmul.f32 %v1614, %v1614
    %v1679 = vmul.f32 %v1615, %v1615
    %v1680 = vmul.f32 %v1616, %v1616
    %v1681 = vmul.f32 %v1617, %v1617
    %v1682 = vmul.f32 %v1618, %v1618
    %v1683 = vmul.f32 %v1619, %v1619
    %v1684 = vmul.f32 %v1620, %v1620
    %v1685 = vmul.f32 %v1621, %v1621
    %v1686 = vmul.f32 %v1622, %v1622
    %v1687 = vmul.f32 %v1623, %v1623
    %v1688 = vmul.f32 %v1624, %v1624
    %v1689 = vmul.f32 %v1625, %v1625
    %v1690 = vmul.f32 %v1626, %v1626
    %v1691 = vmul.f32 %v1627, %v1627
    %v1692 = vmul.f32 %v1628, %v1628
    %v1693 = vmul.f32 %v1629, %v1629
    %v1694 = vmul.f32 %v1630, %v1630
    %v1695 = vmul.f32 %v1631, %v1631
    %v1696 = vmul.f32 %v1632, %v1632
    %v1697 = vmul.f32 %v1633, %v1633
    %v1698 = vmul.f32 %v1634, %v1634
    %v1699 = vmul.f32 %v1635, %v1635
    %v1700 = vmul.f32 %v1636, %v1636
    %v1701 = vmul.f32 %v1637, %v1637
    %v1702 = vmul.f32 %v1638, %v1638
    %v1703 = vmul.f32 %v1639, %v1639
    %v1704 = vmul.f32 %v1640, %v1640
    %v1705 = vmul.f32 %v1641, %v1641
    %v1706 = vmul.f32 %v1642, %v1642
    %v1707 = vmul.f32 %v1643, %v1643
    %v1708 = vmul.f32 %v1644, %v1644
    %v1709 = vmul.f32 %v1645, %v1645
    %v1710 = vmul.f32 %v1646, %v1646
    %v1711 = vmul.f32 %v1647, %v1647
    %v1712 = vmul.f32 %v1648, %v1648
    %v1713 = vmul.f32 %v1649, %v1649
    %v1714 = vmul.f32 %v1650, %v1650
    %v1715 = vmul.f32 %v1651, %v1651
    %v1716 = vmul.f32 %v1652, %v1652
    %v1717 = vmul.f32 %v1653, %v1653
    %v1718 = vmul.f32 %v1654, %v1654
    %v1719 = vmul.f32 %v1655, %v1655
    %v1720 = vmul.f32 %v1656, %v1656
    %v1721 = vmul.f32 %v1657, %v1657
    %v1722 = vmul.f32 %v1658, %v1658
    %v1723 = vmul.f32 %v1659, %v1659
    %v1724 = vmul.f32 %v1660, %v1660
    %v1725 = vmul.f32 %v1661, %v1661
    %v1726 = vmul.f32 %v1662, %v1662
    %v1727 = vmul.f32 %v1663, %v1663
    %v1728 = vmul.f32 %v1664, %v1664
    %v1729 = vmul.f32 %v1665, %v1665
    %v1730 = vmul.f32 %v1666, %v1666
    %v1731 = vmul.f32 %v1667, %v1667
    %v1732 = vmul.f32 %v1668, %v1668
    %v1733 = vmul.f32 %v1669, %v1669
    %v1734 = vmul.f32 %v1670, %v1670
    %v1735 = vmul.f32 %v1671, %v1671
    %v1736 = vadd.f32 %v1672, %v1674
    %v1737 = vadd.f32 %v1736, %v1676
    %v1738 = vadd.f32 %v1737, %v1678
    %v1739 = vadd.f32 %v1738, %v1680
    %v1740 = vadd.f32 %v1739, %v1682
    %v1741 = vadd.f32 %v1740, %v1684
    %v1742 = vadd.f32 %v1741, %v1686
    %v1743 = vadd.f32 %v1742, %v1688
    %v1744 = vadd.f32 %v1743, %v1690
    %v1745 = vadd.f32 %v1744, %v1692
    %v1746 = vadd.f32 %v1745, %v1694
    %v1747 = vadd.f32 %v1746, %v1696
    %v1748 = vadd.f32 %v1747, %v1698
    %v1749 = vadd.f32 %v1748, %v1700
    %v1750 = vadd.f32 %v1749, %v1702
    %v1751 = vadd.f32 %v1750, %v1704
    %v1752 = vadd.f32 %v1751, %v1706
    %v1753 = vadd.f32 %v1752, %v1708
    %v1754 = vadd.f32 %v1753, %v1710
    %v1755 = vadd.f32 %v1754, %v1712
    %v1756 = vadd.f32 %v1755, %v1714
    %v1757 = vadd.f32 %v1756, %v1716
    %v1758 = vadd.f32 %v1757, %v1718
    %v1759 = vadd.f32 %v1758, %v1720
    %v1760 = vadd.f32 %v1759, %v1722
    %v1761 = vadd.f32 %v1760, %v1724
    %v1762 = vadd.f32 %v1761, %v1726
    %v1763 = vadd.f32 %v1762, %v1728
    %v1764 = vadd.f32 %v1763, %v1730
    %v1765 = vadd.f32 %v1764, %v1732
    %v1766 = vadd.f32 %v1765, %v1734
    %v1767 = vrot.slane %v1766, 4
    %v1768 = vadd.f32 %v1766, %v1767
    %v1769 = vrot.slane %v1768, 2
    %v1770 = vadd.f32 %v1768, %v1769
    %v1771 = vrot.slane %v1770, 1
    %v1772 = vadd.f32 %v1770, %v1771
    %v1773 = vadd.f32 %v1673, %v1675
    %v1774 = vadd.f32 %v1773, %v1677
    %v1775 = vadd.f32 %v1774, %v1679
    %v1776 = vadd.f32 %v1775, %v1681
    %v1777 = vadd.f32 %v1776, %v1683
    %v1778 = vadd.f32 %v1777, %v1685
    %v1779 = vadd.f32 %v1778, %v1687
    %v1780 = vadd.f32 %v1779, %v1689
    %v1781 = vadd.f32 %v1780, %v1691
    %v1782 = vadd.f32 %v1781, %v1693
    %v1783 = vadd.f32 %v1782, %v1695
    %v1784 = vadd.f32 %v1783, %v1697
    %v1785 = vadd.f32 %v1784, %v1699
    %v1786 = vadd.f32 %v1785, %v1701
    %v1787 = vadd.f32 %v1786, %v1703
    %v1788 = vadd.f32 %v1787, %v1705
    %v1789 = vadd.f32 %v1788, %v1707
    %v1790 = vadd.f32 %v1789, %v1709
    %v1791 = vadd.f32 %v1790, %v1711
    %v1792 = vadd.f32 %v1791, %v1713
    %v1793 = vadd.f32 %v1792, %v1715
    %v1794 = vadd.f32 %v1793, %v1717
    %v1795 = vadd.f32 %v1794, %v1719
    %v1796 = vadd.f32 %v1795, %v1721
    %v1797 = vadd.f32 %v1796, %v1723
    %v1798 = vadd.f32 %v1797, %v1725
    %v1799 = vadd.f32 %v1798, %v1727
    %v1800 = vadd.f32 %v1799, %v1729
    %v1801 = vadd.f32 %v1800, %v1731
    %v1802 = vadd.f32 %v1801, %v1733
    %v1803 = vadd.f32 %v1802, %v1735
    %v1804 = vrot.slane %v1803, 4
    %v1805 = vadd.f32 %v1803, %v1804
    %v1806 = vrot.slane %v1805, 2
    %v1807 = vadd.f32 %v1805, %v1806
    %v1808 = vrot.slane %v1807, 1
    %v1809 = vadd.f32 %v1807, %v1808
    %v1810 = vmul.f32 %v1772, 0.005
    %v1811 = vmul.f32 %v1809, 0.005
    %v1812 = vadd.f32 %v1810, 1e-05
    %v1813 = vadd.f32 %v1811, 1e-05
    %v1814 = vrsqrt.pop %v1812
    %v1815 = vrsqrt.pop %v1813
    %v1817 = vlaneseq
    %v1818 = vshrl.u32 %v1817, 7
    %v1819 = vsub.s32 0, %v1818
    %v1820 = vrot.slane %v1401, %v1819
    %v1821 = vlaneseq
    %v1822 = vshrl.u32 %v1821, 7
    %v1823 = vsub.s32 1, %v1822
    %v1824 = vrot.slane %v1401, %v1823
    %v1827 = vmul.f32 %v1814, %v1820
    %v1828 = vmul.f32 %v1815, %v1824
    %v1829 = vlaneseq
    %v1830 = vshrl.u32 %v1829, 7
    %v1831 = vsub.s32 0, %v1830
    %v1832 = vrot.slane %v1827, %v1831
    %v1833 = vlaneseq
    %v1834 = vshrl.u32 %v1833, 7
    %v1835 = vsub.s32 0, %v1834
    %v1836 = vrot.slane %v1828, %v1835
    %v1837 = vmul.f32 %v1544, %v1832
    %v1838 = vmul.f32 %v1545, %v1836
    %v1839 = vmul.f32 %v1546, %v1832
    %v1840 = vmul.f32 %v1547, %v1836
    %v1841 = vmul.f32 %v1548, %v1832
    %v1842 = vmul.f32 %v1549, %v1836
    %v1843 = vmul.f32 %v1550, %v1832
    %v1844 = vmul.f32 %v1551, %v1836
    %v1845 = vmul.f32 %v1552, %v1832
    %v1846 = vmul.f32 %v1553, %v1836
    %v1847 = vmul.f32 %v1554, %v1832
    %v1848 = vmul.f32 %v1555, %v1836
    %v1849 = vmul.f32 %v1556, %v1832
    %v1850 = vmul.f32 %v1557, %v1836
    %v1851 = vmul.f32 %v1558, %v1832
    %v1852 = vmul.f32 %v1559, %v1836
    %v1853 = vmul.f32 %v1560, %v1832
    %v1854 = vmul.f32 %v1561, %v1836
    %v1855 = vmul.f32 %v1562, %v1832
    %v1856 = vmul.f32 %v1563, %v1836
    %v1857 = vmul.f32 %v1564, %v1832
    %v1858 = vmul.f32 %v1565, %v1836
    %v1859 = vmul.f32 %v1566, %v1832
    %v1860 = vmul.f32 %v1567, %v1836
    %v1861 = vmul.f32 %v1568, %v1832
    %v1862 = vmul.f32 %v1569, %v1836
    %v1863 = vmul.f32 %v1570, %v1832
    %v1864 = vmul.f32 %v1571, %v1836
    %v1865 = vmul.f32 %v1572, %v1832
    %v1866 = vmul.f32 %v1573, %v1836
    %v1867 = vmul.f32 %v1574, %v1832
    %v1868 = vmul.f32 %v1575, %v1836
    %v1869 = vmul.f32 %v1576, %v1832
    %v1870 = vmul.f32 %v1577, %v1836
    %v1871 = vmul.f32 %v1578, %v1832
    %v1872 = vmul.f32 %v1579, %v1836
    %v1873 = vmul.f32 %v1580, %v1832
    %v1874 = vmul.f32 %v1581, %v1836
    %v1875 = vmul.f32 %v1582, %v1832
    %v1876 = vmul.f32 %v1583, %v1836
    %v1877 = vmul.f32 %v1584, %v1832
    %v1878 = vmul.f32 %v1585, %v1836
    %v1879 = vmul.f32 %v1586, %v1832
    %v1880 = vmul.f32 %v1587, %v1836
    %v1881 = vmul.f32 %v1588, %v1832
    %v1882 = vmul.f32 %v1589, %v1836
    %v1883 = vmul.f32 %v1590, %v1832
    %v1884 = vmul.f32 %v1591, %v1836
    %v1885 = vmul.f32 %v1592, %v1832
    %v1886 = vmul.f32 %v1593, %v1836
    %v1887 = vmul.f32 %v1594, %v1832
    %v1888 = vmul.f32 %v1595, %v1836
    %v1889 = vmul.f32 %v1596, %v1832
    %v1890 = vmul.f32 %v1597, %v1836
    %v1891 = vmul.f32 %v1598, %v1832
    %v1892 = vmul.f32 %v1599, %v1836
    %v1893 = vmul.f32 %v1600, %v1832
    %v1894 = vmul.f32 %v1601, %v1836
    %v1895 = vmul.f32 %v1602, %v1832
    %v1896 = vmul.f32 %v1603, %v1836
    %v1897 = vmul.f32 %v1604, %v1832
    %v1898 = vmul.f32 %v1605, %v1836
    %v1899 = vmul.f32 %v1606, %v1832
    %v1900 = vmul.f32 %v1607, %v1836
    %v1902 = vlaneseq
    %v1903 = vshrl.u32 %v1902, 7
    %v1904 = vsub.s32 0, %v1903
    %v1905 = vrot.slane %v1403, %v1904
    %v1906 = vlaneseq
    %v1907 = vshrl.u32 %v1906, 7
    %v1908 = vsub.s32 1, %v1907
    %v1909 = vrot.slane %v1403, %v1908
    %v1912 = vadd.f32 %v1837, %v1905
    %v1913 = vadd.f32 %v1838, %v1909
    %v1914 = vadd.f32 %v1839, %v1905
    %v1915 = vadd.f32 %v1840, %v1909
    %v1916 = vadd.f32 %v1841, %v1905
    %v1917 = vadd.f32 %v1842, %v1909
    %v1918 = vadd.f32 %v1843, %v1905
    %v1919 = vadd.f32 %v1844, %v1909
    %v1920 = vadd.f32 %v1845, %v1905
    %v1921 = vadd.f32 %v1846, %v1909
    %v1922 = vadd.f32 %v1847, %v1905
    %v1923 = vadd.f32 %v1848, %v1909
    %v1924 = vadd.f32 %v1849, %v1905
    %v1925 = vadd.f32 %v1850, %v1909
    %v1926 = vadd.f32 %v1851, %v1905
    %v1927 = vadd.f32 %v1852, %v1909
    %v1928 = vadd.f32 %v1853, %v1905
    %v1929 = vadd.f32 %v1854, %v1909
    %v1930 = vadd.f32 %v1855, %v1905
    %v1931 = vadd.f32 %v1856, %v1909
    %v1932 = vadd.f32 %v1857, %v1905
    %v1933 = vadd.f32 %v1858, %v1909
    %v1934 = vadd.f32 %v1859, %v1905
    %v1935 = vadd.f32 %v1860, %v1909
    %v1936 = vadd.f32 %v1861, %v1905
    %v1937 = vadd.f32 %v1862, %v1909
    %v1938 = vadd.f32 %v1863, %v1905
    %v1939 = vadd.f32 %v1864, %v1909
    %v1940 = vadd.f32 %v1865, %v1905
    %v1941 = vadd.f32 %v1866, %v1909
    %v1942 = vadd.f32 %v1867, %v1905
    %v1943 = vadd.f32 %v1868, %v1909
    %v1944 = vadd.f32 %v1869, %v1905
    %v1945 = vadd.f32 %v1870, %v1909
    %v1946 = vadd.f32 %v1871, %v1905
    %v1947 = vadd.f32 %v1872, %v1909
    %v1948 = vadd.f32 %v1873, %v1905
    %v1949 = vadd.f32 %v1874, %v1909
    %v1950 = vadd.f32 %v1875, %v1905
    %v1951 = vadd.f32 %v1876, %v1909
    %v1952 = vadd.f32 %v1877, %v1905
    %v1953 = vadd.f32 %v1878, %v1909
    %v1954 = vadd.f32 %v1879, %v1905
    %v1955 = vadd.f32 %v1880, %v1909
    %v1956 = vadd.f32 %v1881, %v1905
    %v1957 = vadd.f32 %v1882, %v1909
    %v1958 = vadd.f32 %v1883, %v1905
    %v1959 = vadd.f32 %v1884, %v1909
    %v1960 = vadd.f32 %v1885, %v1905
    %v1961 = vadd.f32 %v1886, %v1909
    %v1962 = vadd.f32 %v1887, %v1905
    %v1963 = vadd.f32 %v1888, %v1909
    %v1964 = vadd.f32 %v1889, %v1905
    %v1965 = vadd.f32 %v1890, %v1909
    %v1966 = vadd.f32 %v1891, %v1905
    %v1967 = vadd.f32 %v1892, %v1909
    %v1968 = vadd.f32 %v1893, %v1905
    %v1969 = vadd.f32 %v1894, %v1909
    %v1970 = vadd.f32 %v1895, %v1905
    %v1971 = vadd.f32 %v1896, %v1909
    %v1972 = vadd.f32 %v1897, %v1905
    %v1973 = vadd.f32 %v1898, %v1909
    %v1974 = vadd.f32 %v1899, %v1905
    %v1975 = vadd.f32 %v1900, %v1909
    %v1976 = vld [vmem:[%s6 + $0x3] ss:$0 sm:$0xff]
    %v1977 = vld [vmem:[%s2] sm:$0xff]
    %v1978 = vld [vmem:[%s2 + $0x8] sm:$0xff]
    %v1979 = vld [vmem:[%s2 + $0x10] sm:$0xff]
    %v1980 = vld [vmem:[%s2 + $0x18] sm:$0xff]
    %v1981 = vld [vmem:[%s2 + $0x20] sm:$0xff]
    %v1982 = vld [vmem:[%s2 + $0x28] sm:$0xff]
    %v1983 = vld [vmem:[%s2 + $0x30] sm:$0xff]
    %v1984 = vld [vmem:[%s2 + $0x38] sm:$0xff]
    %v1985 = vld [vmem:[%s2 + $0x40] sm:$0xff]
    %v1986 = vld [vmem:[%s2 + $0x48] sm:$0xff]
    %v1987 = vld [vmem:[%s2 + $0x50] sm:$0xff]
    %v1988 = vld [vmem:[%s2 + $0x58] sm:$0xff]
    %v1989 = vld [vmem:[%s2 + $0x60] sm:$0xff]
    %v1990 = vld [vmem:[%s2 + $0x68] sm:$0xff]
    %v1991 = vld [vmem:[%s2 + $0x70] sm:$0xff]
    %v1992 = vld [vmem:[%s2 + $0x78] sm:$0xff]
    %v1993 = vld [vmem:[%s2 + $0x80] sm:$0xff]
    %v1994 = vld [vmem:[%s2 + $0x88] sm:$0xff]
    %v1995 = vld [vmem:[%s2 + $0x90] sm:$0xff]
    %v1996 = vld [vmem:[%s2 + $0x98] sm:$0xff]
    %v1997 = vld [vmem:[%s2 + $0xa0] sm:$0xff]
    %v1998 = vld [vmem:[%s2 + $0xa8] sm:$0xff]
    %v1999 = vld [vmem:[%s2 + $0xb0] sm:$0xff]
    %v2000 = vld [vmem:[%s2 + $0xb8] sm:$0xff]
    %v2001 = vld [vmem:[%s2 + $0xc0] sm:$0xff]
    %v2002 = vld [vmem:[%s2 + $0xc8] sm:$0xff]
    %v2003 = vld [vmem:[%s2 + $0xd0] sm:$0xff]
    %v2004 = vld [vmem:[%s2 + $0xd8] sm:$0xff]
    %v2005 = vld [vmem:[%s2 + $0xe0] sm:$0xff]
    %v2006 = vld [vmem:[%s2 + $0xe8] sm:$0xff]
    %v2007 = vld [vmem:[%s2 + $0xf0] sm:$0xff]
    %v2008 = vld [vmem:[%s2 + $0xf8] sm:$0xff]
    %2009 = vmatprep.subr.mxu0 0.0
    %2010 = vmatpush1.msra.mxu0 %v1992
    %2011 = vmatprep.subr.mxu0 0.0
    %2012 = vmatpush1.msra.mxu0 %v1991
    %2013 = vmatprep.subr.mxu0 0.0
    %2014 = vmatpush1.msra.mxu0 %v1990
    %2015 = vmatprep.subr.mxu0 0.0
    %2016 = vmatpush1.msra.mxu0 %v1989
    %2017 = vmatprep.subr.mxu0 0.0
    %2018 = vmatpush1.msra.mxu0 %v1988
    %2019 = vmatprep.subr.mxu0 0.0
    %2020 = vmatpush1.msra.mxu0 %v1987
    %2021 = vmatprep.subr.mxu0 0.0
    %2022 = vmatpush1.msra.mxu0 %v1986
    %2023 = vmatprep.subr.mxu0 0.0
    %2024 = vmatpush1.msra.mxu0 %v1985
    %2025 = vmatprep.subr.mxu0 0.0
    %2026 = vmatpush1.msra.mxu0 %v1984
    %2027 = vmatprep.subr.mxu0 0.0
    %2028 = vmatpush1.msra.mxu0 %v1983
    %2029 = vmatprep.subr.mxu0 0.0
    %2030 = vmatpush1.msra.mxu0 %v1982
    %2031 = vmatprep.subr.mxu0 0.0
    %2032 = vmatpush1.msra.mxu0 %v1981
    %2033 = vmatprep.subr.mxu0 0.0
    %2034 = vmatpush1.msra.mxu0 %v1980
    %2035 = vmatprep.subr.mxu0 0.0
    %2036 = vmatpush1.msra.mxu0 %v1979
    %2037 = vmatprep.subr.mxu0 0.0
    %2038 = vmatpush1.msra.mxu0 %v1978
    %2039 = vmatprep.subr.mxu0 0.0
    %2040 = vmatpush1.msra.mxu0 %v1977
    %2041 = vmatprep.subr.mxu0 0.0
    %2042 = vmatpush2.msra.mxu0 %v2008
    %2043 = vmatprep.subr.mxu0 0.0
    %2044 = vmatpush2.msra.mxu0 %v2007
    %2045 = vmatprep.subr.mxu0 0.0
    %2046 = vmatpush2.msra.mxu0 %v2006
    %2047 = vmatprep.subr.mxu0 0.0
    %2048 = vmatpush2.msra.mxu0 %v2005
    %2049 = vmatprep.subr.mxu0 0.0
    %2050 = vmatpush2.msra.mxu0 %v2004
    %2051 = vmatprep.subr.mxu0 0.0
    %2052 = vmatpush2.msra.mxu0 %v2003
    %2053 = vmatprep.subr.mxu0 0.0
    %2054 = vmatpush2.msra.mxu0 %v2002
    %2055 = vmatprep.subr.mxu0 0.0
    %2056 = vmatpush2.msra.mxu0 %v2001
    %2057 = vmatprep.subr.mxu0 0.0
    %2058 = vmatpush2.msra.mxu0 %v2000
    %2059 = vmatprep.subr.mxu0 0.0
    %2060 = vmatpush2.msra.mxu0 %v1999
    %2061 = vmatprep.subr.mxu0 0.0
    %2062 = vmatpush2.msra.mxu0 %v1998
    %2063 = vmatprep.subr.mxu0 0.0
    %2064 = vmatpush2.msra.mxu0 %v1997
    %2065 = vmatprep.subr.mxu0 0.0
    %2066 = vmatpush2.msra.mxu0 %v1996
    %2067 = vmatprep.subr.mxu0 0.0
    %2068 = vmatpush2.msra.mxu0 %v1995
    %2069 = vmatprep.subr.mxu0 0.0
    %2070 = vmatpush2.msra.mxu0 %v1994
    %2071 = vmatprep.subr.mxu0 0.0
    %2072 = vmatpush2.msra.mxu0 %v1993
    %2073 = vmatprep.mubr.f32.mxu0 %v1913
    %2074 = vmatmul.mubr.f32.gmra.mxu0 %v1912
    %v2075 = vpop.f32.mrf.mxu0
    %v2076 = vadd.f32 %v1976, %v2075
    %v2077 = vpop.f32.mrf.mxu0
    %2078 = vmatprep.mubr.f32.mxu0 %v1915
    %2079 = vmatmul.mubr.f32.gmra.mxu0 %v1914
    %v2080 = vpop.f32.mrf.mxu0
    %v2081 = vadd.f32 %v1976, %v2080
    %v2082 = vpop.f32.mrf.mxu0
    %2083 = vmatprep.mubr.f32.mxu0 %v1917
    %2084 = vmatmul.mubr.f32.gmra.mxu0 %v1916
    %v2085 = vpop.f32.mrf.mxu0
    %v2086 = vadd.f32 %v1976, %v2085
    %v2087 = vpop.f32.mrf.mxu0
    %2088 = vmatprep.mubr.f32.mxu0 %v1919
    %2089 = vmatmul.mubr.f32.gmra.mxu0 %v1918
    %v2090 = vpop.f32.mrf.mxu0
    %v2091 = vadd.f32 %v1976, %v2090
    %v2092 = vpop.f32.mrf.mxu0
    %2093 = vmatprep.mubr.f32.mxu0 %v1921
    %2094 = vmatmul.mubr.f32.gmra.mxu0 %v1920
    %v2095 = vpop.f32.mrf.mxu0
    %v2096 = vadd.f32 %v1976, %v2095
    %v2097 = vpop.f32.mrf.mxu0
    %2098 = vmatprep.mubr.f32.mxu0 %v1923
    %2099 = vmatmul.mubr.f32.gmra.mxu0 %v1922
    %v2100 = vpop.f32.mrf.mxu0
    %v2101 = vadd.f32 %v1976, %v2100
    %v2102 = vpop.f32.mrf.mxu0
    %2103 = vmatprep.mubr.f32.mxu0 %v1925
    %2104 = vmatmul.mubr.f32.gmra.mxu0 %v1924
    %v2105 = vpop.f32.mrf.mxu0
    %v2106 = vadd.f32 %v1976, %v2105
    %v2107 = vpop.f32.mrf.mxu0
    %2108 = vmatprep.mubr.f32.mxu0 %v1927
    %2109 = vmatmul.mubr.f32.gmra.mxu0 %v1926
    %v2110 = vpop.f32.mrf.mxu0
    %v2111 = vadd.f32 %v1976, %v2110
    %v2112 = vpop.f32.mrf.mxu0
    %2113 = vmatprep.mubr.f32.mxu0 %v1929
    %2114 = vmatmul.mubr.f32.gmra.mxu0 %v1928
    %v2115 = vpop.f32.mrf.mxu0
    %v2116 = vadd.f32 %v1976, %v2115
    %v2117 = vpop.f32.mrf.mxu0
    %2118 = vmatprep.mubr.f32.mxu0 %v1931
    %2119 = vmatmul.mubr.f32.gmra.mxu0 %v1930
    %v2120 = vpop.f32.mrf.mxu0
    %v2121 = vadd.f32 %v1976, %v2120
    %v2122 = vpop.f32.mrf.mxu0
    %2123 = vmatprep.mubr.f32.mxu0 %v1933
    %2124 = vmatmul.mubr.f32.gmra.mxu0 %v1932
    %v2125 = vpop.f32.mrf.mxu0
    %v2126 = vadd.f32 %v1976, %v2125
    %v2127 = vpop.f32.mrf.mxu0
    %2128 = vmatprep.mubr.f32.mxu0 %v1935
    %2129 = vmatmul.mubr.f32.gmra.mxu0 %v1934
    %v2130 = vpop.f32.mrf.mxu0
    %v2131 = vadd.f32 %v1976, %v2130
    %v2132 = vpop.f32.mrf.mxu0
    %2133 = vmatprep.mubr.f32.mxu0 %v1937
    %2134 = vmatmul.mubr.f32.gmra.mxu0 %v1936
    %v2135 = vpop.f32.mrf.mxu0
    %v2136 = vadd.f32 %v1976, %v2135
    %v2137 = vpop.f32.mrf.mxu0
    %2138 = vmatprep.mubr.f32.mxu0 %v1939
    %2139 = vmatmul.mubr.f32.gmra.mxu0 %v1938
    %v2140 = vpop.f32.mrf.mxu0
    %v2141 = vadd.f32 %v1976, %v2140
    %v2142 = vpop.f32.mrf.mxu0
    %2143 = vmatprep.mubr.f32.mxu0 %v1941
    %2144 = vmatmul.mubr.f32.gmra.mxu0 %v1940
    %v2145 = vpop.f32.mrf.mxu0
    %v2146 = vadd.f32 %v1976, %v2145
    %v2147 = vpop.f32.mrf.mxu0
    %2148 = vmatprep.mubr.f32.mxu0 %v1943
    %2149 = vmatmul.mubr.f32.gmra.mxu0 %v1942
    %v2150 = vpop.f32.mrf.mxu0
    %v2151 = vadd.f32 %v1976, %v2150
    %v2152 = vpop.f32.mrf.mxu0
    %2153 = vmatprep.mubr.f32.mxu0 %v1945
    %2154 = vmatmul.mubr.f32.gmra.mxu0 %v1944
    %v2155 = vpop.f32.mrf.mxu0
    %v2156 = vadd.f32 %v1976, %v2155
    %v2157 = vpop.f32.mrf.mxu0
    %2158 = vmatprep.mubr.f32.mxu0 %v1947
    %2159 = vmatmul.mubr.f32.gmra.mxu0 %v1946
    %v2160 = vpop.f32.mrf.mxu0
    %v2161 = vadd.f32 %v1976, %v2160
    %v2162 = vpop.f32.mrf.mxu0
    %2163 = vmatprep.mubr.f32.mxu0 %v1949
    %2164 = vmatmul.mubr.f32.gmra.mxu0 %v1948
    %v2165 = vpop.f32.mrf.mxu0
    %v2166 = vadd.f32 %v1976, %v2165
    %v2167 = vpop.f32.mrf.mxu0
    %2168 = vmatprep.mubr.f32.mxu0 %v1951
    %2169 = vmatmul.mubr.f32.gmra.mxu0 %v1950
    %v2170 = vpop.f32.mrf.mxu0
    %v2171 = vadd.f32 %v1976, %v2170
    %v2172 = vpop.f32.mrf.mxu0
    %2173 = vmatprep.mubr.f32.mxu0 %v1953
    %2174 = vmatmul.mubr.f32.gmra.mxu0 %v1952
    %v2175 = vpop.f32.mrf.mxu0
    %v2176 = vadd.f32 %v1976, %v2175
    %v2177 = vpop.f32.mrf.mxu0
    %2178 = vmatprep.mubr.f32.mxu0 %v1955
    %2179 = vmatmul.mubr.f32.gmra.mxu0 %v1954
    %v2180 = vpop.f32.mrf.mxu0
    %v2181 = vadd.f32 %v1976, %v2180
    %v2182 = vpop.f32.mrf.mxu0
    %2183 = vmatprep.mubr.f32.mxu0 %v1957
    %2184 = vmatmul.mubr.f32.gmra.mxu0 %v1956
    %v2185 = vpop.f32.mrf.mxu0
    %v2186 = vadd.f32 %v1976, %v2185
    %v2187 = vpop.f32.mrf.mxu0
    %2188 = vmatprep.mubr.f32.mxu0 %v1959
    %2189 = vmatmul.mubr.f32.gmra.mxu0 %v1958
    %v2190 = vpop.f32.mrf.mxu0
    %v2191 = vadd.f32 %v1976, %v2190
    %v2192 = vpop.f32.mrf.mxu0
    %2193 = vmatprep.mubr.f32.mxu0 %v1961
    %2194 = vmatmul.mubr.f32.gmra.mxu0 %v1960
    %v2195 = vpop.f32.mrf.mxu0
    %v2196 = vadd.f32 %v1976, %v2195
    %v2197 = vpop.f32.mrf.mxu0
    %2198 = vmatprep.mubr.f32.mxu0 %v1963
    %2199 = vmatmul.mubr.f32.gmra.mxu0 %v1962
    %v2200 = vpop.f32.mrf.mxu0
    %v2201 = vadd.f32 %v1976, %v2200
    %v2202 = vpop.f32.mrf.mxu0
    %2203 = vmatprep.mubr.f32.mxu0 %v1965
    %2204 = vmatmul.mubr.f32.gmra.mxu0 %v1964
    %v2205 = vpop.f32.mrf.mxu0
    %v2206 = vadd.f32 %v1976, %v2205
    %v2207 = vpop.f32.mrf.mxu0
    %2208 = vmatprep.mubr.f32.mxu0 %v1967
    %2209 = vmatmul.mubr.f32.gmra.mxu0 %v1966
    %v2210 = vpop.f32.mrf.mxu0
    %v2211 = vadd.f32 %v1976, %v2210
    %v2212 = vpop.f32.mrf.mxu0
    %2213 = vmatprep.mubr.f32.mxu0 %v1969
    %2214 = vmatmul.mubr.f32.gmra.mxu0 %v1968
    %v2215 = vpop.f32.mrf.mxu0
    %v2216 = vadd.f32 %v1976, %v2215
    %v2217 = vpop.f32.mrf.mxu0
    %2218 = vmatprep.mubr.f32.mxu0 %v1971
    %2219 = vmatmul.mubr.f32.gmra.mxu0 %v1970
    %v2220 = vpop.f32.mrf.mxu0
    %v2221 = vadd.f32 %v1976, %v2220
    %v2222 = vpop.f32.mrf.mxu0
    %2223 = vmatprep.mubr.f32.mxu0 %v1973
    %2224 = vmatmul.mubr.f32.gmra.mxu0 %v1972
    %v2225 = vpop.f32.mrf.mxu0
    %v2226 = vadd.f32 %v1976, %v2225
    %v2227 = vpop.f32.mrf.mxu0
    %2228 = vmatprep.mubr.f32.mxu0 %v1975
    %2229 = vmatmul.mubr.f32.gmra.mxu0 %v1974
    %v2230 = vpop.f32.mrf.mxu0
    %v2231 = vadd.f32 %v1976, %v2230
    %v2232 = vpop.f32.mrf.mxu0
    %2233 = vdwg.mxu0
    %v2234 = vsub.f32 0.0, %v2076
    %v2235 = vsub.f32 0.0, %v2081
    %v2236 = vsub.f32 0.0, %v2086
    %v2237 = vsub.f32 0.0, %v2091
    %v2238 = vsub.f32 0.0, %v2096
    %v2239 = vsub.f32 0.0, %v2101
    %v2240 = vsub.f32 0.0, %v2106
    %v2241 = vsub.f32 0.0, %v2111
    %v2242 = vsub.f32 0.0, %v2116
    %v2243 = vsub.f32 0.0, %v2121
    %v2244 = vsub.f32 0.0, %v2126
    %v2245 = vsub.f32 0.0, %v2131
    %v2246 = vsub.f32 0.0, %v2136
    %v2247 = vsub.f32 0.0, %v2141
    %v2248 = vsub.f32 0.0, %v2146
    %v2249 = vsub.f32 0.0, %v2151
    %v2250 = vsub.f32 0.0, %v2156
    %v2251 = vsub.f32 0.0, %v2161
    %v2252 = vsub.f32 0.0, %v2166
    %v2253 = vsub.f32 0.0, %v2171
    %v2254 = vsub.f32 0.0, %v2176
    %v2255 = vsub.f32 0.0, %v2181
    %v2256 = vsub.f32 0.0, %v2186
    %v2257 = vsub.f32 0.0, %v2191
    %v2258 = vsub.f32 0.0, %v2196
    %v2259 = vsub.f32 0.0, %v2201
    %v2260 = vsub.f32 0.0, %v2206
    %v2261 = vsub.f32 0.0, %v2211
    %v2262 = vsub.f32 0.0, %v2216
    %v2263 = vsub.f32 0.0, %v2221
    %v2264 = vsub.f32 0.0, %v2226
    %v2265 = vsub.f32 0.0, %v2231
    %v2266 = vmul.f32 %v2234, 1.442695
    %v2267 = vpow.pop %v2266
    %v2268 = vmul.f32 %v2235, 1.442695
    %v2269 = vpow.pop %v2268
    %v2270 = vmul.f32 %v2236, 1.442695
    %v2271 = vpow.pop %v2270
    %v2272 = vmul.f32 %v2237, 1.442695
    %v2273 = vpow.pop %v2272
    %v2274 = vmul.f32 %v2238, 1.442695
    %v2275 = vpow.pop %v2274
    %v2276 = vmul.f32 %v2239, 1.442695
    %v2277 = vpow.pop %v2276
    %v2278 = vmul.f32 %v2240, 1.442695
    %v2279 = vpow.pop %v2278
    %v2280 = vmul.f32 %v2241, 1.442695
    %v2281 = vpow.pop %v2280
    %v2282 = vmul.f32 %v2242, 1.442695
    %v2283 = vpow.pop %v2282
    %v2284 = vmul.f32 %v2243, 1.442695
    %v2285 = vpow.pop %v2284
    %v2286 = vmul.f32 %v2244, 1.442695
    %v2287 = vpow.pop %v2286
    %v2288 = vmul.f32 %v2245, 1.442695
    %v2289 = vpow.pop %v2288
    %v2290 = vmul.f32 %v2246, 1.442695
    %v2291 = vpow.pop %v2290
    %v2292 = vmul.f32 %v2247, 1.442695
    %v2293 = vpow.pop %v2292
    %v2294 = vmul.f32 %v2248, 1.442695
    %v2295 = vpow.pop %v2294
    %v2296 = vmul.f32 %v2249, 1.442695
    %v2297 = vpow.pop %v2296
    %v2298 = vmul.f32 %v2250, 1.442695
    %v2299 = vpow.pop %v2298
    %v2300 = vmul.f32 %v2251, 1.442695
    %v2301 = vpow.pop %v2300
    %v2302 = vmul.f32 %v2252, 1.442695
    %v2303 = vpow.pop %v2302
    %v2304 = vmul.f32 %v2253, 1.442695
    %v2305 = vpow.pop %v2304
    %v2306 = vmul.f32 %v2254, 1.442695
    %v2307 = vpow.pop %v2306
    %v2308 = vmul.f32 %v2255, 1.442695
    %v2309 = vpow.pop %v2308
    %v2310 = vmul.f32 %v2256, 1.442695
    %v2311 = vpow.pop %v2310
    %v2312 = vmul.f32 %v2257, 1.442695
    %v2313 = vpow.pop %v2312
    %v2314 = vmul.f32 %v2258, 1.442695
    %v2315 = vpow.pop %v2314
    %v2316 = vmul.f32 %v2259, 1.442695
    %v2317 = vpow.pop %v2316
    %v2318 = vmul.f32 %v2260, 1.442695
    %v2319 = vpow.pop %v2318
    %v2320 = vmul.f32 %v2261, 1.442695
    %v2321 = vpow.pop %v2320
    %v2322 = vmul.f32 %v2262, 1.442695
    %v2323 = vpow.pop %v2322
    %v2324 = vmul.f32 %v2263, 1.442695
    %v2325 = vpow.pop %v2324
    %v2326 = vmul.f32 %v2264, 1.442695
    %v2327 = vpow.pop %v2326
    %v2328 = vmul.f32 %v2265, 1.442695
    %v2329 = vpow.pop %v2328
    %v2330 = vadd.f32 %v2267, 1.0
    %v2331 = vadd.f32 %v2269, 1.0
    %v2332 = vadd.f32 %v2271, 1.0
    %v2333 = vadd.f32 %v2273, 1.0
    %v2334 = vadd.f32 %v2275, 1.0
    %v2335 = vadd.f32 %v2277, 1.0
    %v2336 = vadd.f32 %v2279, 1.0
    %v2337 = vadd.f32 %v2281, 1.0
    %v2338 = vadd.f32 %v2283, 1.0
    %v2339 = vadd.f32 %v2285, 1.0
    %v2340 = vadd.f32 %v2287, 1.0
    %v2341 = vadd.f32 %v2289, 1.0
    %v2342 = vadd.f32 %v2291, 1.0
    %v2343 = vadd.f32 %v2293, 1.0
    %v2344 = vadd.f32 %v2295, 1.0
    %v2345 = vadd.f32 %v2297, 1.0
    %v2346 = vadd.f32 %v2299, 1.0
    %v2347 = vadd.f32 %v2301, 1.0
    %v2348 = vadd.f32 %v2303, 1.0
    %v2349 = vadd.f32 %v2305, 1.0
    %v2350 = vadd.f32 %v2307, 1.0
    %v2351 = vadd.f32 %v2309, 1.0
    %v2352 = vadd.f32 %v2311, 1.0
    %v2353 = vadd.f32 %v2313, 1.0
    %v2354 = vadd.f32 %v2315, 1.0
    %v2355 = vadd.f32 %v2317, 1.0
    %v2356 = vadd.f32 %v2319, 1.0
    %v2357 = vadd.f32 %v2321, 1.0
    %v2358 = vadd.f32 %v2323, 1.0
    %v2359 = vadd.f32 %v2325, 1.0
    %v2360 = vadd.f32 %v2327, 1.0
    %v2361 = vadd.f32 %v2329, 1.0
    %v2362 = vrcp.pop %v2330
    %v2363 = vrcp.pop %v2331
    %v2364 = vrcp.pop %v2332
    %v2365 = vrcp.pop %v2333
    %v2366 = vrcp.pop %v2334
    %v2367 = vrcp.pop %v2335
    %v2368 = vrcp.pop %v2336
    %v2369 = vrcp.pop %v2337
    %v2370 = vrcp.pop %v2338
    %v2371 = vrcp.pop %v2339
    %v2372 = vrcp.pop %v2340
    %v2373 = vrcp.pop %v2341
    %v2374 = vrcp.pop %v2342
    %v2375 = vrcp.pop %v2343
    %v2376 = vrcp.pop %v2344
    %v2377 = vrcp.pop %v2345
    %v2378 = vrcp.pop %v2346
    %v2379 = vrcp.pop %v2347
    %v2380 = vrcp.pop %v2348
    %v2381 = vrcp.pop %v2349
    %v2382 = vrcp.pop %v2350
    %v2383 = vrcp.pop %v2351
    %v2384 = vrcp.pop %v2352
    %v2385 = vrcp.pop %v2353
    %v2386 = vrcp.pop %v2354
    %v2387 = vrcp.pop %v2355
    %v2388 = vrcp.pop %v2356
    %v2389 = vrcp.pop %v2357
    %v2390 = vrcp.pop %v2358
    %v2391 = vrcp.pop %v2359
    %v2392 = vrcp.pop %v2360
    %v2393 = vrcp.pop %v2361
    %v2394 = vmul.f32 %v2076, %v2362
    %v2395 = vmul.f32 %v2081, %v2363
    %v2396 = vmul.f32 %v2086, %v2364
    %v2397 = vmul.f32 %v2091, %v2365
    %v2398 = vmul.f32 %v2096, %v2366
    %v2399 = vmul.f32 %v2101, %v2367
    %v2400 = vmul.f32 %v2106, %v2368
    %v2401 = vmul.f32 %v2111, %v2369
    %v2402 = vmul.f32 %v2116, %v2370
    %v2403 = vmul.f32 %v2121, %v2371
    %v2404 = vmul.f32 %v2126, %v2372
    %v2405 = vmul.f32 %v2131, %v2373
    %v2406 = vmul.f32 %v2136, %v2374
    %v2407 = vmul.f32 %v2141, %v2375
    %v2408 = vmul.f32 %v2146, %v2376
    %v2409 = vmul.f32 %v2151, %v2377
    %v2410 = vmul.f32 %v2156, %v2378
    %v2411 = vmul.f32 %v2161, %v2379
    %v2412 = vmul.f32 %v2166, %v2380
    %v2413 = vmul.f32 %v2171, %v2381
    %v2414 = vmul.f32 %v2176, %v2382
    %v2415 = vmul.f32 %v2181, %v2383
    %v2416 = vmul.f32 %v2186, %v2384
    %v2417 = vmul.f32 %v2191, %v2385
    %v2418 = vmul.f32 %v2196, %v2386
    %v2419 = vmul.f32 %v2201, %v2387
    %v2420 = vmul.f32 %v2206, %v2388
    %v2421 = vmul.f32 %v2211, %v2389
    %v2422 = vmul.f32 %v2216, %v2390
    %v2423 = vmul.f32 %v2221, %v2391
    %v2424 = vmul.f32 %v2226, %v2392
    %v2425 = vmul.f32 %v2231, %v2393
    %v2426 = vld [vmem:[%s6 + $0x4] ss:$0 sm:$0xff]
    %v2427 = vld [vmem:[%s6 + $0x5] ss:$0 sm:$0xff]
    %v2428 = vmul.f32 %v2394, %v124
    %v2429 = vmul.f32 %v2395, %v125
    %v2430 = vmul.f32 %v2396, %v126
    %v2431 = vmul.f32 %v2397, %v127
    %v2432 = vmul.f32 %v2398, %v128
    %v2433 = vmul.f32 %v2399, %v129
    %v2434 = vmul.f32 %v2400, %v130
    %v2435 = vmul.f32 %v2401, %v131
    %v2436 = vmul.f32 %v2402, %v132
    %v2437 = vmul.f32 %v2403, %v133
    %v2438 = vmul.f32 %v2404, %v134
    %v2439 = vmul.f32 %v2405, %v135
    %v2440 = vmul.f32 %v2406, %v136
    %v2441 = vmul.f32 %v2407, %v137
    %v2442 = vmul.f32 %v2408, %v138
    %v2443 = vmul.f32 %v2409, %v139
    %v2444 = vmul.f32 %v2410, %v140
    %v2445 = vmul.f32 %v2411, %v141
    %v2446 = vmul.f32 %v2412, %v142
    %v2447 = vmul.f32 %v2413, %v143
    %v2448 = vmul.f32 %v2414, %v144
    %v2449 = vmul.f32 %v2415, %v145
    %v2450 = vmul.f32 %v2416, %v146
    %v2451 = vmul.f32 %v2417, %v147
    %v2452 = vmul.f32 %v2418, %v148
    %v2453 = vmul.f32 %v2419, %v149
    %v2454 = vmul.f32 %v2420, %v150
    %v2455 = vmul.f32 %v2421, %v151
    %v2456 = vmul.f32 %v2422, %v152
    %v2457 = vmul.f32 %v2423, %v153
    %v2458 = vmul.f32 %v2424, %v154
    %v2459 = vmul.f32 %v2425, %v155
    %v2460 = vadd.f32 %v2428, %v2429
    %v2461 = vadd.f32 %v2460, %v2430
    %v2462 = vadd.f32 %v2461, %v2431
    %v2463 = vadd.f32 %v2462, %v2432
    %v2464 = vadd.f32 %v2463, %v2433
    %v2465 = vadd.f32 %v2464, %v2434
    %v2466 = vadd.f32 %v2465, %v2435
    %v2467 = vadd.f32 %v2466, %v2436
    %v2468 = vadd.f32 %v2467, %v2437
    %v2469 = vadd.f32 %v2468, %v2438
    %v2470 = vadd.f32 %v2469, %v2439
    %v2471 = vadd.f32 %v2470, %v2440
    %v2472 = vadd.f32 %v2471, %v2441
    %v2473 = vadd.f32 %v2472, %v2442
    %v2474 = vadd.f32 %v2473, %v2443
    %v2475 = vadd.f32 %v2474, %v2444
    %v2476 = vadd.f32 %v2475, %v2445
    %v2477 = vadd.f32 %v2476, %v2446
    %v2478 = vadd.f32 %v2477, %v2447
    %v2479 = vadd.f32 %v2478, %v2448
    %v2480 = vadd.f32 %v2479, %v2449
    %v2481 = vadd.f32 %v2480, %v2450
    %v2482 = vadd.f32 %v2481, %v2451
    %v2483 = vadd.f32 %v2482, %v2452
    %v2484 = vadd.f32 %v2483, %v2453
    %v2485 = vadd.f32 %v2484, %v2454
    %v2486 = vadd.f32 %v2485, %v2455
    %v2487 = vadd.f32 %v2486, %v2456
    %v2488 = vadd.f32 %v2487, %v2457
    %v2489 = vadd.f32 %v2488, %v2458
    %v2490 = vadd.f32 %v2489, %v2459
    %v2491 = vrot.slane %v2490, 4
    %v2492 = vadd.f32 %v2490, %v2491
    %v2493 = vrot.slane %v2492, 2
    %v2494 = vadd.f32 %v2492, %v2493
    %v2495 = vrot.slane %v2494, 1
    %v2496 = vadd.f32 %v2494, %v2495
    %v2497 = vmul.f32 %v2496, 0.005
    %v2498 = vsub.f32 %v2394, %v2497
    %v2499 = vsub.f32 %v2395, %v2497
    %v2500 = vsub.f32 %v2396, %v2497
    %v2501 = vsub.f32 %v2397, %v2497
    %v2502 = vsub.f32 %v2398, %v2497
    %v2503 = vsub.f32 %v2399, %v2497
    %v2504 = vsub.f32 %v2400, %v2497
    %v2505 = vsub.f32 %v2401, %v2497
    %v2506 = vsub.f32 %v2402, %v2497
    %v2507 = vsub.f32 %v2403, %v2497
    %v2508 = vsub.f32 %v2404, %v2497
    %v2509 = vsub.f32 %v2405, %v2497
    %v2510 = vsub.f32 %v2406, %v2497
    %v2511 = vsub.f32 %v2407, %v2497
    %v2512 = vsub.f32 %v2408, %v2497
    %v2513 = vsub.f32 %v2409, %v2497
    %v2514 = vsub.f32 %v2410, %v2497
    %v2515 = vsub.f32 %v2411, %v2497
    %v2516 = vsub.f32 %v2412, %v2497
    %v2517 = vsub.f32 %v2413, %v2497
    %v2518 = vsub.f32 %v2414, %v2497
    %v2519 = vsub.f32 %v2415, %v2497
    %v2520 = vsub.f32 %v2416, %v2497
    %v2521 = vsub.f32 %v2417, %v2497
    %v2522 = vsub.f32 %v2418, %v2497
    %v2523 = vsub.f32 %v2419, %v2497
    %v2524 = vsub.f32 %v2420, %v2497
    %v2525 = vsub.f32 %v2421, %v2497
    %v2526 = vsub.f32 %v2422, %v2497
    %v2527 = vsub.f32 %v2423, %v2497
    %v2528 = vsub.f32 %v2424, %v2497
    %v2529 = vsub.f32 %v2425, %v2497
    %v2530 = vmul.f32 %v2498, %v124
    %v2531 = vmul.f32 %v2499, %v125
    %v2532 = vmul.f32 %v2500, %v126
    %v2533 = vmul.f32 %v2501, %v127
    %v2534 = vmul.f32 %v2502, %v128
    %v2535 = vmul.f32 %v2503, %v129
    %v2536 = vmul.f32 %v2504, %v130
    %v2537 = vmul.f32 %v2505, %v131
    %v2538 = vmul.f32 %v2506, %v132
    %v2539 = vmul.f32 %v2507, %v133
    %v2540 = vmul.f32 %v2508, %v134
    %v2541 = vmul.f32 %v2509, %v135
    %v2542 = vmul.f32 %v2510, %v136
    %v2543 = vmul.f32 %v2511, %v137
    %v2544 = vmul.f32 %v2512, %v138
    %v2545 = vmul.f32 %v2513, %v139
    %v2546 = vmul.f32 %v2514, %v140
    %v2547 = vmul.f32 %v2515, %v141
    %v2548 = vmul.f32 %v2516, %v142
    %v2549 = vmul.f32 %v2517, %v143
    %v2550 = vmul.f32 %v2518, %v144
    %v2551 = vmul.f32 %v2519, %v145
    %v2552 = vmul.f32 %v2520, %v146
    %v2553 = vmul.f32 %v2521, %v147
    %v2554 = vmul.f32 %v2522, %v148
    %v2555 = vmul.f32 %v2523, %v149
    %v2556 = vmul.f32 %v2524, %v150
    %v2557 = vmul.f32 %v2525, %v151
    %v2558 = vmul.f32 %v2526, %v152
    %v2559 = vmul.f32 %v2527, %v153
    %v2560 = vmul.f32 %v2528, %v154
    %v2561 = vmul.f32 %v2529, %v155
    %v2562 = vmul.f32 %v2530, %v2530
    %v2563 = vmul.f32 %v2531, %v2531
    %v2564 = vmul.f32 %v2532, %v2532
    %v2565 = vmul.f32 %v2533, %v2533
    %v2566 = vmul.f32 %v2534, %v2534
    %v2567 = vmul.f32 %v2535, %v2535
    %v2568 = vmul.f32 %v2536, %v2536
    %v2569 = vmul.f32 %v2537, %v2537
    %v2570 = vmul.f32 %v2538, %v2538
    %v2571 = vmul.f32 %v2539, %v2539
    %v2572 = vmul.f32 %v2540, %v2540
    %v2573 = vmul.f32 %v2541, %v2541
    %v2574 = vmul.f32 %v2542, %v2542
    %v2575 = vmul.f32 %v2543, %v2543
    %v2576 = vmul.f32 %v2544, %v2544
    %v2577 = vmul.f32 %v2545, %v2545
    %v2578 = vmul.f32 %v2546, %v2546
    %v2579 = vmul.f32 %v2547, %v2547
    %v2580 = vmul.f32 %v2548, %v2548
    %v2581 = vmul.f32 %v2549, %v2549
    %v2582 = vmul.f32 %v2550, %v2550
    %v2583 = vmul.f32 %v2551, %v2551
    %v2584 = vmul.f32 %v2552, %v2552
    %v2585 = vmul.f32 %v2553, %v2553
    %v2586 = vmul.f32 %v2554, %v2554
    %v2587 = vmul.f32 %v2555, %v2555
    %v2588 = vmul.f32 %v2556, %v2556
    %v2589 = vmul.f32 %v2557, %v2557
    %v2590 = vmul.f32 %v2558, %v2558
    %v2591 = vmul.f32 %v2559, %v2559
    %v2592 = vmul.f32 %v2560, %v2560
    %v2593 = vmul.f32 %v2561, %v2561
    %v2594 = vadd.f32 %v2562, %v2563
    %v2595 = vadd.f32 %v2594, %v2564
    %v2596 = vadd.f32 %v2595, %v2565
    %v2597 = vadd.f32 %v2596, %v2566
    %v2598 = vadd.f32 %v2597, %v2567
    %v2599 = vadd.f32 %v2598, %v2568
    %v2600 = vadd.f32 %v2599, %v2569
    %v2601 = vadd.f32 %v2600, %v2570
    %v2602 = vadd.f32 %v2601, %v2571
    %v2603 = vadd.f32 %v2602, %v2572
    %v2604 = vadd.f32 %v2603, %v2573
    %v2605 = vadd.f32 %v2604, %v2574
    %v2606 = vadd.f32 %v2605, %v2575
    %v2607 = vadd.f32 %v2606, %v2576
    %v2608 = vadd.f32 %v2607, %v2577
    %v2609 = vadd.f32 %v2608, %v2578
    %v2610 = vadd.f32 %v2609, %v2579
    %v2611 = vadd.f32 %v2610, %v2580
    %v2612 = vadd.f32 %v2611, %v2581
    %v2613 = vadd.f32 %v2612, %v2582
    %v2614 = vadd.f32 %v2613, %v2583
    %v2615 = vadd.f32 %v2614, %v2584
    %v2616 = vadd.f32 %v2615, %v2585
    %v2617 = vadd.f32 %v2616, %v2586
    %v2618 = vadd.f32 %v2617, %v2587
    %v2619 = vadd.f32 %v2618, %v2588
    %v2620 = vadd.f32 %v2619, %v2589
    %v2621 = vadd.f32 %v2620, %v2590
    %v2622 = vadd.f32 %v2621, %v2591
    %v2623 = vadd.f32 %v2622, %v2592
    %v2624 = vadd.f32 %v2623, %v2593
    %v2625 = vrot.slane %v2624, 4
    %v2626 = vadd.f32 %v2624, %v2625
    %v2627 = vrot.slane %v2626, 2
    %v2628 = vadd.f32 %v2626, %v2627
    %v2629 = vrot.slane %v2628, 1
    %v2630 = vadd.f32 %v2628, %v2629
    %v2631 = vmul.f32 %v2630, 0.005
    %v2632 = vadd.f32 %v2631, 1e-05
    %v2633 = vrsqrt.pop %v2632
    %v2634 = vmul.f32 %v2633, %v2426
    %v2635 = vmul.f32 %v2498, %v2634
    %v2636 = vmul.f32 %v2499, %v2634
    %v2637 = vmul.f32 %v2500, %v2634
    %v2638 = vmul.f32 %v2501, %v2634
    %v2639 = vmul.f32 %v2502, %v2634
    %v2640 = vmul.f32 %v2503, %v2634
    %v2641 = vmul.f32 %v2504, %v2634
    %v2642 = vmul.f32 %v2505, %v2634
    %v2643 = vmul.f32 %v2506, %v2634
    %v2644 = vmul.f32 %v2507, %v2634
    %v2645 = vmul.f32 %v2508, %v2634
    %v2646 = vmul.f32 %v2509, %v2634
    %v2647 = vmul.f32 %v2510, %v2634
    %v2648 = vmul.f32 %v2511, %v2634
    %v2649 = vmul.f32 %v2512, %v2634
    %v2650 = vmul.f32 %v2513, %v2634
    %v2651 = vmul.f32 %v2514, %v2634
    %v2652 = vmul.f32 %v2515, %v2634
    %v2653 = vmul.f32 %v2516, %v2634
    %v2654 = vmul.f32 %v2517, %v2634
    %v2655 = vmul.f32 %v2518, %v2634
    %v2656 = vmul.f32 %v2519, %v2634
    %v2657 = vmul.f32 %v2520, %v2634
    %v2658 = vmul.f32 %v2521, %v2634
    %v2659 = vmul.f32 %v2522, %v2634
    %v2660 = vmul.f32 %v2523, %v2634
    %v2661 = vmul.f32 %v2524, %v2634
    %v2662 = vmul.f32 %v2525, %v2634
    %v2663 = vmul.f32 %v2526, %v2634
    %v2664 = vmul.f32 %v2527, %v2634
    %v2665 = vmul.f32 %v2528, %v2634
    %v2666 = vmul.f32 %v2529, %v2634
    %v2667 = vadd.f32 %v2635, %v2427
    %v2668 = vadd.f32 %v2636, %v2427
    %v2669 = vadd.f32 %v2637, %v2427
    %v2670 = vadd.f32 %v2638, %v2427
    %v2671 = vadd.f32 %v2639, %v2427
    %v2672 = vadd.f32 %v2640, %v2427
    %v2673 = vadd.f32 %v2641, %v2427
    %v2674 = vadd.f32 %v2642, %v2427
    %v2675 = vadd.f32 %v2643, %v2427
    %v2676 = vadd.f32 %v2644, %v2427
    %v2677 = vadd.f32 %v2645, %v2427
    %v2678 = vadd.f32 %v2646, %v2427
    %v2679 = vadd.f32 %v2647, %v2427
    %v2680 = vadd.f32 %v2648, %v2427
    %v2681 = vadd.f32 %v2649, %v2427
    %v2682 = vadd.f32 %v2650, %v2427
    %v2683 = vadd.f32 %v2651, %v2427
    %v2684 = vadd.f32 %v2652, %v2427
    %v2685 = vadd.f32 %v2653, %v2427
    %v2686 = vadd.f32 %v2654, %v2427
    %v2687 = vadd.f32 %v2655, %v2427
    %v2688 = vadd.f32 %v2656, %v2427
    %v2689 = vadd.f32 %v2657, %v2427
    %v2690 = vadd.f32 %v2658, %v2427
    %v2691 = vadd.f32 %v2659, %v2427
    %v2692 = vadd.f32 %v2660, %v2427
    %v2693 = vadd.f32 %v2661, %v2427
    %v2694 = vadd.f32 %v2662, %v2427
    %v2695 = vadd.f32 %v2663, %v2427
    %v2696 = vadd.f32 %v2664, %v2427
    %v2697 = vadd.f32 %v2665, %v2427
    %v2698 = vadd.f32 %v2666, %v2427
    %v2699 = vld [vmem:[%s6 + $0x6] ss:$0 sm:$0xff]
    %v2700 = vld [vmem:[%s3] sm:$0xff]
    %v2701 = vld [vmem:[%s3 + $0x8] sm:$0xff]
    %v2702 = vld [vmem:[%s3 + $0x10] sm:$0xff]
    %v2703 = vld [vmem:[%s3 + $0x18] sm:$0xff]
    %v2704 = vld [vmem:[%s3 + $0x20] sm:$0xff]
    %v2705 = vld [vmem:[%s3 + $0x28] sm:$0xff]
    %v2706 = vld [vmem:[%s3 + $0x30] sm:$0xff]
    %v2707 = vld [vmem:[%s3 + $0x38] sm:$0xff]
    %v2708 = vld [vmem:[%s3 + $0x40] sm:$0xff]
    %v2709 = vld [vmem:[%s3 + $0x48] sm:$0xff]
    %v2710 = vld [vmem:[%s3 + $0x50] sm:$0xff]
    %v2711 = vld [vmem:[%s3 + $0x58] sm:$0xff]
    %v2712 = vld [vmem:[%s3 + $0x60] sm:$0xff]
    %v2713 = vld [vmem:[%s3 + $0x68] sm:$0xff]
    %v2714 = vld [vmem:[%s3 + $0x70] sm:$0xff]
    %v2715 = vld [vmem:[%s3 + $0x78] sm:$0xff]
    %2716 = vmatprep.subr.mxu0 0.0
    %2717 = vmatpush1.msra.mxu0 %v2715
    %2718 = vmatprep.subr.mxu0 0.0
    %2719 = vmatpush1.msra.mxu0 %v2714
    %2720 = vmatprep.subr.mxu0 0.0
    %2721 = vmatpush1.msra.mxu0 %v2713
    %2722 = vmatprep.subr.mxu0 0.0
    %2723 = vmatpush1.msra.mxu0 %v2712
    %2724 = vmatprep.subr.mxu0 0.0
    %2725 = vmatpush1.msra.mxu0 %v2711
    %2726 = vmatprep.subr.mxu0 0.0
    %2727 = vmatpush1.msra.mxu0 %v2710
    %2728 = vmatprep.subr.mxu0 0.0
    %2729 = vmatpush1.msra.mxu0 %v2709
    %2730 = vmatprep.subr.mxu0 0.0
    %2731 = vmatpush1.msra.mxu0 %v2708
    %2732 = vmatprep.subr.mxu0 0.0
    %2733 = vmatpush1.msra.mxu0 %v2707
    %2734 = vmatprep.subr.mxu0 0.0
    %2735 = vmatpush1.msra.mxu0 %v2706
    %2736 = vmatprep.subr.mxu0 0.0
    %2737 = vmatpush1.msra.mxu0 %v2705
    %2738 = vmatprep.subr.mxu0 0.0
    %2739 = vmatpush1.msra.mxu0 %v2704
    %2740 = vmatprep.subr.mxu0 0.0
    %2741 = vmatpush1.msra.mxu0 %v2703
    %2742 = vmatprep.subr.mxu0 0.0
    %2743 = vmatpush1.msra.mxu0 %v2702
    %2744 = vmatprep.subr.mxu0 0.0
    %2745 = vmatpush1.msra.mxu0 %v2701
    %2746 = vmatprep.subr.mxu0 0.0
    %2747 = vmatpush1.msra.mxu0 %v2700
    %2748 = vmatprep.subr.mxu0 0.0
    %2749 = vmatpush2.msra.mxu0 0.0
    %2750 = vmatprep.subr.mxu0 0.0
    %2751 = vmatpush2.msra.mxu0 0.0
    %2752 = vmatprep.subr.mxu0 0.0
    %2753 = vmatpush2.msra.mxu0 0.0
    %2754 = vmatprep.subr.mxu0 0.0
    %2755 = vmatpush2.msra.mxu0 0.0
    %2756 = vmatprep.subr.mxu0 0.0
    %2757 = vmatpush2.msra.mxu0 0.0
    %2758 = vmatprep.subr.mxu0 0.0
    %2759 = vmatpush2.msra.mxu0 0.0
    %2760 = vmatprep.subr.mxu0 0.0
    %2761 = vmatpush2.msra.mxu0 0.0
    %2762 = vmatprep.subr.mxu0 0.0
    %2763 = vmatpush2.msra.mxu0 0.0
    %2764 = vmatprep.subr.mxu0 0.0
    %2765 = vmatpush2.msra.mxu0 0.0
    %2766 = vmatprep.subr.mxu0 0.0
    %2767 = vmatpush2.msra.mxu0 0.0
    %2768 = vmatprep.subr.mxu0 0.0
    %2769 = vmatpush2.msra.mxu0 0.0
    %2770 = vmatprep.subr.mxu0 0.0
    %2771 = vmatpush2.msra.mxu0 0.0
    %2772 = vmatprep.subr.mxu0 0.0
    %2773 = vmatpush2.msra.mxu0 0.0
    %2774 = vmatprep.subr.mxu0 0.0
    %2775 = vmatpush2.msra.mxu0 0.0
    %2776 = vmatprep.subr.mxu0 0.0
    %2777 = vmatpush2.msra.mxu0 0.0
    %2778 = vmatprep.subr.mxu0 0.0
    %2779 = vmatpush2.msra.mxu0 0.0
    %2780 = vmatprep.mubr.f32.mxu0 0.0
    %2781 = vmatmul.mubr.f32.gmra.mxu0 %v2667
    %v2782 = vpop.f32.mrf.mxu0
    %v2783 = vadd.f32 %v2699, %v2782
    %v2784 = vpop.f32.mrf.mxu0
    %2785 = vmatprep.mubr.f32.mxu0 0.0
    %2786 = vmatmul.mubr.f32.gmra.mxu0 %v2668
    %v2787 = vpop.f32.mrf.mxu0
    %v2788 = vadd.f32 %v2699, %v2787
    %v2789 = vpop.f32.mrf.mxu0
    %2790 = vmatprep.mubr.f32.mxu0 0.0
    %2791 = vmatmul.mubr.f32.gmra.mxu0 %v2669
    %v2792 = vpop.f32.mrf.mxu0
    %v2793 = vadd.f32 %v2699, %v2792
    %v2794 = vpop.f32.mrf.mxu0
    %2795 = vmatprep.mubr.f32.mxu0 0.0
    %2796 = vmatmul.mubr.f32.gmra.mxu0 %v2670
    %v2797 = vpop.f32.mrf.mxu0
    %v2798 = vadd.f32 %v2699, %v2797
    %v2799 = vpop.f32.mrf.mxu0
    %2800 = vmatprep.mubr.f32.mxu0 0.0
    %2801 = vmatmul.mubr.f32.gmra.mxu0 %v2671
    %v2802 = vpop.f32.mrf.mxu0
    %v2803 = vadd.f32 %v2699, %v2802
    %v2804 = vpop.f32.mrf.mxu0
    %2805 = vmatprep.mubr.f32.mxu0 0.0
    %2806 = vmatmul.mubr.f32.gmra.mxu0 %v2672
    %v2807 = vpop.f32.mrf.mxu0
    %v2808 = vadd.f32 %v2699, %v2807
    %v2809 = vpop.f32.mrf.mxu0
    %2810 = vmatprep.mubr.f32.mxu0 0.0
    %2811 = vmatmul.mubr.f32.gmra.mxu0 %v2673
    %v2812 = vpop.f32.mrf.mxu0
    %v2813 = vadd.f32 %v2699, %v2812
    %v2814 = vpop.f32.mrf.mxu0
    %2815 = vmatprep.mubr.f32.mxu0 0.0
    %2816 = vmatmul.mubr.f32.gmra.mxu0 %v2674
    %v2817 = vpop.f32.mrf.mxu0
    %v2818 = vadd.f32 %v2699, %v2817
    %v2819 = vpop.f32.mrf.mxu0
    %2820 = vmatprep.mubr.f32.mxu0 0.0
    %2821 = vmatmul.mubr.f32.gmra.mxu0 %v2675
    %v2822 = vpop.f32.mrf.mxu0
    %v2823 = vadd.f32 %v2699, %v2822
    %v2824 = vpop.f32.mrf.mxu0
    %2825 = vmatprep.mubr.f32.mxu0 0.0
    %2826 = vmatmul.mubr.f32.gmra.mxu0 %v2676
    %v2827 = vpop.f32.mrf.mxu0
    %v2828 = vadd.f32 %v2699, %v2827
    %v2829 = vpop.f32.mrf.mxu0
    %2830 = vmatprep.mubr.f32.mxu0 0.0
    %2831 = vmatmul.mubr.f32.gmra.mxu0 %v2677
    %v2832 = vpop.f32.mrf.mxu0
    %v2833 = vadd.f32 %v2699, %v2832
    %v2834 = vpop.f32.mrf.mxu0
    %2835 = vmatprep.mubr.f32.mxu0 0.0
    %2836 = vmatmul.mubr.f32.gmra.mxu0 %v2678
    %v2837 = vpop.f32.mrf.mxu0
    %v2838 = vadd.f32 %v2699, %v2837
    %v2839 = vpop.f32.mrf.mxu0
    %2840 = vmatprep.mubr.f32.mxu0 0.0
    %2841 = vmatmul.mubr.f32.gmra.mxu0 %v2679
    %v2842 = vpop.f32.mrf.mxu0
    %v2843 = vadd.f32 %v2699, %v2842
    %v2844 = vpop.f32.mrf.mxu0
    %2845 = vmatprep.mubr.f32.mxu0 0.0
    %2846 = vmatmul.mubr.f32.gmra.mxu0 %v2680
    %v2847 = vpop.f32.mrf.mxu0
    %v2848 = vadd.f32 %v2699, %v2847
    %v2849 = vpop.f32.mrf.mxu0
    %2850 = vmatprep.mubr.f32.mxu0 0.0
    %2851 = vmatmul.mubr.f32.gmra.mxu0 %v2681
    %v2852 = vpop.f32.mrf.mxu0
    %v2853 = vadd.f32 %v2699, %v2852
    %v2854 = vpop.f32.mrf.mxu0
    %2855 = vmatprep.mubr.f32.mxu0 0.0
    %2856 = vmatmul.mubr.f32.gmra.mxu0 %v2682
    %v2857 = vpop.f32.mrf.mxu0
    %v2858 = vadd.f32 %v2699, %v2857
    %v2859 = vpop.f32.mrf.mxu0
    %2860 = vmatprep.mubr.f32.mxu0 0.0
    %2861 = vmatmul.mubr.f32.gmra.mxu0 %v2683
    %v2862 = vpop.f32.mrf.mxu0
    %v2863 = vadd.f32 %v2699, %v2862
    %v2864 = vpop.f32.mrf.mxu0
    %2865 = vmatprep.mubr.f32.mxu0 0.0
    %2866 = vmatmul.mubr.f32.gmra.mxu0 %v2684
    %v2867 = vpop.f32.mrf.mxu0
    %v2868 = vadd.f32 %v2699, %v2867
    %v2869 = vpop.f32.mrf.mxu0
    %2870 = vmatprep.mubr.f32.mxu0 0.0
    %2871 = vmatmul.mubr.f32.gmra.mxu0 %v2685
    %v2872 = vpop.f32.mrf.mxu0
    %v2873 = vadd.f32 %v2699, %v2872
    %v2874 = vpop.f32.mrf.mxu0
    %2875 = vmatprep.mubr.f32.mxu0 0.0
    %2876 = vmatmul.mubr.f32.gmra.mxu0 %v2686
    %v2877 = vpop.f32.mrf.mxu0
    %v2878 = vadd.f32 %v2699, %v2877
    %v2879 = vpop.f32.mrf.mxu0
    %2880 = vmatprep.mubr.f32.mxu0 0.0
    %2881 = vmatmul.mubr.f32.gmra.mxu0 %v2687
    %v2882 = vpop.f32.mrf.mxu0
    %v2883 = vadd.f32 %v2699, %v2882
    %v2884 = vpop.f32.mrf.mxu0
    %2885 = vmatprep.mubr.f32.mxu0 0.0
    %2886 = vmatmul.mubr.f32.gmra.mxu0 %v2688
    %v2887 = vpop.f32.mrf.mxu0
    %v2888 = vadd.f32 %v2699, %v2887
    %v2889 = vpop.f32.mrf.mxu0
    %2890 = vmatprep.mubr.f32.mxu0 0.0
    %2891 = vmatmul.mubr.f32.gmra.mxu0 %v2689
    %v2892 = vpop.f32.mrf.mxu0
    %v2893 = vadd.f32 %v2699, %v2892
    %v2894 = vpop.f32.mrf.mxu0
    %2895 = vmatprep.mubr.f32.mxu0 0.0
    %2896 = vmatmul.mubr.f32.gmra.mxu0 %v2690
    %v2897 = vpop.f32.mrf.mxu0
    %v2898 = vadd.f32 %v2699, %v2897
    %v2899 = vpop.f32.mrf.mxu0
    %2900 = vmatprep.mubr.f32.mxu0 0.0
    %2901 = vmatmul.mubr.f32.gmra.mxu0 %v2691
    %v2902 = vpop.f32.mrf.mxu0
    %v2903 = vadd.f32 %v2699, %v2902
    %v2904 = vpop.f32.mrf.mxu0
    %2905 = vmatprep.mubr.f32.mxu0 0.0
    %2906 = vmatmul.mubr.f32.gmra.mxu0 %v2692
    %v2907 = vpop.f32.mrf.mxu0
    %v2908 = vadd.f32 %v2699, %v2907
    %v2909 = vpop.f32.mrf.mxu0
    %2910 = vmatprep.mubr.f32.mxu0 0.0
    %2911 = vmatmul.mubr.f32.gmra.mxu0 %v2693
    %v2912 = vpop.f32.mrf.mxu0
    %v2913 = vadd.f32 %v2699, %v2912
    %v2914 = vpop.f32.mrf.mxu0
    %2915 = vmatprep.mubr.f32.mxu0 0.0
    %2916 = vmatmul.mubr.f32.gmra.mxu0 %v2694
    %v2917 = vpop.f32.mrf.mxu0
    %v2918 = vadd.f32 %v2699, %v2917
    %v2919 = vpop.f32.mrf.mxu0
    %2920 = vmatprep.mubr.f32.mxu0 0.0
    %2921 = vmatmul.mubr.f32.gmra.mxu0 %v2695
    %v2922 = vpop.f32.mrf.mxu0
    %v2923 = vadd.f32 %v2699, %v2922
    %v2924 = vpop.f32.mrf.mxu0
    %2925 = vmatprep.mubr.f32.mxu0 0.0
    %2926 = vmatmul.mubr.f32.gmra.mxu0 %v2696
    %v2927 = vpop.f32.mrf.mxu0
    %v2928 = vadd.f32 %v2699, %v2927
    %v2929 = vpop.f32.mrf.mxu0
    %2930 = vmatprep.mubr.f32.mxu0 0.0
    %2931 = vmatmul.mubr.f32.gmra.mxu0 %v2697
    %v2932 = vpop.f32.mrf.mxu0
    %v2933 = vadd.f32 %v2699, %v2932
    %v2934 = vpop.f32.mrf.mxu0
    %2935 = vmatprep.mubr.f32.mxu0 0.0
    %2936 = vmatmul.mubr.f32.gmra.mxu0 %v2698
    %v2937 = vpop.f32.mrf.mxu0
    %v2938 = vadd.f32 %v2699, %v2937
    %v2939 = vpop.f32.mrf.mxu0
    %2940 = vdwg.mxu0
    %v2941 = vsub.f32 0.0, %v2783
    %v2942 = vsub.f32 0.0, %v2788
    %v2943 = vsub.f32 0.0, %v2793
    %v2944 = vsub.f32 0.0, %v2798
    %v2945 = vsub.f32 0.0, %v2803
    %v2946 = vsub.f32 0.0, %v2808
    %v2947 = vsub.f32 0.0, %v2813
    %v2948 = vsub.f32 0.0, %v2818
    %v2949 = vsub.f32 0.0, %v2823
    %v2950 = vsub.f32 0.0, %v2828
    %v2951 = vsub.f32 0.0, %v2833
    %v2952 = vsub.f32 0.0, %v2838
    %v2953 = vsub.f32 0.0, %v2843
    %v2954 = vsub.f32 0.0, %v2848
    %v2955 = vsub.f32 0.0, %v2853
    %v2956 = vsub.f32 0.0, %v2858
    %v2957 = vsub.f32 0.0, %v2863
    %v2958 = vsub.f32 0.0, %v2868
    %v2959 = vsub.f32 0.0, %v2873
    %v2960 = vsub.f32 0.0, %v2878
    %v2961 = vsub.f32 0.0, %v2883
    %v2962 = vsub.f32 0.0, %v2888
    %v2963 = vsub.f32 0.0, %v2893
    %v2964 = vsub.f32 0.0, %v2898
    %v2965 = vsub.f32 0.0, %v2903
    %v2966 = vsub.f32 0.0, %v2908
    %v2967 = vsub.f32 0.0, %v2913
    %v2968 = vsub.f32 0.0, %v2918
    %v2969 = vsub.f32 0.0, %v2923
    %v2970 = vsub.f32 0.0, %v2928
    %v2971 = vsub.f32 0.0, %v2933
    %v2972 = vsub.f32 0.0, %v2938
    %v2973 = vmul.f32 %v2941, 1.442695
    %v2974 = vpow.pop %v2973
    %v2975 = vmul.f32 %v2942, 1.442695
    %v2976 = vpow.pop %v2975
    %v2977 = vmul.f32 %v2943, 1.442695
    %v2978 = vpow.pop %v2977
    %v2979 = vmul.f32 %v2944, 1.442695
    %v2980 = vpow.pop %v2979
    %v2981 = vmul.f32 %v2945, 1.442695
    %v2982 = vpow.pop %v2981
    %v2983 = vmul.f32 %v2946, 1.442695
    %v2984 = vpow.pop %v2983
    %v2985 = vmul.f32 %v2947, 1.442695
    %v2986 = vpow.pop %v2985
    %v2987 = vmul.f32 %v2948, 1.442695
    %v2988 = vpow.pop %v2987
    %v2989 = vmul.f32 %v2949, 1.442695
    %v2990 = vpow.pop %v2989
    %v2991 = vmul.f32 %v2950, 1.442695
    %v2992 = vpow.pop %v2991
    %v2993 = vmul.f32 %v2951, 1.442695
    %v2994 = vpow.pop %v2993
    %v2995 = vmul.f32 %v2952, 1.442695
    %v2996 = vpow.pop %v2995
    %v2997 = vmul.f32 %v2953, 1.442695
    %v2998 = vpow.pop %v2997
    %v2999 = vmul.f32 %v2954, 1.442695
    %v3000 = vpow.pop %v2999
    %v3001 = vmul.f32 %v2955, 1.442695
    %v3002 = vpow.pop %v3001
    %v3003 = vmul.f32 %v2956, 1.442695
    %v3004 = vpow.pop %v3003
    %v3005 = vmul.f32 %v2957, 1.442695
    %v3006 = vpow.pop %v3005
    %v3007 = vmul.f32 %v2958, 1.442695
    %v3008 = vpow.pop %v3007
    %v3009 = vmul.f32 %v2959, 1.442695
    %v3010 = vpow.pop %v3009
    %v3011 = vmul.f32 %v2960, 1.442695
    %v3012 = vpow.pop %v3011
    %v3013 = vmul.f32 %v2961, 1.442695
    %v3014 = vpow.pop %v3013
    %v3015 = vmul.f32 %v2962, 1.442695
    %v3016 = vpow.pop %v3015
    %v3017 = vmul.f32 %v2963, 1.442695
    %v3018 = vpow.pop %v3017
    %v3019 = vmul.f32 %v2964, 1.442695
    %v3020 = vpow.pop %v3019
    %v3021 = vmul.f32 %v2965, 1.442695
    %v3022 = vpow.pop %v3021
    %v3023 = vmul.f32 %v2966, 1.442695
    %v3024 = vpow.pop %v3023
    %v3025 = vmul.f32 %v2967, 1.442695
    %v3026 = vpow.pop %v3025
    %v3027 = vmul.f32 %v2968, 1.442695
    %v3028 = vpow.pop %v3027
    %v3029 = vmul.f32 %v2969, 1.442695
    %v3030 = vpow.pop %v3029
    %v3031 = vmul.f32 %v2970, 1.442695
    %v3032 = vpow.pop %v3031
    %v3033 = vmul.f32 %v2971, 1.442695
    %v3034 = vpow.pop %v3033
    %v3035 = vmul.f32 %v2972, 1.442695
    %v3036 = vpow.pop %v3035
    %v3037 = vadd.f32 %v2974, 1.0
    %v3038 = vadd.f32 %v2976, 1.0
    %v3039 = vadd.f32 %v2978, 1.0
    %v3040 = vadd.f32 %v2980, 1.0
    %v3041 = vadd.f32 %v2982, 1.0
    %v3042 = vadd.f32 %v2984, 1.0
    %v3043 = vadd.f32 %v2986, 1.0
    %v3044 = vadd.f32 %v2988, 1.0
    %v3045 = vadd.f32 %v2990, 1.0
    %v3046 = vadd.f32 %v2992, 1.0
    %v3047 = vadd.f32 %v2994, 1.0
    %v3048 = vadd.f32 %v2996, 1.0
    %v3049 = vadd.f32 %v2998, 1.0
    %v3050 = vadd.f32 %v3000, 1.0
    %v3051 = vadd.f32 %v3002, 1.0
    %v3052 = vadd.f32 %v3004, 1.0
    %v3053 = vadd.f32 %v3006, 1.0
    %v3054 = vadd.f32 %v3008, 1.0
    %v3055 = vadd.f32 %v3010, 1.0
    %v3056 = vadd.f32 %v3012, 1.0
    %v3057 = vadd.f32 %v3014, 1.0
    %v3058 = vadd.f32 %v3016, 1.0
    %v3059 = vadd.f32 %v3018, 1.0
    %v3060 = vadd.f32 %v3020, 1.0
    %v3061 = vadd.f32 %v3022, 1.0
    %v3062 = vadd.f32 %v3024, 1.0
    %v3063 = vadd.f32 %v3026, 1.0
    %v3064 = vadd.f32 %v3028, 1.0
    %v3065 = vadd.f32 %v3030, 1.0
    %v3066 = vadd.f32 %v3032, 1.0
    %v3067 = vadd.f32 %v3034, 1.0
    %v3068 = vadd.f32 %v3036, 1.0
    %v3069 = vrcp.pop %v3037
    %v3070 = vrcp.pop %v3038
    %v3071 = vrcp.pop %v3039
    %v3072 = vrcp.pop %v3040
    %v3073 = vrcp.pop %v3041
    %v3074 = vrcp.pop %v3042
    %v3075 = vrcp.pop %v3043
    %v3076 = vrcp.pop %v3044
    %v3077 = vrcp.pop %v3045
    %v3078 = vrcp.pop %v3046
    %v3079 = vrcp.pop %v3047
    %v3080 = vrcp.pop %v3048
    %v3081 = vrcp.pop %v3049
    %v3082 = vrcp.pop %v3050
    %v3083 = vrcp.pop %v3051
    %v3084 = vrcp.pop %v3052
    %v3085 = vrcp.pop %v3053
    %v3086 = vrcp.pop %v3054
    %v3087 = vrcp.pop %v3055
    %v3088 = vrcp.pop %v3056
    %v3089 = vrcp.pop %v3057
    %v3090 = vrcp.pop %v3058
    %v3091 = vrcp.pop %v3059
    %v3092 = vrcp.pop %v3060
    %v3093 = vrcp.pop %v3061
    %v3094 = vrcp.pop %v3062
    %v3095 = vrcp.pop %v3063
    %v3096 = vrcp.pop %v3064
    %v3097 = vrcp.pop %v3065
    %v3098 = vrcp.pop %v3066
    %v3099 = vrcp.pop %v3067
    %v3100 = vrcp.pop %v3068
    %v3101 = vmul.f32 %v2783, %v3069
    %v3102 = vmul.f32 %v2788, %v3070
    %v3103 = vmul.f32 %v2793, %v3071
    %v3104 = vmul.f32 %v2798, %v3072
    %v3105 = vmul.f32 %v2803, %v3073
    %v3106 = vmul.f32 %v2808, %v3074
    %v3107 = vmul.f32 %v2813, %v3075
    %v3108 = vmul.f32 %v2818, %v3076
    %v3109 = vmul.f32 %v2823, %v3077
    %v3110 = vmul.f32 %v2828, %v3078
    %v3111 = vmul.f32 %v2833, %v3079
    %v3112 = vmul.f32 %v2838, %v3080
    %v3113 = vmul.f32 %v2843, %v3081
    %v3114 = vmul.f32 %v2848, %v3082
    %v3115 = vmul.f32 %v2853, %v3083
    %v3116 = vmul.f32 %v2858, %v3084
    %v3117 = vmul.f32 %v2863, %v3085
    %v3118 = vmul.f32 %v2868, %v3086
    %v3119 = vmul.f32 %v2873, %v3087
    %v3120 = vmul.f32 %v2878, %v3088
    %v3121 = vmul.f32 %v2883, %v3089
    %v3122 = vmul.f32 %v2888, %v3090
    %v3123 = vmul.f32 %v2893, %v3091
    %v3124 = vmul.f32 %v2898, %v3092
    %v3125 = vmul.f32 %v2903, %v3093
    %v3126 = vmul.f32 %v2908, %v3094
    %v3127 = vmul.f32 %v2913, %v3095
    %v3128 = vmul.f32 %v2918, %v3096
    %v3129 = vmul.f32 %v2923, %v3097
    %v3130 = vmul.f32 %v2928, %v3098
    %v3131 = vmul.f32 %v2933, %v3099
    %v3132 = vmul.f32 %v2938, %v3100
    %v3133 = vld [vmem:[%s6 + $0x7] ss:$0 sm:$0xff]
    %v3134 = vld [vmem:[%s6 + $0x10] ss:$0 sm:$0xff]
    %v3135 = vmul.f32 %v3101, %v124
    %v3136 = vmul.f32 %v3102, %v125
    %v3137 = vmul.f32 %v3103, %v126
    %v3138 = vmul.f32 %v3104, %v127
    %v3139 = vmul.f32 %v3105, %v128
    %v3140 = vmul.f32 %v3106, %v129
    %v3141 = vmul.f32 %v3107, %v130
    %v3142 = vmul.f32 %v3108, %v131
    %v3143 = vmul.f32 %v3109, %v132
    %v3144 = vmul.f32 %v3110, %v133
    %v3145 = vmul.f32 %v3111, %v134
    %v3146 = vmul.f32 %v3112, %v135
    %v3147 = vmul.f32 %v3113, %v136
    %v3148 = vmul.f32 %v3114, %v137
    %v3149 = vmul.f32 %v3115, %v138
    %v3150 = vmul.f32 %v3116, %v139
    %v3151 = vmul.f32 %v3117, %v140
    %v3152 = vmul.f32 %v3118, %v141
    %v3153 = vmul.f32 %v3119, %v142
    %v3154 = vmul.f32 %v3120, %v143
    %v3155 = vmul.f32 %v3121, %v144
    %v3156 = vmul.f32 %v3122, %v145
    %v3157 = vmul.f32 %v3123, %v146
    %v3158 = vmul.f32 %v3124, %v147
    %v3159 = vmul.f32 %v3125, %v148
    %v3160 = vmul.f32 %v3126, %v149
    %v3161 = vmul.f32 %v3127, %v150
    %v3162 = vmul.f32 %v3128, %v151
    %v3163 = vmul.f32 %v3129, %v152
    %v3164 = vmul.f32 %v3130, %v153
    %v3165 = vmul.f32 %v3131, %v154
    %v3166 = vmul.f32 %v3132, %v155
    %v3167 = vadd.f32 %v3135, %v3136
    %v3168 = vadd.f32 %v3167, %v3137
    %v3169 = vadd.f32 %v3168, %v3138
    %v3170 = vadd.f32 %v3169, %v3139
    %v3171 = vadd.f32 %v3170, %v3140
    %v3172 = vadd.f32 %v3171, %v3141
    %v3173 = vadd.f32 %v3172, %v3142
    %v3174 = vadd.f32 %v3173, %v3143
    %v3175 = vadd.f32 %v3174, %v3144
    %v3176 = vadd.f32 %v3175, %v3145
    %v3177 = vadd.f32 %v3176, %v3146
    %v3178 = vadd.f32 %v3177, %v3147
    %v3179 = vadd.f32 %v3178, %v3148
    %v3180 = vadd.f32 %v3179, %v3149
    %v3181 = vadd.f32 %v3180, %v3150
    %v3182 = vadd.f32 %v3181, %v3151
    %v3183 = vadd.f32 %v3182, %v3152
    %v3184 = vadd.f32 %v3183, %v3153
    %v3185 = vadd.f32 %v3184, %v3154
    %v3186 = vadd.f32 %v3185, %v3155
    %v3187 = vadd.f32 %v3186, %v3156
    %v3188 = vadd.f32 %v3187, %v3157
    %v3189 = vadd.f32 %v3188, %v3158
    %v3190 = vadd.f32 %v3189, %v3159
    %v3191 = vadd.f32 %v3190, %v3160
    %v3192 = vadd.f32 %v3191, %v3161
    %v3193 = vadd.f32 %v3192, %v3162
    %v3194 = vadd.f32 %v3193, %v3163
    %v3195 = vadd.f32 %v3194, %v3164
    %v3196 = vadd.f32 %v3195, %v3165
    %v3197 = vadd.f32 %v3196, %v3166
    %v3198 = vrot.slane %v3197, 4
    %v3199 = vadd.f32 %v3197, %v3198
    %v3200 = vrot.slane %v3199, 2
    %v3201 = vadd.f32 %v3199, %v3200
    %v3202 = vrot.slane %v3201, 1
    %v3203 = vadd.f32 %v3201, %v3202
    %v3204 = vmul.f32 %v3203, 0.005
    %v3205 = vsub.f32 %v3101, %v3204
    %v3206 = vsub.f32 %v3102, %v3204
    %v3207 = vsub.f32 %v3103, %v3204
    %v3208 = vsub.f32 %v3104, %v3204
    %v3209 = vsub.f32 %v3105, %v3204
    %v3210 = vsub.f32 %v3106, %v3204
    %v3211 = vsub.f32 %v3107, %v3204
    %v3212 = vsub.f32 %v3108, %v3204
    %v3213 = vsub.f32 %v3109, %v3204
    %v3214 = vsub.f32 %v3110, %v3204
    %v3215 = vsub.f32 %v3111, %v3204
    %v3216 = vsub.f32 %v3112, %v3204
    %v3217 = vsub.f32 %v3113, %v3204
    %v3218 = vsub.f32 %v3114, %v3204
    %v3219 = vsub.f32 %v3115, %v3204
    %v3220 = vsub.f32 %v3116, %v3204
    %v3221 = vsub.f32 %v3117, %v3204
    %v3222 = vsub.f32 %v3118, %v3204
    %v3223 = vsub.f32 %v3119, %v3204
    %v3224 = vsub.f32 %v3120, %v3204
    %v3225 = vsub.f32 %v3121, %v3204
    %v3226 = vsub.f32 %v3122, %v3204
    %v3227 = vsub.f32 %v3123, %v3204
    %v3228 = vsub.f32 %v3124, %v3204
    %v3229 = vsub.f32 %v3125, %v3204
    %v3230 = vsub.f32 %v3126, %v3204
    %v3231 = vsub.f32 %v3127, %v3204
    %v3232 = vsub.f32 %v3128, %v3204
    %v3233 = vsub.f32 %v3129, %v3204
    %v3234 = vsub.f32 %v3130, %v3204
    %v3235 = vsub.f32 %v3131, %v3204
    %v3236 = vsub.f32 %v3132, %v3204
    %v3237 = vmul.f32 %v3205, %v124
    %v3238 = vmul.f32 %v3206, %v125
    %v3239 = vmul.f32 %v3207, %v126
    %v3240 = vmul.f32 %v3208, %v127
    %v3241 = vmul.f32 %v3209, %v128
    %v3242 = vmul.f32 %v3210, %v129
    %v3243 = vmul.f32 %v3211, %v130
    %v3244 = vmul.f32 %v3212, %v131
    %v3245 = vmul.f32 %v3213, %v132
    %v3246 = vmul.f32 %v3214, %v133
    %v3247 = vmul.f32 %v3215, %v134
    %v3248 = vmul.f32 %v3216, %v135
    %v3249 = vmul.f32 %v3217, %v136
    %v3250 = vmul.f32 %v3218, %v137
    %v3251 = vmul.f32 %v3219, %v138
    %v3252 = vmul.f32 %v3220, %v139
    %v3253 = vmul.f32 %v3221, %v140
    %v3254 = vmul.f32 %v3222, %v141
    %v3255 = vmul.f32 %v3223, %v142
    %v3256 = vmul.f32 %v3224, %v143
    %v3257 = vmul.f32 %v3225, %v144
    %v3258 = vmul.f32 %v3226, %v145
    %v3259 = vmul.f32 %v3227, %v146
    %v3260 = vmul.f32 %v3228, %v147
    %v3261 = vmul.f32 %v3229, %v148
    %v3262 = vmul.f32 %v3230, %v149
    %v3263 = vmul.f32 %v3231, %v150
    %v3264 = vmul.f32 %v3232, %v151
    %v3265 = vmul.f32 %v3233, %v152
    %v3266 = vmul.f32 %v3234, %v153
    %v3267 = vmul.f32 %v3235, %v154
    %v3268 = vmul.f32 %v3236, %v155
    %v3269 = vmul.f32 %v3237, %v3237
    %v3270 = vmul.f32 %v3238, %v3238
    %v3271 = vmul.f32 %v3239, %v3239
    %v3272 = vmul.f32 %v3240, %v3240
    %v3273 = vmul.f32 %v3241, %v3241
    %v3274 = vmul.f32 %v3242, %v3242
    %v3275 = vmul.f32 %v3243, %v3243
    %v3276 = vmul.f32 %v3244, %v3244
    %v3277 = vmul.f32 %v3245, %v3245
    %v3278 = vmul.f32 %v3246, %v3246
    %v3279 = vmul.f32 %v3247, %v3247
    %v3280 = vmul.f32 %v3248, %v3248
    %v3281 = vmul.f32 %v3249, %v3249
    %v3282 = vmul.f32 %v3250, %v3250
    %v3283 = vmul.f32 %v3251, %v3251
    %v3284 = vmul.f32 %v3252, %v3252
    %v3285 = vmul.f32 %v3253, %v3253
    %v3286 = vmul.f32 %v3254, %v3254
    %v3287 = vmul.f32 %v3255, %v3255
    %v3288 = vmul.f32 %v3256, %v3256
    %v3289 = vmul.f32 %v3257, %v3257
    %v3290 = vmul.f32 %v3258, %v3258
    %v3291 = vmul.f32 %v3259, %v3259
    %v3292 = vmul.f32 %v3260, %v3260
    %v3293 = vmul.f32 %v3261, %v3261
    %v3294 = vmul.f32 %v3262, %v3262
    %v3295 = vmul.f32 %v3263, %v3263
    %v3296 = vmul.f32 %v3264, %v3264
    %v3297 = vmul.f32 %v3265, %v3265
    %v3298 = vmul.f32 %v3266, %v3266
    %v3299 = vmul.f32 %v3267, %v3267
    %v3300 = vmul.f32 %v3268, %v3268
    %v3301 = vadd.f32 %v3269, %v3270
    %v3302 = vadd.f32 %v3301, %v3271
    %v3303 = vadd.f32 %v3302, %v3272
    %v3304 = vadd.f32 %v3303, %v3273
    %v3305 = vadd.f32 %v3304, %v3274
    %v3306 = vadd.f32 %v3305, %v3275
    %v3307 = vadd.f32 %v3306, %v3276
    %v3308 = vadd.f32 %v3307, %v3277
    %v3309 = vadd.f32 %v3308, %v3278
    %v3310 = vadd.f32 %v3309, %v3279
    %v3311 = vadd.f32 %v3310, %v3280
    %v3312 = vadd.f32 %v3311, %v3281
    %v3313 = vadd.f32 %v3312, %v3282
    %v3314 = vadd.f32 %v3313, %v3283
    %v3315 = vadd.f32 %v3314, %v3284
    %v3316 = vadd.f32 %v3315, %v3285
    %v3317 = vadd.f32 %v3316, %v3286
    %v3318 = vadd.f32 %v3317, %v3287
    %v3319 = vadd.f32 %v3318, %v3288
    %v3320 = vadd.f32 %v3319, %v3289
    %v3321 = vadd.f32 %v3320, %v3290
    %v3322 = vadd.f32 %v3321, %v3291
    %v3323 = vadd.f32 %v3322, %v3292
    %v3324 = vadd.f32 %v3323, %v3293
    %v3325 = vadd.f32 %v3324, %v3294
    %v3326 = vadd.f32 %v3325, %v3295
    %v3327 = vadd.f32 %v3326, %v3296
    %v3328 = vadd.f32 %v3327, %v3297
    %v3329 = vadd.f32 %v3328, %v3298
    %v3330 = vadd.f32 %v3329, %v3299
    %v3331 = vadd.f32 %v3330, %v3300
    %v3332 = vrot.slane %v3331, 4
    %v3333 = vadd.f32 %v3331, %v3332
    %v3334 = vrot.slane %v3333, 2
    %v3335 = vadd.f32 %v3333, %v3334
    %v3336 = vrot.slane %v3335, 1
    %v3337 = vadd.f32 %v3335, %v3336
    %v3338 = vmul.f32 %v3337, 0.005
    %v3339 = vadd.f32 %v3338, 1e-05
    %v3340 = vrsqrt.pop %v3339
    %v3341 = vmul.f32 %v3340, %v3133
    %v3342 = vmul.f32 %v3205, %v3341
    %v3343 = vmul.f32 %v3206, %v3341
    %v3344 = vmul.f32 %v3207, %v3341
    %v3345 = vmul.f32 %v3208, %v3341
    %v3346 = vmul.f32 %v3209, %v3341
    %v3347 = vmul.f32 %v3210, %v3341
    %v3348 = vmul.f32 %v3211, %v3341
    %v3349 = vmul.f32 %v3212, %v3341
    %v3350 = vmul.f32 %v3213, %v3341
    %v3351 = vmul.f32 %v3214, %v3341
    %v3352 = vmul.f32 %v3215, %v3341
    %v3353 = vmul.f32 %v3216, %v3341
    %v3354 = vmul.f32 %v3217, %v3341
    %v3355 = vmul.f32 %v3218, %v3341
    %v3356 = vmul.f32 %v3219, %v3341
    %v3357 = vmul.f32 %v3220, %v3341
    %v3358 = vmul.f32 %v3221, %v3341
    %v3359 = vmul.f32 %v3222, %v3341
    %v3360 = vmul.f32 %v3223, %v3341
    %v3361 = vmul.f32 %v3224, %v3341
    %v3362 = vmul.f32 %v3225, %v3341
    %v3363 = vmul.f32 %v3226, %v3341
    %v3364 = vmul.f32 %v3227, %v3341
    %v3365 = vmul.f32 %v3228, %v3341
    %v3366 = vmul.f32 %v3229, %v3341
    %v3367 = vmul.f32 %v3230, %v3341
    %v3368 = vmul.f32 %v3231, %v3341
    %v3369 = vmul.f32 %v3232, %v3341
    %v3370 = vmul.f32 %v3233, %v3341
    %v3371 = vmul.f32 %v3234, %v3341
    %v3372 = vmul.f32 %v3235, %v3341
    %v3373 = vmul.f32 %v3236, %v3341
    %v3374 = vadd.f32 %v3342, %v3134
    %v3375 = vadd.f32 %v3343, %v3134
    %v3376 = vadd.f32 %v3344, %v3134
    %v3377 = vadd.f32 %v3345, %v3134
    %v3378 = vadd.f32 %v3346, %v3134
    %v3379 = vadd.f32 %v3347, %v3134
    %v3380 = vadd.f32 %v3348, %v3134
    %v3381 = vadd.f32 %v3349, %v3134
    %v3382 = vadd.f32 %v3350, %v3134
    %v3383 = vadd.f32 %v3351, %v3134
    %v3384 = vadd.f32 %v3352, %v3134
    %v3385 = vadd.f32 %v3353, %v3134
    %v3386 = vadd.f32 %v3354, %v3134
    %v3387 = vadd.f32 %v3355, %v3134
    %v3388 = vadd.f32 %v3356, %v3134
    %v3389 = vadd.f32 %v3357, %v3134
    %v3390 = vadd.f32 %v3358, %v3134
    %v3391 = vadd.f32 %v3359, %v3134
    %v3392 = vadd.f32 %v3360, %v3134
    %v3393 = vadd.f32 %v3361, %v3134
    %v3394 = vadd.f32 %v3362, %v3134
    %v3395 = vadd.f32 %v3363, %v3134
    %v3396 = vadd.f32 %v3364, %v3134
    %v3397 = vadd.f32 %v3365, %v3134
    %v3398 = vadd.f32 %v3366, %v3134
    %v3399 = vadd.f32 %v3367, %v3134
    %v3400 = vadd.f32 %v3368, %v3134
    %v3401 = vadd.f32 %v3369, %v3134
    %v3402 = vadd.f32 %v3370, %v3134
    %v3403 = vadd.f32 %v3371, %v3134
    %v3404 = vadd.f32 %v3372, %v3134
    %v3405 = vadd.f32 %v3373, %v3134
    %v3406 = vld [vmem:[%s6 + $0x11] ss:$0 sm:$0xff]
    %v3407 = vld [vmem:[%s4] sm:$0xff]
    %v3408 = vld [vmem:[%s4 + $0x8] sm:$0xff]
    %v3409 = vld [vmem:[%s4 + $0x10] sm:$0xff]
    %v3410 = vld [vmem:[%s4 + $0x18] sm:$0xff]
    %v3411 = vld [vmem:[%s4 + $0x20] sm:$0xff]
    %v3412 = vld [vmem:[%s4 + $0x28] sm:$0xff]
    %v3413 = vld [vmem:[%s4 + $0x30] sm:$0xff]
    %v3414 = vld [vmem:[%s4 + $0x38] sm:$0xff]
    %v3415 = vld [vmem:[%s4 + $0x40] sm:$0xff]
    %v3416 = vld [vmem:[%s4 + $0x48] sm:$0xff]
    %v3417 = vld [vmem:[%s4 + $0x50] sm:$0xff]
    %v3418 = vld [vmem:[%s4 + $0x58] sm:$0xff]
    %v3419 = vld [vmem:[%s4 + $0x60] sm:$0xff]
    %v3420 = vld [vmem:[%s4 + $0x68] sm:$0xff]
    %v3421 = vld [vmem:[%s4 + $0x70] sm:$0xff]
    %v3422 = vld [vmem:[%s4 + $0x78] sm:$0xff]
    %3423 = vmatprep.subr.mxu0 0.0
    %3424 = vmatpush1.msra.mxu0 %v3422
    %3425 = vmatprep.subr.mxu0 0.0
    %3426 = vmatpush1.msra.mxu0 %v3421
    %3427 = vmatprep.subr.mxu0 0.0
    %3428 = vmatpush1.msra.mxu0 %v3420
    %3429 = vmatprep.subr.mxu0 0.0
    %3430 = vmatpush1.msra.mxu0 %v3419
    %3431 = vmatprep.subr.mxu0 0.0
    %3432 = vmatpush1.msra.mxu0 %v3418
    %3433 = vmatprep.subr.mxu0 0.0
    %3434 = vmatpush1.msra.mxu0 %v3417
    %3435 = vmatprep.subr.mxu0 0.0
    %3436 = vmatpush1.msra.mxu0 %v3416
    %3437 = vmatprep.subr.mxu0 0.0
    %3438 = vmatpush1.msra.mxu0 %v3415
    %3439 = vmatprep.subr.mxu0 0.0
    %3440 = vmatpush1.msra.mxu0 %v3414
    %3441 = vmatprep.subr.mxu0 0.0
    %3442 = vmatpush1.msra.mxu0 %v3413
    %3443 = vmatprep.subr.mxu0 0.0
    %3444 = vmatpush1.msra.mxu0 %v3412
    %3445 = vmatprep.subr.mxu0 0.0
    %3446 = vmatpush1.msra.mxu0 %v3411
    %3447 = vmatprep.subr.mxu0 0.0
    %3448 = vmatpush1.msra.mxu0 %v3410
    %3449 = vmatprep.subr.mxu0 0.0
    %3450 = vmatpush1.msra.mxu0 %v3409
    %3451 = vmatprep.subr.mxu0 0.0
    %3452 = vmatpush1.msra.mxu0 %v3408
    %3453 = vmatprep.subr.mxu0 0.0
    %3454 = vmatpush1.msra.mxu0 %v3407
    %3455 = vmatprep.subr.mxu0 0.0
    %3456 = vmatpush2.msra.mxu0 0.0
    %3457 = vmatprep.subr.mxu0 0.0
    %3458 = vmatpush2.msra.mxu0 0.0
    %3459 = vmatprep.subr.mxu0 0.0
    %3460 = vmatpush2.msra.mxu0 0.0
    %3461 = vmatprep.subr.mxu0 0.0
    %3462 = vmatpush2.msra.mxu0 0.0
    %3463 = vmatprep.subr.mxu0 0.0
    %3464 = vmatpush2.msra.mxu0 0.0
    %3465 = vmatprep.subr.mxu0 0.0
    %3466 = vmatpush2.msra.mxu0 0.0
    %3467 = vmatprep.subr.mxu0 0.0
    %3468 = vmatpush2.msra.mxu0 0.0
    %3469 = vmatprep.subr.mxu0 0.0
    %3470 = vmatpush2.msra.mxu0 0.0
    %3471 = vmatprep.subr.mxu0 0.0
    %3472 = vmatpush2.msra.mxu0 0.0
    %3473 = vmatprep.subr.mxu0 0.0
    %3474 = vmatpush2.msra.mxu0 0.0
    %3475 = vmatprep.subr.mxu0 0.0
    %3476 = vmatpush2.msra.mxu0 0.0
    %3477 = vmatprep.subr.mxu0 0.0
    %3478 = vmatpush2.msra.mxu0 0.0
    %3479 = vmatprep.subr.mxu0 0.0
    %3480 = vmatpush2.msra.mxu0 0.0
    %3481 = vmatprep.subr.mxu0 0.0
    %3482 = vmatpush2.msra.mxu0 0.0
    %3483 = vmatprep.subr.mxu0 0.0
    %3484 = vmatpush2.msra.mxu0 0.0
    %3485 = vmatprep.subr.mxu0 0.0
    %3486 = vmatpush2.msra.mxu0 0.0
    %3487 = vmatprep.mubr.f32.mxu0 0.0
    %3488 = vmatmul.mubr.f32.gmra.mxu0 %v3374
    %v3489 = vpop.f32.mrf.mxu0
    %v3490 = vadd.f32 %v3406, %v3489
    %v3491 = vpop.f32.mrf.mxu0
    %3492 = vmatprep.mubr.f32.mxu0 0.0
    %3493 = vmatmul.mubr.f32.gmra.mxu0 %v3375
    %v3494 = vpop.f32.mrf.mxu0
    %v3495 = vadd.f32 %v3406, %v3494
    %v3496 = vpop.f32.mrf.mxu0
    %3497 = vmatprep.mubr.f32.mxu0 0.0
    %3498 = vmatmul.mubr.f32.gmra.mxu0 %v3376
    %v3499 = vpop.f32.mrf.mxu0
    %v3500 = vadd.f32 %v3406, %v3499
    %v3501 = vpop.f32.mrf.mxu0
    %3502 = vmatprep.mubr.f32.mxu0 0.0
    %3503 = vmatmul.mubr.f32.gmra.mxu0 %v3377
    %v3504 = vpop.f32.mrf.mxu0
    %v3505 = vadd.f32 %v3406, %v3504
    %v3506 = vpop.f32.mrf.mxu0
    %3507 = vmatprep.mubr.f32.mxu0 0.0
    %3508 = vmatmul.mubr.f32.gmra.mxu0 %v3378
    %v3509 = vpop.f32.mrf.mxu0
    %v3510 = vadd.f32 %v3406, %v3509
    %v3511 = vpop.f32.mrf.mxu0
    %3512 = vmatprep.mubr.f32.mxu0 0.0
    %3513 = vmatmul.mubr.f32.gmra.mxu0 %v3379
    %v3514 = vpop.f32.mrf.mxu0
    %v3515 = vadd.f32 %v3406, %v3514
    %v3516 = vpop.f32.mrf.mxu0
    %3517 = vmatprep.mubr.f32.mxu0 0.0
    %3518 = vmatmul.mubr.f32.gmra.mxu0 %v3380
    %v3519 = vpop.f32.mrf.mxu0
    %v3520 = vadd.f32 %v3406, %v3519
    %v3521 = vpop.f32.mrf.mxu0
    %3522 = vmatprep.mubr.f32.mxu0 0.0
    %3523 = vmatmul.mubr.f32.gmra.mxu0 %v3381
    %v3524 = vpop.f32.mrf.mxu0
    %v3525 = vadd.f32 %v3406, %v3524
    %v3526 = vpop.f32.mrf.mxu0
    %3527 = vmatprep.mubr.f32.mxu0 0.0
    %3528 = vmatmul.mubr.f32.gmra.mxu0 %v3382
    %v3529 = vpop.f32.mrf.mxu0
    %v3530 = vadd.f32 %v3406, %v3529
    %v3531 = vpop.f32.mrf.mxu0
    %3532 = vmatprep.mubr.f32.mxu0 0.0
    %3533 = vmatmul.mubr.f32.gmra.mxu0 %v3383
    %v3534 = vpop.f32.mrf.mxu0
    %v3535 = vadd.f32 %v3406, %v3534
    %v3536 = vpop.f32.mrf.mxu0
    %3537 = vmatprep.mubr.f32.mxu0 0.0
    %3538 = vmatmul.mubr.f32.gmra.mxu0 %v3384
    %v3539 = vpop.f32.mrf.mxu0
    %v3540 = vadd.f32 %v3406, %v3539
    %v3541 = vpop.f32.mrf.mxu0
    %3542 = vmatprep.mubr.f32.mxu0 0.0
    %3543 = vmatmul.mubr.f32.gmra.mxu0 %v3385
    %v3544 = vpop.f32.mrf.mxu0
    %v3545 = vadd.f32 %v3406, %v3544
    %v3546 = vpop.f32.mrf.mxu0
    %3547 = vmatprep.mubr.f32.mxu0 0.0
    %3548 = vmatmul.mubr.f32.gmra.mxu0 %v3386
    %v3549 = vpop.f32.mrf.mxu0
    %v3550 = vadd.f32 %v3406, %v3549
    %v3551 = vpop.f32.mrf.mxu0
    %3552 = vmatprep.mubr.f32.mxu0 0.0
    %3553 = vmatmul.mubr.f32.gmra.mxu0 %v3387
    %v3554 = vpop.f32.mrf.mxu0
    %v3555 = vadd.f32 %v3406, %v3554
    %v3556 = vpop.f32.mrf.mxu0
    %3557 = vmatprep.mubr.f32.mxu0 0.0
    %3558 = vmatmul.mubr.f32.gmra.mxu0 %v3388
    %v3559 = vpop.f32.mrf.mxu0
    %v3560 = vadd.f32 %v3406, %v3559
    %v3561 = vpop.f32.mrf.mxu0
    %3562 = vmatprep.mubr.f32.mxu0 0.0
    %3563 = vmatmul.mubr.f32.gmra.mxu0 %v3389
    %v3564 = vpop.f32.mrf.mxu0
    %v3565 = vadd.f32 %v3406, %v3564
    %v3566 = vpop.f32.mrf.mxu0
    %3567 = vmatprep.mubr.f32.mxu0 0.0
    %3568 = vmatmul.mubr.f32.gmra.mxu0 %v3390
    %v3569 = vpop.f32.mrf.mxu0
    %v3570 = vadd.f32 %v3406, %v3569
    %v3571 = vpop.f32.mrf.mxu0
    %3572 = vmatprep.mubr.f32.mxu0 0.0
    %3573 = vmatmul.mubr.f32.gmra.mxu0 %v3391
    %v3574 = vpop.f32.mrf.mxu0
    %v3575 = vadd.f32 %v3406, %v3574
    %v3576 = vpop.f32.mrf.mxu0
    %3577 = vmatprep.mubr.f32.mxu0 0.0
    %3578 = vmatmul.mubr.f32.gmra.mxu0 %v3392
    %v3579 = vpop.f32.mrf.mxu0
    %v3580 = vadd.f32 %v3406, %v3579
    %v3581 = vpop.f32.mrf.mxu0
    %3582 = vmatprep.mubr.f32.mxu0 0.0
    %3583 = vmatmul.mubr.f32.gmra.mxu0 %v3393
    %v3584 = vpop.f32.mrf.mxu0
    %v3585 = vadd.f32 %v3406, %v3584
    %v3586 = vpop.f32.mrf.mxu0
    %3587 = vmatprep.mubr.f32.mxu0 0.0
    %3588 = vmatmul.mubr.f32.gmra.mxu0 %v3394
    %v3589 = vpop.f32.mrf.mxu0
    %v3590 = vadd.f32 %v3406, %v3589
    %v3591 = vpop.f32.mrf.mxu0
    %3592 = vmatprep.mubr.f32.mxu0 0.0
    %3593 = vmatmul.mubr.f32.gmra.mxu0 %v3395
    %v3594 = vpop.f32.mrf.mxu0
    %v3595 = vadd.f32 %v3406, %v3594
    %v3596 = vpop.f32.mrf.mxu0
    %3597 = vmatprep.mubr.f32.mxu0 0.0
    %3598 = vmatmul.mubr.f32.gmra.mxu0 %v3396
    %v3599 = vpop.f32.mrf.mxu0
    %v3600 = vadd.f32 %v3406, %v3599
    %v3601 = vpop.f32.mrf.mxu0
    %3602 = vmatprep.mubr.f32.mxu0 0.0
    %3603 = vmatmul.mubr.f32.gmra.mxu0 %v3397
    %v3604 = vpop.f32.mrf.mxu0
    %v3605 = vadd.f32 %v3406, %v3604
    %v3606 = vpop.f32.mrf.mxu0
    %3607 = vmatprep.mubr.f32.mxu0 0.0
    %3608 = vmatmul.mubr.f32.gmra.mxu0 %v3398
    %v3609 = vpop.f32.mrf.mxu0
    %v3610 = vadd.f32 %v3406, %v3609
    %v3611 = vpop.f32.mrf.mxu0
    %3612 = vmatprep.mubr.f32.mxu0 0.0
    %3613 = vmatmul.mubr.f32.gmra.mxu0 %v3399
    %v3614 = vpop.f32.mrf.mxu0
    %v3615 = vadd.f32 %v3406, %v3614
    %v3616 = vpop.f32.mrf.mxu0
    %3617 = vmatprep.mubr.f32.mxu0 0.0
    %3618 = vmatmul.mubr.f32.gmra.mxu0 %v3400
    %v3619 = vpop.f32.mrf.mxu0
    %v3620 = vadd.f32 %v3406, %v3619
    %v3621 = vpop.f32.mrf.mxu0
    %3622 = vmatprep.mubr.f32.mxu0 0.0
    %3623 = vmatmul.mubr.f32.gmra.mxu0 %v3401
    %v3624 = vpop.f32.mrf.mxu0
    %v3625 = vadd.f32 %v3406, %v3624
    %v3626 = vpop.f32.mrf.mxu0
    %3627 = vmatprep.mubr.f32.mxu0 0.0
    %3628 = vmatmul.mubr.f32.gmra.mxu0 %v3402
    %v3629 = vpop.f32.mrf.mxu0
    %v3630 = vadd.f32 %v3406, %v3629
    %v3631 = vpop.f32.mrf.mxu0
    %3632 = vmatprep.mubr.f32.mxu0 0.0
    %3633 = vmatmul.mubr.f32.gmra.mxu0 %v3403
    %v3634 = vpop.f32.mrf.mxu0
    %v3635 = vadd.f32 %v3406, %v3634
    %v3636 = vpop.f32.mrf.mxu0
    %3637 = vmatprep.mubr.f32.mxu0 0.0
    %3638 = vmatmul.mubr.f32.gmra.mxu0 %v3404
    %v3639 = vpop.f32.mrf.mxu0
    %v3640 = vadd.f32 %v3406, %v3639
    %v3641 = vpop.f32.mrf.mxu0
    %3642 = vmatprep.mubr.f32.mxu0 0.0
    %3643 = vmatmul.mubr.f32.gmra.mxu0 %v3405
    %v3644 = vpop.f32.mrf.mxu0
    %v3645 = vadd.f32 %v3406, %v3644
    %v3646 = vpop.f32.mrf.mxu0
    %3647 = vdwg.mxu0
    %v3648 = vsub.f32 0.0, %v3490
    %v3649 = vsub.f32 0.0, %v3495
    %v3650 = vsub.f32 0.0, %v3500
    %v3651 = vsub.f32 0.0, %v3505
    %v3652 = vsub.f32 0.0, %v3510
    %v3653 = vsub.f32 0.0, %v3515
    %v3654 = vsub.f32 0.0, %v3520
    %v3655 = vsub.f32 0.0, %v3525
    %v3656 = vsub.f32 0.0, %v3530
    %v3657 = vsub.f32 0.0, %v3535
    %v3658 = vsub.f32 0.0, %v3540
    %v3659 = vsub.f32 0.0, %v3545
    %v3660 = vsub.f32 0.0, %v3550
    %v3661 = vsub.f32 0.0, %v3555
    %v3662 = vsub.f32 0.0, %v3560
    %v3663 = vsub.f32 0.0, %v3565
    %v3664 = vsub.f32 0.0, %v3570
    %v3665 = vsub.f32 0.0, %v3575
    %v3666 = vsub.f32 0.0, %v3580
    %v3667 = vsub.f32 0.0, %v3585
    %v3668 = vsub.f32 0.0, %v3590
    %v3669 = vsub.f32 0.0, %v3595
    %v3670 = vsub.f32 0.0, %v3600
    %v3671 = vsub.f32 0.0, %v3605
    %v3672 = vsub.f32 0.0, %v3610
    %v3673 = vsub.f32 0.0, %v3615
    %v3674 = vsub.f32 0.0, %v3620
    %v3675 = vsub.f32 0.0, %v3625
    %v3676 = vsub.f32 0.0, %v3630
    %v3677 = vsub.f32 0.0, %v3635
    %v3678 = vsub.f32 0.0, %v3640
    %v3679 = vsub.f32 0.0, %v3645
    %v3680 = vmul.f32 %v3648, 1.442695
    %v3681 = vpow.pop %v3680
    %v3682 = vmul.f32 %v3649, 1.442695
    %v3683 = vpow.pop %v3682
    %v3684 = vmul.f32 %v3650, 1.442695
    %v3685 = vpow.pop %v3684
    %v3686 = vmul.f32 %v3651, 1.442695
    %v3687 = vpow.pop %v3686
    %v3688 = vmul.f32 %v3652, 1.442695
    %v3689 = vpow.pop %v3688
    %v3690 = vmul.f32 %v3653, 1.442695
    %v3691 = vpow.pop %v3690
    %v3692 = vmul.f32 %v3654, 1.442695
    %v3693 = vpow.pop %v3692
    %v3694 = vmul.f32 %v3655, 1.442695
    %v3695 = vpow.pop %v3694
    %v3696 = vmul.f32 %v3656, 1.442695
    %v3697 = vpow.pop %v3696
    %v3698 = vmul.f32 %v3657, 1.442695
    %v3699 = vpow.pop %v3698
    %v3700 = vmul.f32 %v3658, 1.442695
    %v3701 = vpow.pop %v3700
    %v3702 = vmul.f32 %v3659, 1.442695
    %v3703 = vpow.pop %v3702
    %v3704 = vmul.f32 %v3660, 1.442695
    %v3705 = vpow.pop %v3704
    %v3706 = vmul.f32 %v3661, 1.442695
    %v3707 = vpow.pop %v3706
    %v3708 = vmul.f32 %v3662, 1.442695
    %v3709 = vpow.pop %v3708
    %v3710 = vmul.f32 %v3663, 1.442695
    %v3711 = vpow.pop %v3710
    %v3712 = vmul.f32 %v3664, 1.442695
    %v3713 = vpow.pop %v3712
    %v3714 = vmul.f32 %v3665, 1.442695
    %v3715 = vpow.pop %v3714
    %v3716 = vmul.f32 %v3666, 1.442695
    %v3717 = vpow.pop %v3716
    %v3718 = vmul.f32 %v3667, 1.442695
    %v3719 = vpow.pop %v3718
    %v3720 = vmul.f32 %v3668, 1.442695
    %v3721 = vpow.pop %v3720
    %v3722 = vmul.f32 %v3669, 1.442695
    %v3723 = vpow.pop %v3722
    %v3724 = vmul.f32 %v3670, 1.442695
    %v3725 = vpow.pop %v3724
    %v3726 = vmul.f32 %v3671, 1.442695
    %v3727 = vpow.pop %v3726
    %v3728 = vmul.f32 %v3672, 1.442695
    %v3729 = vpow.pop %v3728
    %v3730 = vmul.f32 %v3673, 1.442695
    %v3731 = vpow.pop %v3730
    %v3732 = vmul.f32 %v3674, 1.442695
    %v3733 = vpow.pop %v3732
    %v3734 = vmul.f32 %v3675, 1.442695
    %v3735 = vpow.pop %v3734
    %v3736 = vmul.f32 %v3676, 1.442695
    %v3737 = vpow.pop %v3736
    %v3738 = vmul.f32 %v3677, 1.442695
    %v3739 = vpow.pop %v3738
    %v3740 = vmul.f32 %v3678, 1.442695
    %v3741 = vpow.pop %v3740
    %v3742 = vmul.f32 %v3679, 1.442695
    %v3743 = vpow.pop %v3742
    %v3744 = vadd.f32 %v3681, 1.0
    %v3745 = vadd.f32 %v3683, 1.0
    %v3746 = vadd.f32 %v3685, 1.0
    %v3747 = vadd.f32 %v3687, 1.0
    %v3748 = vadd.f32 %v3689, 1.0
    %v3749 = vadd.f32 %v3691, 1.0
    %v3750 = vadd.f32 %v3693, 1.0
    %v3751 = vadd.f32 %v3695, 1.0
    %v3752 = vadd.f32 %v3697, 1.0
    %v3753 = vadd.f32 %v3699, 1.0
    %v3754 = vadd.f32 %v3701, 1.0
    %v3755 = vadd.f32 %v3703, 1.0
    %v3756 = vadd.f32 %v3705, 1.0
    %v3757 = vadd.f32 %v3707, 1.0
    %v3758 = vadd.f32 %v3709, 1.0
    %v3759 = vadd.f32 %v3711, 1.0
    %v3760 = vadd.f32 %v3713, 1.0
    %v3761 = vadd.f32 %v3715, 1.0
    %v3762 = vadd.f32 %v3717, 1.0
    %v3763 = vadd.f32 %v3719, 1.0
    %v3764 = vadd.f32 %v3721, 1.0
    %v3765 = vadd.f32 %v3723, 1.0
    %v3766 = vadd.f32 %v3725, 1.0
    %v3767 = vadd.f32 %v3727, 1.0
    %v3768 = vadd.f32 %v3729, 1.0
    %v3769 = vadd.f32 %v3731, 1.0
    %v3770 = vadd.f32 %v3733, 1.0
    %v3771 = vadd.f32 %v3735, 1.0
    %v3772 = vadd.f32 %v3737, 1.0
    %v3773 = vadd.f32 %v3739, 1.0
    %v3774 = vadd.f32 %v3741, 1.0
    %v3775 = vadd.f32 %v3743, 1.0
    %v3776 = vrcp.pop %v3744
    %v3777 = vrcp.pop %v3745
    %v3778 = vrcp.pop %v3746
    %v3779 = vrcp.pop %v3747
    %v3780 = vrcp.pop %v3748
    %v3781 = vrcp.pop %v3749
    %v3782 = vrcp.pop %v3750
    %v3783 = vrcp.pop %v3751
    %v3784 = vrcp.pop %v3752
    %v3785 = vrcp.pop %v3753
    %v3786 = vrcp.pop %v3754
    %v3787 = vrcp.pop %v3755
    %v3788 = vrcp.pop %v3756
    %v3789 = vrcp.pop %v3757
    %v3790 = vrcp.pop %v3758
    %v3791 = vrcp.pop %v3759
    %v3792 = vrcp.pop %v3760
    %v3793 = vrcp.pop %v3761
    %v3794 = vrcp.pop %v3762
    %v3795 = vrcp.pop %v3763
    %v3796 = vrcp.pop %v3764
    %v3797 = vrcp.pop %v3765
    %v3798 = vrcp.pop %v3766
    %v3799 = vrcp.pop %v3767
    %v3800 = vrcp.pop %v3768
    %v3801 = vrcp.pop %v3769
    %v3802 = vrcp.pop %v3770
    %v3803 = vrcp.pop %v3771
    %v3804 = vrcp.pop %v3772
    %v3805 = vrcp.pop %v3773
    %v3806 = vrcp.pop %v3774
    %v3807 = vrcp.pop %v3775
    %v3808 = vmul.f32 %v3490, %v3776
    %v3809 = vmul.f32 %v3495, %v3777
    %v3810 = vmul.f32 %v3500, %v3778
    %v3811 = vmul.f32 %v3505, %v3779
    %v3812 = vmul.f32 %v3510, %v3780
    %v3813 = vmul.f32 %v3515, %v3781
    %v3814 = vmul.f32 %v3520, %v3782
    %v3815 = vmul.f32 %v3525, %v3783
    %v3816 = vmul.f32 %v3530, %v3784
    %v3817 = vmul.f32 %v3535, %v3785
    %v3818 = vmul.f32 %v3540, %v3786
    %v3819 = vmul.f32 %v3545, %v3787
    %v3820 = vmul.f32 %v3550, %v3788
    %v3821 = vmul.f32 %v3555, %v3789
    %v3822 = vmul.f32 %v3560, %v3790
    %v3823 = vmul.f32 %v3565, %v3791
    %v3824 = vmul.f32 %v3570, %v3792
    %v3825 = vmul.f32 %v3575, %v3793
    %v3826 = vmul.f32 %v3580, %v3794
    %v3827 = vmul.f32 %v3585, %v3795
    %v3828 = vmul.f32 %v3590, %v3796
    %v3829 = vmul.f32 %v3595, %v3797
    %v3830 = vmul.f32 %v3600, %v3798
    %v3831 = vmul.f32 %v3605, %v3799
    %v3832 = vmul.f32 %v3610, %v3800
    %v3833 = vmul.f32 %v3615, %v3801
    %v3834 = vmul.f32 %v3620, %v3802
    %v3835 = vmul.f32 %v3625, %v3803
    %v3836 = vmul.f32 %v3630, %v3804
    %v3837 = vmul.f32 %v3635, %v3805
    %v3838 = vmul.f32 %v3640, %v3806
    %v3839 = vmul.f32 %v3645, %v3807
    %v3840 = vld [vmem:[%s5] sm:$0xff]
    %v3841 = vld [vmem:[%s6 + $0x12] ss:$0 sm:$0xff]
    %3843 = vset.pattern.permute.xlu0 0
    %3844 = vperm.xlu0 %3843, %v3841
    %v3845 = vpop.permute.xlu0 %3844
    %3847 = vmatprep.subr.mxu0 0.0
    %3848 = vmatpush1.xpose.msra.mxu0 %v3823
    %3849 = vmatprep.subr.mxu0 0.0
    %3850 = vmatpush1.xpose.msra.mxu0 %v3822
    %3851 = vmatprep.subr.mxu0 0.0
    %3852 = vmatpush1.xpose.msra.mxu0 %v3821
    %3853 = vmatprep.subr.mxu0 0.0
    %3854 = vmatpush1.xpose.msra.mxu0 %v3820
    %3855 = vmatprep.subr.mxu0 0.0
    %3856 = vmatpush1.xpose.msra.mxu0 %v3819
    %3857 = vmatprep.subr.mxu0 0.0
    %3858 = vmatpush1.xpose.msra.mxu0 %v3818
    %3859 = vmatprep.subr.mxu0 0.0
    %3860 = vmatpush1.xpose.msra.mxu0 %v3817
    %3861 = vmatprep.subr.mxu0 0.0
    %3862 = vmatpush1.xpose.msra.mxu0 %v3816
    %3863 = vmatprep.subr.mxu0 0.0
    %3864 = vmatpush1.xpose.msra.mxu0 %v3815
    %3865 = vmatprep.subr.mxu0 0.0
    %3866 = vmatpush1.xpose.msra.mxu0 %v3814
    %3867 = vmatprep.subr.mxu0 0.0
    %3868 = vmatpush1.xpose.msra.mxu0 %v3813
    %3869 = vmatprep.subr.mxu0 0.0
    %3870 = vmatpush1.xpose.msra.mxu0 %v3812
    %3871 = vmatprep.subr.mxu0 0.0
    %3872 = vmatpush1.xpose.msra.mxu0 %v3811
    %3873 = vmatprep.subr.mxu0 0.0
    %3874 = vmatpush1.xpose.msra.mxu0 %v3810
    %3875 = vmatprep.subr.mxu0 0.0
    %3876 = vmatpush1.xpose.msra.mxu0 %v3809
    %3877 = vmatprep.subr.mxu0 0.0
    %3878 = vmatpush1.xpose.msra.mxu0 %v3808
    %3879 = vmatprep.subr.mxu0 0.0
    %3880 = vmatpush2.xpose.msra.mxu0 %v3839
    %3881 = vmatprep.subr.mxu0 0.0
    %3882 = vmatpush2.xpose.msra.mxu0 %v3838
    %3883 = vmatprep.subr.mxu0 0.0
    %3884 = vmatpush2.xpose.msra.mxu0 %v3837
    %3885 = vmatprep.subr.mxu0 0.0
    %3886 = vmatpush2.xpose.msra.mxu0 %v3836
    %3887 = vmatprep.subr.mxu0 0.0
    %3888 = vmatpush2.xpose.msra.mxu0 %v3835
    %3889 = vmatprep.subr.mxu0 0.0
    %3890 = vmatpush2.xpose.msra.mxu0 %v3834
    %3891 = vmatprep.subr.mxu0 0.0
    %3892 = vmatpush2.xpose.msra.mxu0 %v3833
    %3893 = vmatprep.subr.mxu0 0.0
    %3894 = vmatpush2.xpose.msra.mxu0 %v3832
    %3895 = vmatprep.subr.mxu0 0.0
    %3896 = vmatpush2.xpose.msra.mxu0 %v3831
    %3897 = vmatprep.subr.mxu0 0.0
    %3898 = vmatpush2.xpose.msra.mxu0 %v3830
    %3899 = vmatprep.subr.mxu0 0.0
    %3900 = vmatpush2.xpose.msra.mxu0 %v3829
    %3901 = vmatprep.subr.mxu0 0.0
    %3902 = vmatpush2.xpose.msra.mxu0 %v3828
    %3903 = vmatprep.subr.mxu0 0.0
    %3904 = vmatpush2.xpose.msra.mxu0 %v3827
    %3905 = vmatprep.subr.mxu0 0.0
    %3906 = vmatpush2.xpose.msra.mxu0 %v3826
    %3907 = vmatprep.subr.mxu0 0.0
    %3908 = vmatpush2.xpose.msra.mxu0 %v3825
    %3909 = vmatprep.subr.mxu0 0.0
    %3910 = vmatpush2.xpose.msra.mxu0 %v3824
    %3911 = vmatprep.mubr.f32.mxu0 0.0
    %3912 = vmatmul.mubr.f32.gmra.mxu0 %v3840
    %v3913 = vpop.f32.mrf.mxu0
    %v3914 = vadd.f32 %v3845, %v3913
    %v3915 = vpop.f32.mrf.mxu0
    %v3916 = vadd.f32 %v3845, %v3915
    %3917 = vdwg.mxu0
    %3918 = vst [vmem:[#allocation2] sm:$0xff] %v3914
    %3919 = vst [vmem:[#allocation2 + $0x8] sm:$0xff] %v3916
    // Predicated region
    $region30: #{tpu_custom_call.1} parent=1 // pred_check
      _
    $region31: #{tpu_custom_call.1} parent=1 // pred_check_branch
      %3921 = sbr.rel (0) target = $region33
    $region32: #{tpu_custom_call.1} parent=1 // pred_region
      %s3923 = ssub.s32 256, 256
      %3924 = vsyncadd [#allocation3], %s3923
      %s3926 = sshll.u32 [#allocation2], 4
      %s3927 = int_to_ptr.vmem [resolvable:$true] %s3926
      %3929 = dma.vmem_to_hbm [thread:$0]  %s3927, 256, %s7, [#allocation3]
    $region33: #{tpu_custom_call.1} parent=1 // pred_fallthru
      _
    // Predicated region
    $region34: #{tpu_custom_call.1} parent=1 // pred_check
      _
    $region35: #{tpu_custom_call.1} parent=1 // pred_check_branch
      %3931 = sbr.rel (0) target = $region37
    $region36: #{tpu_custom_call.1} parent=1 // pred_region
      %3932 = dma.done [#allocation3], 256
    $region37: #{tpu_custom_call.1} parent=1 // pred_fallthru
      _
    %3933 = vsyncpa [#allocation3], 1

</llo_original>
